<compile_context>
chip_gen: v6e
topology: v6e:2x2x1
jax: 0.10.0
libtpu: 0.0.40
codegen_flags: <defaults>
</compile_context>

<pallas_src>
import functools

import jax
import jax.numpy as jnp
from jax.experimental import pallas as pl
from jax.experimental.pallas import tpu as pltpu


# ------------------------------ Pallas kernel --------------------------------

def _mlp_disc_kernel(x_ref, w1_ref, b1_ref, w2_ref, b2_ref, w3_ref, b3_ref,
                     o_ref):
    # Layer 1: (TM, D)bf16 @ (D, 512)bf16 -> f32 acc, + b1, LeakyReLU(0.2)
    h = jnp.dot(x_ref[...], w1_ref[...], preferred_element_type=jnp.float32)
    h = h + b1_ref[...]
    h = jnp.maximum(h, 0.2 * h)

    # Layer 2: (TM, 512)bf16 @ (512, 256)bf16 -> f32 acc, + b2, LeakyReLU(0.2)
    h = jnp.dot(h.astype(jnp.bfloat16), w2_ref[...],
                preferred_element_type=jnp.float32)
    h = h + b2_ref[...]
    h = jnp.maximum(h, 0.2 * h)

    # Head: (TM, 256) x (1, 256) row-weight -> per-row sum (VPU mul + XLU
    # reduce; avoids a masked 1-lane-wide MXU result), then stable sigmoid.
    y = jnp.sum(h * w3_ref[...], axis=-1, keepdims=True) + b3_ref[...]
    z = jnp.exp(-jnp.abs(y))                       # EUP
    inv = pl.reciprocal(1.0 + z, approx=True)      # EUP slot, ~free
    o_ref[...] = jnp.where(y >= 0.0, inv, z * inv)


def fused_mlp_discriminator(x_bf16, params):
    """Whole MLP (3 Linear + 2 LeakyReLU + Sigmoid) in one batch-tiled call.

    x_bf16: (N, D) bfloat16, already flattened.  Returns (N, 1) float32.
    """
    n, d = x_bf16.shape

    # Row-tile size: 256 for large batches (fills the 256x256 MXU on v6e/v7x),
    # otherwise just the batch rounded up to a sublane multiple of 8.
    tm = 256 if n >= 256 else max(8, ((n + 7) // 8) * 8)
    padded_n = ((n + tm - 1) // tm) * tm
    if padded_n != n:
        x_bf16 = jnp.pad(x_bf16, ((0, padded_n - n), (0, 0)))

    const = lambda i: (0, 0)   # weights/biases: same block every grid step
    out = pl.pallas_call(
        _mlp_disc_kernel,
        out_shape=jax.ShapeDtypeStruct((padded_n, 1), jnp.float32),
        grid=(padded_n // tm,),
        in_specs=[
            pl.BlockSpec((tm, d), lambda i: (i, 0)),     # x tile
            pl.BlockSpec((d, 512), const),               # w1 (bf16, resident)
            pl.BlockSpec((1, 512), const),               # b1
            pl.BlockSpec((512, 256), const),             # w2 (bf16, resident)
            pl.BlockSpec((1, 256), const),               # b2
            pl.BlockSpec((1, 256), const),               # w3 row
            pl.BlockSpec((1, 1), const),                 # b3
        ],
        out_specs=pl.BlockSpec((tm, 1), lambda i: (i, 0)),
        compiler_params=pltpu.CompilerParams(
            dimension_semantics=("parallel",),
            vmem_limit_bytes=32 * 1024 * 1024,
        ),
    )(x_bf16, params["w1"], params["b1"], params["w2"], params["b2"],
      params["w3"], params["b3"])
    return out[:n]


# ---------------------------------- Glue --------------------------------------

def init_params(key, img_shape=(3, 32, 32)):
    """Parameters matching nn.Linear default init.

    Weights are pre-transposed to (in, out); w1/w2 stored as bfloat16 (halves
    the weight DMA that dominates this kernel), biases and the tiny head row
    stay float32.
    """
    d_in = img_shape[0] * img_shape[1] * img_shape[2]
    dims = [(d_in, 512), (512, 256), (256, 1)]
    keys = jax.random.split(key, 2 * len(dims))
    params = {}
    for i, (fan_in, fan_out) in enumerate(dims):
        bound = 1.0 / (fan_in ** 0.5)
        w = jax.random.uniform(keys[2 * i], (fan_in, fan_out), jnp.float32,
                               -bound, bound)
        b = jax.random.uniform(keys[2 * i + 1], (1, fan_out), jnp.float32,
                               -bound, bound)
        params[f"w{i + 1}"] = w
        params[f"b{i + 1}"] = b
    # Mixed-precision storage + layout tweaks for the kernel:
    params["w1"] = params["w1"].astype(jnp.bfloat16)
    params["w2"] = params["w2"].astype(jnp.bfloat16)
    params["w3"] = params["w3"].reshape(1, 256).astype(jnp.float32)  # head row
    # TODO(synk): optional int8 w1 with per-channel scales on v5e/v6e (fp8 on
    # v7x) for a further 2x cut in weight bytes; bf16 is the portable choice.
    return params


@functools.partial(jax.jit, static_argnames=())
def basic_discriminator_forward(img, params):
    # img.view(N, -1): contiguous NCHW flatten == plain reshape (no transpose).
    # Cast to bf16 for the MXU; matmuls accumulate in f32 inside the kernel.
    x = img.reshape(img.shape[0], -1).astype(jnp.bfloat16)
    return fused_mlp_discriminator(x, params)


def _reference_forward(img, params):
    """Plain-JAX reference with the same mixed precision, for validation."""
    x = img.reshape(img.shape[0], -1).astype(jnp.bfloat16)
    h = jnp.dot(x, params["w1"], preferred_element_type=jnp.float32)
    h = h + params["b1"]
    h = jnp.maximum(h, 0.2 * h)
    h = jnp.dot(h.astype(jnp.bfloat16), params["w2"],
                preferred_element_type=jnp.float32)
    h = h + params["b2"]
    h = jnp.maximum(h, 0.2 * h)
    y = jnp.sum(h * params["w3"], axis=-1, keepdims=True) + params["b3"]
    return jax.nn.sigmoid(y)


if __name__ == "__main__":
    key = jax.random.PRNGKey(0)
    pkey, xkey = jax.random.split(key)

    img_shape = (3, 32, 32)           # module default: prod = 3072 features
    params = init_params(pkey, img_shape)
    img = jax.random.normal(xkey, (2,) + img_shape, jnp.float32)

    validity = basic_discriminator_forward(img, params)
    validity = jax.block_until_ready(validity)

    assert validity.shape == (2, 1), validity.shape
    assert bool(jnp.all(jnp.isfinite(validity)))
    assert bool(jnp.all((validity >= -1e-6) & (validity <= 1.0 + 1e-3)))

    ref = jax.block_until_ready(_reference_forward(img, params))
    assert bool(jnp.all(jnp.abs(validity - ref) < 1e-2)), (validity, ref)

    print("KERNEL_OK")
</pallas_src>

<mosaic_0001>
module attributes {stable_mosaic.version = 11 : i64} {
  func.func @_mlp_disc_kernel(%arg0: i32, %arg1: memref<8x3072xbf16, #tpu.memory_space<vmem>>, %arg2: memref<3072x512xbf16, #tpu.memory_space<vmem>>, %arg3: memref<1x512xf32, #tpu.memory_space<vmem>>, %arg4: memref<512x256xbf16, #tpu.memory_space<vmem>>, %arg5: memref<1x256xf32, #tpu.memory_space<vmem>>, %arg6: memref<1x256xf32, #tpu.memory_space<vmem>>, %arg7: memref<1x1xf32, #tpu.memory_space<vmem>>, %arg8: memref<8x1xf32, #tpu.memory_space<vmem>>) attributes {dimension_semantics = [#tpu.dimension_semantics<parallel>], iteration_bounds = array<i64: 1>, scalar_prefetch = 0 : i64, scratch_operands = 0 : i64, tpu.core_type = #tpu.core_type<tc>, window_params = [{transform_indices = @transform_0, window_bounds = array<i64: 8, 3072>}, {pipeline_mode = #tpu.pipeline_mode<synchronous>, transform_indices = @transform_1, window_bounds = array<i64: 3072, 512>}, {pipeline_mode = #tpu.pipeline_mode<synchronous>, transform_indices = @transform_2, window_bounds = array<i64: 1, 512>}, {pipeline_mode = #tpu.pipeline_mode<synchronous>, transform_indices = @transform_3, window_bounds = array<i64: 512, 256>}, {pipeline_mode = #tpu.pipeline_mode<synchronous>, transform_indices = @transform_4, window_bounds = array<i64: 1, 256>}, {pipeline_mode = #tpu.pipeline_mode<synchronous>, transform_indices = @transform_5, window_bounds = array<i64: 1, 256>}, {pipeline_mode = #tpu.pipeline_mode<synchronous>, transform_indices = @transform_6, window_bounds = array<i64: 1, 1>}, {transform_indices = @transform_7, window_bounds = array<i64: 8, 1>}]} {
    %c0 = arith.constant 0 : index
    %c0_0 = arith.constant 0 : index
    %0 = vector.load %arg1[%c0, %c0_0] : memref<8x3072xbf16, #tpu.memory_space<vmem>>, vector<8x3072xbf16>
    %c0_1 = arith.constant 0 : index
    %c0_2 = arith.constant 0 : index
    %1 = vector.load %arg2[%c0_1, %c0_2] : memref<3072x512xbf16, #tpu.memory_space<vmem>>, vector<3072x512xbf16>
    %cst = arith.constant dense<0.000000e+00> : vector<8x512xf32>
    %2 = tpu.matmul %0, %1, %cst {dimension_numbers = #tpu.dot_dimension_numbers<[1], [0], [0], [1], [0, 0, 1, 1], [], []>} : vector<8x3072xbf16>, vector<3072x512xbf16>, vector<8x512xf32> -> vector<8x512xf32>
    %c0_3 = arith.constant 0 : index
    %c0_4 = arith.constant 0 : index
    %3 = vector.load %arg3[%c0_3, %c0_4] : memref<1x512xf32, #tpu.memory_space<vmem>>, vector<1x512xf32>
    %4 = vector.broadcast %3 : vector<1x512xf32> to vector<8x512xf32>
    %5 = arith.addf %2, %4 : vector<8x512xf32>
    %cst_5 = arith.constant 2.000000e-01 : f32
    %6 = vector.broadcast %cst_5 : f32 to vector<8x512xf32>
    %7 = arith.mulf %6, %5 : vector<8x512xf32>
    %8 = arith.maximumf %5, %7 : vector<8x512xf32>
    %9 = arith.truncf %8 : vector<8x512xf32> to vector<8x512xbf16>
    %c0_6 = arith.constant 0 : index
    %c0_7 = arith.constant 0 : index
    %10 = vector.load %arg4[%c0_6, %c0_7] : memref<512x256xbf16, #tpu.memory_space<vmem>>, vector<512x256xbf16>
    %cst_8 = arith.constant dense<0.000000e+00> : vector<8x256xf32>
    %11 = tpu.matmul %9, %10, %cst_8 {dimension_numbers = #tpu.dot_dimension_numbers<[1], [0], [0], [1], [0, 0, 1, 1], [], []>} : vector<8x512xbf16>, vector<512x256xbf16>, vector<8x256xf32> -> vector<8x256xf32>
    %c0_9 = arith.constant 0 : index
    %c0_10 = arith.constant 0 : index
    %12 = vector.load %arg5[%c0_9, %c0_10] : memref<1x256xf32, #tpu.memory_space<vmem>>, vector<1x256xf32>
    %13 = vector.broadcast %12 : vector<1x256xf32> to vector<8x256xf32>
    %14 = arith.addf %11, %13 : vector<8x256xf32>
    %cst_11 = arith.constant 2.000000e-01 : f32
    %15 = vector.broadcast %cst_11 : f32 to vector<8x256xf32>
    %16 = arith.mulf %15, %14 : vector<8x256xf32>
    %17 = arith.maximumf %14, %16 : vector<8x256xf32>
    %c0_12 = arith.constant 0 : index
    %c0_13 = arith.constant 0 : index
    %18 = vector.load %arg6[%c0_12, %c0_13] : memref<1x256xf32, #tpu.memory_space<vmem>>, vector<1x256xf32>
    %19 = vector.broadcast %18 : vector<1x256xf32> to vector<8x256xf32>
    %20 = arith.mulf %17, %19 : vector<8x256xf32>
    %cst_14 = arith.constant dense<0.000000e+00> : vector<8xf32>
    %21 = vector.multi_reduction <add>, %20, %cst_14 [1] : vector<8x256xf32> to vector<8xf32>
    %22 = vector.shape_cast %21 : vector<8xf32> to vector<8x1xf32>
    %c0_15 = arith.constant 0 : index
    %c0_16 = arith.constant 0 : index
    %23 = vector.load %arg7[%c0_15, %c0_16] : memref<1x1xf32, #tpu.memory_space<vmem>>, vector<1x1xf32>
    %24 = vector.broadcast %23 : vector<1x1xf32> to vector<8x1xf32>
    %25 = arith.addf %22, %24 : vector<8x1xf32>
    %26 = math.absf %25 : vector<8x1xf32>
    %cst_17 = arith.constant 0.000000e+00 : f32
    %27 = vector.broadcast %cst_17 : f32 to vector<8x1xf32>
    %28 = arith.subf %27, %26 : vector<8x1xf32>
    %29 = math.exp %28 : vector<8x1xf32>
    %cst_18 = arith.constant 1.000000e+00 : f32
    %30 = vector.broadcast %cst_18 : f32 to vector<8x1xf32>
    %31 = arith.addf %30, %29 : vector<8x1xf32>
    %32 = tpu.reciprocal %31 {approx = true} : vector<8x1xf32> -> vector<8x1xf32>
    %cst_19 = arith.constant 0.000000e+00 : f32
    %33 = vector.broadcast %cst_19 : f32 to vector<8x1xf32>
    %34 = arith.cmpf oge, %25, %33 : vector<8x1xf32>
    %35 = arith.mulf %29, %32 : vector<8x1xf32>
    %36 = arith.select %34, %32, %35 : vector<8x1xi1>, vector<8x1xf32>
    %c0_20 = arith.constant 0 : index
    %c0_21 = arith.constant 0 : index
    %37 = vector.load %arg8[%c0_20, %c0_21] : memref<8x1xf32, #tpu.memory_space<vmem>>, vector<8x1xf32>
    tpu.vector_store %arg8[%c0_20, %c0_21], %36 {strides = array<i32>} : memref<8x1xf32, #tpu.memory_space<vmem>>, vector<8x1xf32>,
    return
  }
  func.func @transform_0(%arg0: i32) -> (i32, i32) {
    %c0_i32 = arith.constant 0 : i32
    %c0_i32_0 = arith.constant 0 : i32
    return %arg0, %c0_i32 : i32, i32
  }
  func.func @transform_1(%arg0: i32) -> (i32, i32) {
    %c0_i32 = arith.constant 0 : i32
    %c0_i32_0 = arith.constant 0 : i32
    %c0_i32_1 = arith.constant 0 : i32
    return %c0_i32, %c0_i32_0 : i32, i32
  }
  func.func @transform_2(%arg0: i32) -> (i32, i32) {
    %c0_i32 = arith.constant 0 : i32
    %c0_i32_0 = arith.constant 0 : i32
    %c0_i32_1 = arith.constant 0 : i32
    return %c0_i32, %c0_i32_0 : i32, i32
  }
  func.func @transform_3(%arg0: i32) -> (i32, i32) {
    %c0_i32 = arith.constant 0 : i32
    %c0_i32_0 = arith.constant 0 : i32
    %c0_i32_1 = arith.constant 0 : i32
    return %c0_i32, %c0_i32_0 : i32, i32
  }
  func.func @transform_4(%arg0: i32) -> (i32, i32) {
    %c0_i32 = arith.constant 0 : i32
    %c0_i32_0 = arith.constant 0 : i32
    %c0_i32_1 = arith.constant 0 : i32
    return %c0_i32, %c0_i32_0 : i32, i32
  }
  func.func @transform_5(%arg0: i32) -> (i32, i32) {
    %c0_i32 = arith.constant 0 : i32
    %c0_i32_0 = arith.constant 0 : i32
    %c0_i32_1 = arith.constant 0 : i32
    return %c0_i32, %c0_i32_0 : i32, i32
  }
  func.func @transform_6(%arg0: i32) -> (i32, i32) {
    %c0_i32 = arith.constant 0 : i32
    %c0_i32_0 = arith.constant 0 : i32
    %c0_i32_1 = arith.constant 0 : i32
    return %c0_i32, %c0_i32_0 : i32, i32
  }
  func.func @transform_7(%arg0: i32) -> (i32, i32) {
    %c0_i32 = arith.constant 0 : i32
    %c0_i32_0 = arith.constant 0 : i32
    return %arg0, %c0_i32 : i32, i32
  }
}

</mosaic_0001>

<llo_original>
// kernel: basic_discriminator_forward.1
$region0: #{basic_discriminator_forward.1}
  #allocation0 [shape = 'u32[]', space=smem, size = 0x4, offset = 0x4, fixed_abs, tag = 'smem constant byte address 0x4 - core index']
  #allocation1 [shape = 'u32[144,128]{1,0:T(1,128)}', space=vmem, size = 0x12000, scoped, tag = 'internal scratch']
  #allocation2 [shape = 'f32[1,1]{1,0:T(1,128)S(1)}', space=vmem, size = 0x200, scoped, tag = 'scoped memory for basic_discriminator_forward.1']
  %s0 = inlined_call_operand.vmem [shape: bf16[8,3072], index: 0, kind: input, shape index: {}]
  %s1 = inlined_call_operand.hbm [shape: bf16[3072,512], index: 1, kind: input, shape index: {}]
  %s2 = inlined_call_operand.hbm [shape: f32[1,512], index: 2, kind: input, shape index: {}]
  %s3 = inlined_call_operand.hbm [shape: bf16[512,256], index: 3, kind: input, shape index: {}]
  %s4 = inlined_call_operand.hbm [shape: f32[1,256], index: 4, kind: input, shape index: {}]
  %s5 = inlined_call_operand.hbm [shape: f32[1,256], index: 5, kind: input, shape index: {}]
  %s6 = inlined_call_operand.<no memory space> [shape: f32[1,1], index: 6, kind: input, shape index: {}]
  %s7 = inlined_call_operand.vmem [shape: f32[8,1], index: 7, kind: output, shape index: {}]
  %s8 = sld [smem:[#allocation0]]
  $region58: #{basic_discriminator_forward.1} parent=0
    _
  %s10 = ssub.s32 1, %s8
  %s11 = scalar_select 0, %s10, %s8
  %v12 = vstv %s6
  %13 = vst [vmem:[#allocation2] sm:$0x1] %v12
  $region1: #{basic_discriminator_forward.1} parent=0
    #allocation3 [shape = 'u8[3145728]{0}', space=vmem, size = 0x300000, scoped, tag = 'input window, operand 1, single buffered']
    #allocation4 [shape = 's32[1]{0}', space=sflag, size = 0x4, scoped, tag = 'scoped memory for basic_discriminator_forward.1']
    #allocation5 [shape = 'u8[2048]{0}', space=vmem, size = 0x800, scoped, tag = 'input window, operand 2, single buffered']
    #allocation6 [shape = 's32[1]{0}', space=sflag, size = 0x4, scoped, tag = 'scoped memory for basic_discriminator_forward.1']
    #allocation7 [shape = 'u8[262144]{0}', space=vmem, size = 0x40000, scoped, tag = 'input window, operand 3, single buffered']
    #allocation8 [shape = 'u8[1024]{0}', space=vmem, size = 0x400, scoped, tag = 'input window, operand 4, single buffered']
    #allocation9 [shape = 's32[1]{0}', space=sflag, size = 0x4, scoped, tag = 'scoped memory for basic_discriminator_forward.1']
    #allocation10 [shape = 'u8[1024]{0}', space=vmem, size = 0x400, scoped, tag = 'input window, operand 5, single buffered']
    %14 = vsyncpa [#allocation4], 0
    %15 = vsyncpa [#allocation6], 0
    %16 = vsyncpa [#allocation9], 0
    // Predicated region
    $region2: #{basic_discriminator_forward.1} parent=1 // pred_check
      _
    $region3: #{basic_discriminator_forward.1} parent=1 // pred_check_branch
      %18 = sbr.rel (0) target = $region5
    $region4: #{basic_discriminator_forward.1} parent=1 // pred_region
      _
    $region5: #{basic_discriminator_forward.1} parent=1 // pred_fallthru
      _
    // Predicated region
    $region6: #{basic_discriminator_forward.1} parent=1 // pred_check
      _
    $region7: #{basic_discriminator_forward.1} parent=1 // pred_check_branch
      %20 = sbr.rel (0) target = $region9
    $region8: #{basic_discriminator_forward.1} parent=1 // pred_region
      %s22 = ssub.s32 98304, 98304
      %23 = vsyncadd [#allocation4], %s22
      %s24 = sshll.u32 [#allocation3], 4
      %s25 = int_to_ptr.vmem [resolvable:$true] %s24
      %30 = dma.hbm_to_vmem [thread:$0]  %s1, 98304, %s25, [#allocation4], 256, 256, 16
    $region9: #{basic_discriminator_forward.1} parent=1 // pred_fallthru
      _
    // Predicated region
    $region10: #{basic_discriminator_forward.1} parent=1 // pred_check
      _
    $region11: #{basic_discriminator_forward.1} parent=1 // pred_check_branch
      %32 = sbr.rel (0) target = $region13
    $region12: #{basic_discriminator_forward.1} parent=1 // pred_region
      %s34 = ssub.s32 64, 64
      %35 = vsyncadd [#allocation6], %s34
      %s37 = sshll.u32 [#allocation5], 4
      %s38 = int_to_ptr.vmem [resolvable:$true] %s37
      %40 = dma.hbm_to_vmem [thread:$0]  %s2, 64, %s38, [#allocation6]
    $region13: #{basic_discriminator_forward.1} parent=1 // pred_fallthru
      _
    // Predicated region
    $region14: #{basic_discriminator_forward.1} parent=1 // pred_check
      _
    $region15: #{basic_discriminator_forward.1} parent=1 // pred_check_branch
      %42 = sbr.rel (0) target = $region17
    $region16: #{basic_discriminator_forward.1} parent=1 // pred_region
      %s44 = ssub.s32 8192, 8192
      %45 = vsyncadd [#allocation6], %s44
      %s46 = sshll.u32 [#allocation7], 4
      %s47 = int_to_ptr.vmem [resolvable:$true] %s46
      %52 = dma.hbm_to_vmem [thread:$0]  %s3, 8192, %s47, [#allocation6], 128, 128, 8
    $region17: #{basic_discriminator_forward.1} parent=1 // pred_fallthru
      _
    // Predicated region
    $region18: #{basic_discriminator_forward.1} parent=1 // pred_check
      _
    $region19: #{basic_discriminator_forward.1} parent=1 // pred_check_branch
      %54 = sbr.rel (0) target = $region21
    $region20: #{basic_discriminator_forward.1} parent=1 // pred_region
      %s56 = ssub.s32 32, 32
      %57 = vsyncadd [#allocation9], %s56
      %s59 = sshll.u32 [#allocation8], 4
      %s60 = int_to_ptr.vmem [resolvable:$true] %s59
      %62 = dma.hbm_to_vmem [thread:$0]  %s4, 32, %s60, [#allocation9]
    $region21: #{basic_discriminator_forward.1} parent=1 // pred_fallthru
      _
    // Predicated region
    $region22: #{basic_discriminator_forward.1} parent=1 // pred_check
      _
    $region23: #{basic_discriminator_forward.1} parent=1 // pred_check_branch
      %64 = sbr.rel (0) target = $region25
    $region24: #{basic_discriminator_forward.1} parent=1 // pred_region
      %s66 = ssub.s32 32, 32
      %67 = vsyncadd [#allocation9], %s66
      %s69 = sshll.u32 [#allocation10], 4
      %s70 = int_to_ptr.vmem [resolvable:$true] %s69
      %72 = dma.hbm_to_vmem [thread:$0]  %s5, 32, %s70, [#allocation9]
    $region25: #{basic_discriminator_forward.1} parent=1 // pred_fallthru
      _
    // Predicated region
    $region26: #{basic_discriminator_forward.1} parent=1 // pred_check
      _
    $region27: #{basic_discriminator_forward.1} parent=1 // pred_check_branch
      %74 = sbr.rel (0) target = $region29
    $region28: #{basic_discriminator_forward.1} parent=1 // pred_region
      _
    $region29: #{basic_discriminator_forward.1} parent=1 // pred_fallthru
      _
    // Predicated region
    $region30: #{basic_discriminator_forward.1} parent=1 // pred_check
      _
    $region31: #{basic_discriminator_forward.1} parent=1 // pred_check_branch
      %76 = sbr.rel (0) target = $region33
    $region32: #{basic_discriminator_forward.1} parent=1 // pred_region
      %77 = dma.done [#allocation4], 98304
    $region33: #{basic_discriminator_forward.1} parent=1 // pred_fallthru
      _
    // Predicated region
    $region34: #{basic_discriminator_forward.1} parent=1 // pred_check
      _
    $region35: #{basic_discriminator_forward.1} parent=1 // pred_check_branch
      %79 = sbr.rel (0) target = $region37
    $region36: #{basic_discriminator_forward.1} parent=1 // pred_region
      %80 = dma.done [#allocation6], 64
    $region37: #{basic_discriminator_forward.1} parent=1 // pred_fallthru
      _
    // Predicated region
    $region38: #{basic_discriminator_forward.1} parent=1 // pred_check
      _
    $region39: #{basic_discriminator_forward.1} parent=1 // pred_check_branch
      %82 = sbr.rel (0) target = $region41
    $region40: #{basic_discriminator_forward.1} parent=1 // pred_region
      %83 = dma.done [#allocation6], 8192
    $region41: #{basic_discriminator_forward.1} parent=1 // pred_fallthru
      _
    // Predicated region
    $region42: #{basic_discriminator_forward.1} parent=1 // pred_check
      _
    $region43: #{basic_discriminator_forward.1} parent=1 // pred_check_branch
      %85 = sbr.rel (0) target = $region45
    $region44: #{basic_discriminator_forward.1} parent=1 // pred_region
      %86 = dma.done [#allocation9], 32
    $region45: #{basic_discriminator_forward.1} parent=1 // pred_fallthru
      _
    // Predicated region
    $region46: #{basic_discriminator_forward.1} parent=1 // pred_check
      _
    $region47: #{basic_discriminator_forward.1} parent=1 // pred_check_branch
      %88 = sbr.rel (0) target = $region49
    $region48: #{basic_discriminator_forward.1} parent=1 // pred_region
      %89 = dma.done [#allocation9], 32
    $region49: #{basic_discriminator_forward.1} parent=1 // pred_fallthru
      _
    %v90 = vld [vmem:[%s0] sm:$0xff]
    %v91 = vld [vmem:[%s0 + $0x8] sm:$0xff]
    %v92 = vld [vmem:[%s0 + $0x10] sm:$0xff]
    %v93 = vld [vmem:[%s0 + $0x18] sm:$0xff]
    %v94 = vld [vmem:[%s0 + $0x20] sm:$0xff]
    %v95 = vld [vmem:[%s0 + $0x28] sm:$0xff]
    %v96 = vld [vmem:[%s0 + $0x30] sm:$0xff]
    %v97 = vld [vmem:[%s0 + $0x38] sm:$0xff]
    %v98 = vld [vmem:[%s0 + $0x40] sm:$0xff]
    %v99 = vld [vmem:[%s0 + $0x48] sm:$0xff]
    %v100 = vld [vmem:[%s0 + $0x50] sm:$0xff]
    %v101 = vld [vmem:[%s0 + $0x58] sm:$0xff]
    %v102 = vld [vmem:[#allocation3] sm:$0xff]
    %v103 = vld [vmem:[#allocation3 + $0x8] sm:$0xff]
    %v104 = vld [vmem:[#allocation3 + $0x10] sm:$0xff]
    %v105 = vld [vmem:[#allocation3 + $0x18] sm:$0xff]
    %v106 = vld [vmem:[#allocation3 + $0x20] sm:$0xff]
    %v107 = vld [vmem:[#allocation3 + $0x28] sm:$0xff]
    %v108 = vld [vmem:[#allocation3 + $0x30] sm:$0xff]
    %v109 = vld [vmem:[#allocation3 + $0x38] sm:$0xff]
    %v110 = vld [vmem:[#allocation3 + $0x40] sm:$0xff]
    %v111 = vld [vmem:[#allocation3 + $0x48] sm:$0xff]
    %v112 = vld [vmem:[#allocation3 + $0x50] sm:$0xff]
    %v113 = vld [vmem:[#allocation3 + $0x58] sm:$0xff]
    %v114 = vld [vmem:[#allocation3 + $0x60] sm:$0xff]
    %v115 = vld [vmem:[#allocation3 + $0x68] sm:$0xff]
    %v116 = vld [vmem:[#allocation3 + $0x70] sm:$0xff]
    %v117 = vld [vmem:[#allocation3 + $0x78] sm:$0xff]
    %v118 = vld [vmem:[#allocation3 + $0x80] sm:$0xff]
    %v119 = vld [vmem:[#allocation3 + $0x88] sm:$0xff]
    %v120 = vld [vmem:[#allocation3 + $0x90] sm:$0xff]
    %v121 = vld [vmem:[#allocation3 + $0x98] sm:$0xff]
    %v122 = vld [vmem:[#allocation3 + $0xa0] sm:$0xff]
    %v123 = vld [vmem:[#allocation3 + $0xa8] sm:$0xff]
    %v124 = vld [vmem:[#allocation3 + $0xb0] sm:$0xff]
    %v125 = vld [vmem:[#allocation3 + $0xb8] sm:$0xff]
    %v126 = vld [vmem:[#allocation3 + $0xc0] sm:$0xff]
    %v127 = vld [vmem:[#allocation3 + $0xc8] sm:$0xff]
    %v128 = vld [vmem:[#allocation3 + $0xd0] sm:$0xff]
    %v129 = vld [vmem:[#allocation3 + $0xd8] sm:$0xff]
    %v130 = vld [vmem:[#allocation3 + $0xe0] sm:$0xff]
    %v131 = vld [vmem:[#allocation3 + $0xe8] sm:$0xff]
    %v132 = vld [vmem:[#allocation3 + $0xf0] sm:$0xff]
    %v133 = vld [vmem:[#allocation3 + $0xf8] sm:$0xff]
    %v134 = vld [vmem:[#allocation3 + $0x100] sm:$0xff]
    %v135 = vld [vmem:[#allocation3 + $0x108] sm:$0xff]
    %v136 = vld [vmem:[#allocation3 + $0x110] sm:$0xff]
    %v137 = vld [vmem:[#allocation3 + $0x118] sm:$0xff]
    %v138 = vld [vmem:[#allocation3 + $0x120] sm:$0xff]
    %v139 = vld [vmem:[#allocation3 + $0x128] sm:$0xff]
    %v140 = vld [vmem:[#allocation3 + $0x130] sm:$0xff]
    %v141 = vld [vmem:[#allocation3 + $0x138] sm:$0xff]
    %v142 = vld [vmem:[#allocation3 + $0x140] sm:$0xff]
    %v143 = vld [vmem:[#allocation3 + $0x148] sm:$0xff]
    %v144 = vld [vmem:[#allocation3 + $0x150] sm:$0xff]
    %v145 = vld [vmem:[#allocation3 + $0x158] sm:$0xff]
    %v146 = vld [vmem:[#allocation3 + $0x160] sm:$0xff]
    %v147 = vld [vmem:[#allocation3 + $0x168] sm:$0xff]
    %v148 = vld [vmem:[#allocation3 + $0x170] sm:$0xff]
    %v149 = vld [vmem:[#allocation3 + $0x178] sm:$0xff]
    %v150 = vld [vmem:[#allocation3 + $0x180] sm:$0xff]
    %v151 = vld [vmem:[#allocation3 + $0x188] sm:$0xff]
    %v152 = vld [vmem:[#allocation3 + $0x190] sm:$0xff]
    %v153 = vld [vmem:[#allocation3 + $0x198] sm:$0xff]
    %v154 = vld [vmem:[#allocation3 + $0x1a0] sm:$0xff]
    %v155 = vld [vmem:[#allocation3 + $0x1a8] sm:$0xff]
    %v156 = vld [vmem:[#allocation3 + $0x1b0] sm:$0xff]
    %v157 = vld [vmem:[#allocation3 + $0x1b8] sm:$0xff]
    %v158 = vld [vmem:[#allocation3 + $0x1c0] sm:$0xff]
    %v159 = vld [vmem:[#allocation3 + $0x1c8] sm:$0xff]
    %v160 = vld [vmem:[#allocation3 + $0x1d0] sm:$0xff]
    %v161 = vld [vmem:[#allocation3 + $0x1d8] sm:$0xff]
    %v162 = vld [vmem:[#allocation3 + $0x1e0] sm:$0xff]
    %v163 = vld [vmem:[#allocation3 + $0x1e8] sm:$0xff]
    %v164 = vld [vmem:[#allocation3 + $0x1f0] sm:$0xff]
    %v165 = vld [vmem:[#allocation3 + $0x1f8] sm:$0xff]
    %v166 = vld [vmem:[#allocation3 + $0x200] sm:$0xff]
    %v167 = vld [vmem:[#allocation3 + $0x208] sm:$0xff]
    %v168 = vld [vmem:[#allocation3 + $0x210] sm:$0xff]
    %v169 = vld [vmem:[#allocation3 + $0x218] sm:$0xff]
    %v170 = vld [vmem:[#allocation3 + $0x220] sm:$0xff]
    %v171 = vld [vmem:[#allocation3 + $0x228] sm:$0xff]
    %v172 = vld [vmem:[#allocation3 + $0x230] sm:$0xff]
    %v173 = vld [vmem:[#allocation3 + $0x238] sm:$0xff]
    %v174 = vld [vmem:[#allocation3 + $0x240] sm:$0xff]
    %v175 = vld [vmem:[#allocation3 + $0x248] sm:$0xff]
    %v176 = vld [vmem:[#allocation3 + $0x250] sm:$0xff]
    %v177 = vld [vmem:[#allocation3 + $0x258] sm:$0xff]
    %v178 = vld [vmem:[#allocation3 + $0x260] sm:$0xff]
    %v179 = vld [vmem:[#allocation3 + $0x268] sm:$0xff]
    %v180 = vld [vmem:[#allocation3 + $0x270] sm:$0xff]
    %v181 = vld [vmem:[#allocation3 + $0x278] sm:$0xff]
    %v182 = vld [vmem:[#allocation3 + $0x280] sm:$0xff]
    %v183 = vld [vmem:[#allocation3 + $0x288] sm:$0xff]
    %v184 = vld [vmem:[#allocation3 + $0x290] sm:$0xff]
    %v185 = vld [vmem:[#allocation3 + $0x298] sm:$0xff]
    %v186 = vld [vmem:[#allocation3 + $0x2a0] sm:$0xff]
    %v187 = vld [vmem:[#allocation3 + $0x2a8] sm:$0xff]
    %v188 = vld [vmem:[#allocation3 + $0x2b0] sm:$0xff]
    %v189 = vld [vmem:[#allocation3 + $0x2b8] sm:$0xff]
    %v190 = vld [vmem:[#allocation3 + $0x2c0] sm:$0xff]
    %v191 = vld [vmem:[#allocation3 + $0x2c8] sm:$0xff]
    %v192 = vld [vmem:[#allocation3 + $0x2d0] sm:$0xff]
    %v193 = vld [vmem:[#allocation3 + $0x2d8] sm:$0xff]
    %v194 = vld [vmem:[#allocation3 + $0x2e0] sm:$0xff]
    %v195 = vld [vmem:[#allocation3 + $0x2e8] sm:$0xff]
    %v196 = vld [vmem:[#allocation3 + $0x2f0] sm:$0xff]
    %v197 = vld [vmem:[#allocation3 + $0x2f8] sm:$0xff]
    %v198 = vld [vmem:[#allocation3 + $0x300] sm:$0xff]
    %v199 = vld [vmem:[#allocation3 + $0x308] sm:$0xff]
    %v200 = vld [vmem:[#allocation3 + $0x310] sm:$0xff]
    %v201 = vld [vmem:[#allocation3 + $0x318] sm:$0xff]
    %v202 = vld [vmem:[#allocation3 + $0x320] sm:$0xff]
    %v203 = vld [vmem:[#allocation3 + $0x328] sm:$0xff]
    %v204 = vld [vmem:[#allocation3 + $0x330] sm:$0xff]
    %v205 = vld [vmem:[#allocation3 + $0x338] sm:$0xff]
    %v206 = vld [vmem:[#allocation3 + $0x340] sm:$0xff]
    %v207 = vld [vmem:[#allocation3 + $0x348] sm:$0xff]
    %v208 = vld [vmem:[#allocation3 + $0x350] sm:$0xff]
    %v209 = vld [vmem:[#allocation3 + $0x358] sm:$0xff]
    %v210 = vld [vmem:[#allocation3 + $0x360] sm:$0xff]
    %v211 = vld [vmem:[#allocation3 + $0x368] sm:$0xff]
    %v212 = vld [vmem:[#allocation3 + $0x370] sm:$0xff]
    %v213 = vld [vmem:[#allocation3 + $0x378] sm:$0xff]
    %v214 = vld [vmem:[#allocation3 + $0x380] sm:$0xff]
    %v215 = vld [vmem:[#allocation3 + $0x388] sm:$0xff]
    %v216 = vld [vmem:[#allocation3 + $0x390] sm:$0xff]
    %v217 = vld [vmem:[#allocation3 + $0x398] sm:$0xff]
    %v218 = vld [vmem:[#allocation3 + $0x3a0] sm:$0xff]
    %v219 = vld [vmem:[#allocation3 + $0x3a8] sm:$0xff]
    %v220 = vld [vmem:[#allocation3 + $0x3b0] sm:$0xff]
    %v221 = vld [vmem:[#allocation3 + $0x3b8] sm:$0xff]
    %v222 = vld [vmem:[#allocation3 + $0x3c0] sm:$0xff]
    %v223 = vld [vmem:[#allocation3 + $0x3c8] sm:$0xff]
    %v224 = vld [vmem:[#allocation3 + $0x3d0] sm:$0xff]
    %v225 = vld [vmem:[#allocation3 + $0x3d8] sm:$0xff]
    %v226 = vld [vmem:[#allocation3 + $0x3e0] sm:$0xff]
    %v227 = vld [vmem:[#allocation3 + $0x3e8] sm:$0xff]
    %v228 = vld [vmem:[#allocation3 + $0x3f0] sm:$0xff]
    %v229 = vld [vmem:[#allocation3 + $0x3f8] sm:$0xff]
    %v230 = vld [vmem:[#allocation3 + $0x400] sm:$0xff]
    %v231 = vld [vmem:[#allocation3 + $0x408] sm:$0xff]
    %v232 = vld [vmem:[#allocation3 + $0x410] sm:$0xff]
    %v233 = vld [vmem:[#allocation3 + $0x418] sm:$0xff]
    %v234 = vld [vmem:[#allocation3 + $0x420] sm:$0xff]
    %v235 = vld [vmem:[#allocation3 + $0x428] sm:$0xff]
    %v236 = vld [vmem:[#allocation3 + $0x430] sm:$0xff]
    %v237 = vld [vmem:[#allocation3 + $0x438] sm:$0xff]
    %v238 = vld [vmem:[#allocation3 + $0x440] sm:$0xff]
    %v239 = vld [vmem:[#allocation3 + $0x448] sm:$0xff]
    %v240 = vld [vmem:[#allocation3 + $0x450] sm:$0xff]
    %v241 = vld [vmem:[#allocation3 + $0x458] sm:$0xff]
    %v242 = vld [vmem:[#allocation3 + $0x460] sm:$0xff]
    %v243 = vld [vmem:[#allocation3 + $0x468] sm:$0xff]
    %v244 = vld [vmem:[#allocation3 + $0x470] sm:$0xff]
    %v245 = vld [vmem:[#allocation3 + $0x478] sm:$0xff]
    %v246 = vld [vmem:[#allocation3 + $0x480] sm:$0xff]
    %v247 = vld [vmem:[#allocation3 + $0x488] sm:$0xff]
    %v248 = vld [vmem:[#allocation3 + $0x490] sm:$0xff]
    %v249 = vld [vmem:[#allocation3 + $0x498] sm:$0xff]
    %v250 = vld [vmem:[#allocation3 + $0x4a0] sm:$0xff]
    %v251 = vld [vmem:[#allocation3 + $0x4a8] sm:$0xff]
    %v252 = vld [vmem:[#allocation3 + $0x4b0] sm:$0xff]
    %v253 = vld [vmem:[#allocation3 + $0x4b8] sm:$0xff]
    %v254 = vld [vmem:[#allocation3 + $0x4c0] sm:$0xff]
    %v255 = vld [vmem:[#allocation3 + $0x4c8] sm:$0xff]
    %v256 = vld [vmem:[#allocation3 + $0x4d0] sm:$0xff]
    %v257 = vld [vmem:[#allocation3 + $0x4d8] sm:$0xff]
    %v258 = vld [vmem:[#allocation3 + $0x4e0] sm:$0xff]
    %v259 = vld [vmem:[#allocation3 + $0x4e8] sm:$0xff]
    %v260 = vld [vmem:[#allocation3 + $0x4f0] sm:$0xff]
    %v261 = vld [vmem:[#allocation3 + $0x4f8] sm:$0xff]
    %v262 = vld [vmem:[#allocation3 + $0x500] sm:$0xff]
    %v263 = vld [vmem:[#allocation3 + $0x508] sm:$0xff]
    %v264 = vld [vmem:[#allocation3 + $0x510] sm:$0xff]
    %v265 = vld [vmem:[#allocation3 + $0x518] sm:$0xff]
    %v266 = vld [vmem:[#allocation3 + $0x520] sm:$0xff]
    %v267 = vld [vmem:[#allocation3 + $0x528] sm:$0xff]
    %v268 = vld [vmem:[#allocation3 + $0x530] sm:$0xff]
    %v269 = vld [vmem:[#allocation3 + $0x538] sm:$0xff]
    %v270 = vld [vmem:[#allocation3 + $0x540] sm:$0xff]
    %v271 = vld [vmem:[#allocation3 + $0x548] sm:$0xff]
    %v272 = vld [vmem:[#allocation3 + $0x550] sm:$0xff]
    %v273 = vld [vmem:[#allocation3 + $0x558] sm:$0xff]
    %v274 = vld [vmem:[#allocation3 + $0x560] sm:$0xff]
    %v275 = vld [vmem:[#allocation3 + $0x568] sm:$0xff]
    %v276 = vld [vmem:[#allocation3 + $0x570] sm:$0xff]
    %v277 = vld [vmem:[#allocation3 + $0x578] sm:$0xff]
    %v278 = vld [vmem:[#allocation3 + $0x580] sm:$0xff]
    %v279 = vld [vmem:[#allocation3 + $0x588] sm:$0xff]
    %v280 = vld [vmem:[#allocation3 + $0x590] sm:$0xff]
    %v281 = vld [vmem:[#allocation3 + $0x598] sm:$0xff]
    %v282 = vld [vmem:[#allocation3 + $0x5a0] sm:$0xff]
    %v283 = vld [vmem:[#allocation3 + $0x5a8] sm:$0xff]
    %v284 = vld [vmem:[#allocation3 + $0x5b0] sm:$0xff]
    %v285 = vld [vmem:[#allocation3 + $0x5b8] sm:$0xff]
    %v286 = vld [vmem:[#allocation3 + $0x5c0] sm:$0xff]
    %v287 = vld [vmem:[#allocation3 + $0x5c8] sm:$0xff]
    %v288 = vld [vmem:[#allocation3 + $0x5d0] sm:$0xff]
    %v289 = vld [vmem:[#allocation3 + $0x5d8] sm:$0xff]
    %v290 = vld [vmem:[#allocation3 + $0x5e0] sm:$0xff]
    %v291 = vld [vmem:[#allocation3 + $0x5e8] sm:$0xff]
    %v292 = vld [vmem:[#allocation3 + $0x5f0] sm:$0xff]
    %v293 = vld [vmem:[#allocation3 + $0x5f8] sm:$0xff]
    %v294 = vld [vmem:[#allocation3 + $0x600] sm:$0xff]
    %v295 = vld [vmem:[#allocation3 + $0x608] sm:$0xff]
    %v296 = vld [vmem:[#allocation3 + $0x610] sm:$0xff]
    %v297 = vld [vmem:[#allocation3 + $0x618] sm:$0xff]
    %v298 = vld [vmem:[#allocation3 + $0x620] sm:$0xff]
    %v299 = vld [vmem:[#allocation3 + $0x628] sm:$0xff]
    %v300 = vld [vmem:[#allocation3 + $0x630] sm:$0xff]
    %v301 = vld [vmem:[#allocation3 + $0x638] sm:$0xff]
    %v302 = vld [vmem:[#allocation3 + $0x640] sm:$0xff]
    %v303 = vld [vmem:[#allocation3 + $0x648] sm:$0xff]
    %v304 = vld [vmem:[#allocation3 + $0x650] sm:$0xff]
    %v305 = vld [vmem:[#allocation3 + $0x658] sm:$0xff]
    %v306 = vld [vmem:[#allocation3 + $0x660] sm:$0xff]
    %v307 = vld [vmem:[#allocation3 + $0x668] sm:$0xff]
    %v308 = vld [vmem:[#allocation3 + $0x670] sm:$0xff]
    %v309 = vld [vmem:[#allocation3 + $0x678] sm:$0xff]
    %v310 = vld [vmem:[#allocation3 + $0x680] sm:$0xff]
    %v311 = vld [vmem:[#allocation3 + $0x688] sm:$0xff]
    %v312 = vld [vmem:[#allocation3 + $0x690] sm:$0xff]
    %v313 = vld [vmem:[#allocation3 + $0x698] sm:$0xff]
    %v314 = vld [vmem:[#allocation3 + $0x6a0] sm:$0xff]
    %v315 = vld [vmem:[#allocation3 + $0x6a8] sm:$0xff]
    %v316 = vld [vmem:[#allocation3 + $0x6b0] sm:$0xff]
    %v317 = vld [vmem:[#allocation3 + $0x6b8] sm:$0xff]
    %v318 = vld [vmem:[#allocation3 + $0x6c0] sm:$0xff]
    %v319 = vld [vmem:[#allocation3 + $0x6c8] sm:$0xff]
    %v320 = vld [vmem:[#allocation3 + $0x6d0] sm:$0xff]
    %v321 = vld [vmem:[#allocation3 + $0x6d8] sm:$0xff]
    %v322 = vld [vmem:[#allocation3 + $0x6e0] sm:$0xff]
    %v323 = vld [vmem:[#allocation3 + $0x6e8] sm:$0xff]
    %v324 = vld [vmem:[#allocation3 + $0x6f0] sm:$0xff]
    %v325 = vld [vmem:[#allocation3 + $0x6f8] sm:$0xff]
    %v326 = vld [vmem:[#allocation3 + $0x700] sm:$0xff]
    %v327 = vld [vmem:[#allocation3 + $0x708] sm:$0xff]
    %v328 = vld [vmem:[#allocation3 + $0x710] sm:$0xff]
    %v329 = vld [vmem:[#allocation3 + $0x718] sm:$0xff]
    %v330 = vld [vmem:[#allocation3 + $0x720] sm:$0xff]
    %v331 = vld [vmem:[#allocation3 + $0x728] sm:$0xff]
    %v332 = vld [vmem:[#allocation3 + $0x730] sm:$0xff]
    %v333 = vld [vmem:[#allocation3 + $0x738] sm:$0xff]
    %v334 = vld [vmem:[#allocation3 + $0x740] sm:$0xff]
    %v335 = vld [vmem:[#allocation3 + $0x748] sm:$0xff]
    %v336 = vld [vmem:[#allocation3 + $0x750] sm:$0xff]
    %v337 = vld [vmem:[#allocation3 + $0x758] sm:$0xff]
    %v338 = vld [vmem:[#allocation3 + $0x760] sm:$0xff]
    %v339 = vld [vmem:[#allocation3 + $0x768] sm:$0xff]
    %v340 = vld [vmem:[#allocation3 + $0x770] sm:$0xff]
    %v341 = vld [vmem:[#allocation3 + $0x778] sm:$0xff]
    %v342 = vld [vmem:[#allocation3 + $0x780] sm:$0xff]
    %v343 = vld [vmem:[#allocation3 + $0x788] sm:$0xff]
    %v344 = vld [vmem:[#allocation3 + $0x790] sm:$0xff]
    %v345 = vld [vmem:[#allocation3 + $0x798] sm:$0xff]
    %v346 = vld [vmem:[#allocation3 + $0x7a0] sm:$0xff]
    %v347 = vld [vmem:[#allocation3 + $0x7a8] sm:$0xff]
    %v348 = vld [vmem:[#allocation3 + $0x7b0] sm:$0xff]
    %v349 = vld [vmem:[#allocation3 + $0x7b8] sm:$0xff]
    %v350 = vld [vmem:[#allocation3 + $0x7c0] sm:$0xff]
    %v351 = vld [vmem:[#allocation3 + $0x7c8] sm:$0xff]
    %v352 = vld [vmem:[#allocation3 + $0x7d0] sm:$0xff]
    %v353 = vld [vmem:[#allocation3 + $0x7d8] sm:$0xff]
    %v354 = vld [vmem:[#allocation3 + $0x7e0] sm:$0xff]
    %v355 = vld [vmem:[#allocation3 + $0x7e8] sm:$0xff]
    %v356 = vld [vmem:[#allocation3 + $0x7f0] sm:$0xff]
    %v357 = vld [vmem:[#allocation3 + $0x7f8] sm:$0xff]
    %v358 = vld [vmem:[#allocation3 + $0x800] sm:$0xff]
    %v359 = vld [vmem:[#allocation3 + $0x808] sm:$0xff]
    %v360 = vld [vmem:[#allocation3 + $0x810] sm:$0xff]
    %v361 = vld [vmem:[#allocation3 + $0x818] sm:$0xff]
    %v362 = vld [vmem:[#allocation3 + $0x820] sm:$0xff]
    %v363 = vld [vmem:[#allocation3 + $0x828] sm:$0xff]
    %v364 = vld [vmem:[#allocation3 + $0x830] sm:$0xff]
    %v365 = vld [vmem:[#allocation3 + $0x838] sm:$0xff]
    %v366 = vld [vmem:[#allocation3 + $0x840] sm:$0xff]
    %v367 = vld [vmem:[#allocation3 + $0x848] sm:$0xff]
    %v368 = vld [vmem:[#allocation3 + $0x850] sm:$0xff]
    %v369 = vld [vmem:[#allocation3 + $0x858] sm:$0xff]
    %v370 = vld [vmem:[#allocation3 + $0x860] sm:$0xff]
    %v371 = vld [vmem:[#allocation3 + $0x868] sm:$0xff]
    %v372 = vld [vmem:[#allocation3 + $0x870] sm:$0xff]
    %v373 = vld [vmem:[#allocation3 + $0x878] sm:$0xff]
    %v374 = vld [vmem:[#allocation3 + $0x880] sm:$0xff]
    %v375 = vld [vmem:[#allocation3 + $0x888] sm:$0xff]
    %v376 = vld [vmem:[#allocation3 + $0x890] sm:$0xff]
    %v377 = vld [vmem:[#allocation3 + $0x898] sm:$0xff]
    %v378 = vld [vmem:[#allocation3 + $0x8a0] sm:$0xff]
    %v379 = vld [vmem:[#allocation3 + $0x8a8] sm:$0xff]
    %v380 = vld [vmem:[#allocation3 + $0x8b0] sm:$0xff]
    %v381 = vld [vmem:[#allocation3 + $0x8b8] sm:$0xff]
    %v382 = vld [vmem:[#allocation3 + $0x8c0] sm:$0xff]
    %v383 = vld [vmem:[#allocation3 + $0x8c8] sm:$0xff]
    %v384 = vld [vmem:[#allocation3 + $0x8d0] sm:$0xff]
    %v385 = vld [vmem:[#allocation3 + $0x8d8] sm:$0xff]
    %v386 = vld [vmem:[#allocation3 + $0x8e0] sm:$0xff]
    %v387 = vld [vmem:[#allocation3 + $0x8e8] sm:$0xff]
    %v388 = vld [vmem:[#allocation3 + $0x8f0] sm:$0xff]
    %v389 = vld [vmem:[#allocation3 + $0x8f8] sm:$0xff]
    %v390 = vld [vmem:[#allocation3 + $0x900] sm:$0xff]
    %v391 = vld [vmem:[#allocation3 + $0x908] sm:$0xff]
    %v392 = vld [vmem:[#allocation3 + $0x910] sm:$0xff]
    %v393 = vld [vmem:[#allocation3 + $0x918] sm:$0xff]
    %v394 = vld [vmem:[#allocation3 + $0x920] sm:$0xff]
    %v395 = vld [vmem:[#allocation3 + $0x928] sm:$0xff]
    %v396 = vld [vmem:[#allocation3 + $0x930] sm:$0xff]
    %v397 = vld [vmem:[#allocation3 + $0x938] sm:$0xff]
    %v398 = vld [vmem:[#allocation3 + $0x940] sm:$0xff]
    %v399 = vld [vmem:[#allocation3 + $0x948] sm:$0xff]
    %v400 = vld [vmem:[#allocation3 + $0x950] sm:$0xff]
    %v401 = vld [vmem:[#allocation3 + $0x958] sm:$0xff]
    %v402 = vld [vmem:[#allocation3 + $0x960] sm:$0xff]
    %v403 = vld [vmem:[#allocation3 + $0x968] sm:$0xff]
    %v404 = vld [vmem:[#allocation3 + $0x970] sm:$0xff]
    %v405 = vld [vmem:[#allocation3 + $0x978] sm:$0xff]
    %v406 = vld [vmem:[#allocation3 + $0x980] sm:$0xff]
    %v407 = vld [vmem:[#allocation3 + $0x988] sm:$0xff]
    %v408 = vld [vmem:[#allocation3 + $0x990] sm:$0xff]
    %v409 = vld [vmem:[#allocation3 + $0x998] sm:$0xff]
    %v410 = vld [vmem:[#allocation3 + $0x9a0] sm:$0xff]
    %v411 = vld [vmem:[#allocation3 + $0x9a8] sm:$0xff]
    %v412 = vld [vmem:[#allocation3 + $0x9b0] sm:$0xff]
    %v413 = vld [vmem:[#allocation3 + $0x9b8] sm:$0xff]
    %v414 = vld [vmem:[#allocation3 + $0x9c0] sm:$0xff]
    %v415 = vld [vmem:[#allocation3 + $0x9c8] sm:$0xff]
    %v416 = vld [vmem:[#allocation3 + $0x9d0] sm:$0xff]
    %v417 = vld [vmem:[#allocation3 + $0x9d8] sm:$0xff]
    %v418 = vld [vmem:[#allocation3 + $0x9e0] sm:$0xff]
    %v419 = vld [vmem:[#allocation3 + $0x9e8] sm:$0xff]
    %v420 = vld [vmem:[#allocation3 + $0x9f0] sm:$0xff]
    %v421 = vld [vmem:[#allocation3 + $0x9f8] sm:$0xff]
    %v422 = vld [vmem:[#allocation3 + $0xa00] sm:$0xff]
    %v423 = vld [vmem:[#allocation3 + $0xa08] sm:$0xff]
    %v424 = vld [vmem:[#allocation3 + $0xa10] sm:$0xff]
    %v425 = vld [vmem:[#allocation3 + $0xa18] sm:$0xff]
    %v426 = vld [vmem:[#allocation3 + $0xa20] sm:$0xff]
    %v427 = vld [vmem:[#allocation3 + $0xa28] sm:$0xff]
    %v428 = vld [vmem:[#allocation3 + $0xa30] sm:$0xff]
    %v429 = vld [vmem:[#allocation3 + $0xa38] sm:$0xff]
    %v430 = vld [vmem:[#allocation3 + $0xa40] sm:$0xff]
    %v431 = vld [vmem:[#allocation3 + $0xa48] sm:$0xff]
    %v432 = vld [vmem:[#allocation3 + $0xa50] sm:$0xff]
    %v433 = vld [vmem:[#allocation3 + $0xa58] sm:$0xff]
    %v434 = vld [vmem:[#allocation3 + $0xa60] sm:$0xff]
    %v435 = vld [vmem:[#allocation3 + $0xa68] sm:$0xff]
    %v436 = vld [vmem:[#allocation3 + $0xa70] sm:$0xff]
    %v437 = vld [vmem:[#allocation3 + $0xa78] sm:$0xff]
    %v438 = vld [vmem:[#allocation3 + $0xa80] sm:$0xff]
    %v439 = vld [vmem:[#allocation3 + $0xa88] sm:$0xff]
    %v440 = vld [vmem:[#allocation3 + $0xa90] sm:$0xff]
    %v441 = vld [vmem:[#allocation3 + $0xa98] sm:$0xff]
    %v442 = vld [vmem:[#allocation3 + $0xaa0] sm:$0xff]
    %v443 = vld [vmem:[#allocation3 + $0xaa8] sm:$0xff]
    %v444 = vld [vmem:[#allocation3 + $0xab0] sm:$0xff]
    %v445 = vld [vmem:[#allocation3 + $0xab8] sm:$0xff]
    %v446 = vld [vmem:[#allocation3 + $0xac0] sm:$0xff]
    %v447 = vld [vmem:[#allocation3 + $0xac8] sm:$0xff]
    %v448 = vld [vmem:[#allocation3 + $0xad0] sm:$0xff]
    %v449 = vld [vmem:[#allocation3 + $0xad8] sm:$0xff]
    %v450 = vld [vmem:[#allocation3 + $0xae0] sm:$0xff]
    %v451 = vld [vmem:[#allocation3 + $0xae8] sm:$0xff]
    %v452 = vld [vmem:[#allocation3 + $0xaf0] sm:$0xff]
    %v453 = vld [vmem:[#allocation3 + $0xaf8] sm:$0xff]
    %v454 = vld [vmem:[#allocation3 + $0xb00] sm:$0xff]
    %v455 = vld [vmem:[#allocation3 + $0xb08] sm:$0xff]
    %v456 = vld [vmem:[#allocation3 + $0xb10] sm:$0xff]
    %v457 = vld [vmem:[#allocation3 + $0xb18] sm:$0xff]
    %v458 = vld [vmem:[#allocation3 + $0xb20] sm:$0xff]
    %v459 = vld [vmem:[#allocation3 + $0xb28] sm:$0xff]
    %v460 = vld [vmem:[#allocation3 + $0xb30] sm:$0xff]
    %v461 = vld [vmem:[#allocation3 + $0xb38] sm:$0xff]
    %v462 = vld [vmem:[#allocation3 + $0xb40] sm:$0xff]
    %v463 = vld [vmem:[#allocation3 + $0xb48] sm:$0xff]
    %v464 = vld [vmem:[#allocation3 + $0xb50] sm:$0xff]
    %v465 = vld [vmem:[#allocation3 + $0xb58] sm:$0xff]
    %v466 = vld [vmem:[#allocation3 + $0xb60] sm:$0xff]
    %v467 = vld [vmem:[#allocation3 + $0xb68] sm:$0xff]
    %v468 = vld [vmem:[#allocation3 + $0xb70] sm:$0xff]
    %v469 = vld [vmem:[#allocation3 + $0xb78] sm:$0xff]
    %v470 = vld [vmem:[#allocation3 + $0xb80] sm:$0xff]
    %v471 = vld [vmem:[#allocation3 + $0xb88] sm:$0xff]
    %v472 = vld [vmem:[#allocation3 + $0xb90] sm:$0xff]
    %v473 = vld [vmem:[#allocation3 + $0xb98] sm:$0xff]
    %v474 = vld [vmem:[#allocation3 + $0xba0] sm:$0xff]
    %v475 = vld [vmem:[#allocation3 + $0xba8] sm:$0xff]
    %v476 = vld [vmem:[#allocation3 + $0xbb0] sm:$0xff]
    %v477 = vld [vmem:[#allocation3 + $0xbb8] sm:$0xff]
    %v478 = vld [vmem:[#allocation3 + $0xbc0] sm:$0xff]
    %v479 = vld [vmem:[#allocation3 + $0xbc8] sm:$0xff]
    %v480 = vld [vmem:[#allocation3 + $0xbd0] sm:$0xff]
    %v481 = vld [vmem:[#allocation3 + $0xbd8] sm:$0xff]
    %v482 = vld [vmem:[#allocation3 + $0xbe0] sm:$0xff]
    %v483 = vld [vmem:[#allocation3 + $0xbe8] sm:$0xff]
    %v484 = vld [vmem:[#allocation3 + $0xbf0] sm:$0xff]
    %v485 = vld [vmem:[#allocation3 + $0xbf8] sm:$0xff]
    %v486 = vld [vmem:[#allocation3 + $0xc00] sm:$0xff]
    %v487 = vld [vmem:[#allocation3 + $0xc08] sm:$0xff]
    %v488 = vld [vmem:[#allocation3 + $0xc10] sm:$0xff]
    %v489 = vld [vmem:[#allocation3 + $0xc18] sm:$0xff]
    %v490 = vld [vmem:[#allocation3 + $0xc20] sm:$0xff]
    %v491 = vld [vmem:[#allocation3 + $0xc28] sm:$0xff]
    %v492 = vld [vmem:[#allocation3 + $0xc30] sm:$0xff]
    %v493 = vld [vmem:[#allocation3 + $0xc38] sm:$0xff]
    %v494 = vld [vmem:[#allocation3 + $0xc40] sm:$0xff]
    %v495 = vld [vmem:[#allocation3 + $0xc48] sm:$0xff]
    %v496 = vld [vmem:[#allocation3 + $0xc50] sm:$0xff]
    %v497 = vld [vmem:[#allocation3 + $0xc58] sm:$0xff]
    %v498 = vld [vmem:[#allocation3 + $0xc60] sm:$0xff]
    %v499 = vld [vmem:[#allocation3 + $0xc68] sm:$0xff]
    %v500 = vld [vmem:[#allocation3 + $0xc70] sm:$0xff]
    %v501 = vld [vmem:[#allocation3 + $0xc78] sm:$0xff]
    %v502 = vld [vmem:[#allocation3 + $0xc80] sm:$0xff]
    %v503 = vld [vmem:[#allocation3 + $0xc88] sm:$0xff]
    %v504 = vld [vmem:[#allocation3 + $0xc90] sm:$0xff]
    %v505 = vld [vmem:[#allocation3 + $0xc98] sm:$0xff]
    %v506 = vld [vmem:[#allocation3 + $0xca0] sm:$0xff]
    %v507 = vld [vmem:[#allocation3 + $0xca8] sm:$0xff]
    %v508 = vld [vmem:[#allocation3 + $0xcb0] sm:$0xff]
    %v509 = vld [vmem:[#allocation3 + $0xcb8] sm:$0xff]
    %v510 = vld [vmem:[#allocation3 + $0xcc0] sm:$0xff]
    %v511 = vld [vmem:[#allocation3 + $0xcc8] sm:$0xff]
    %v512 = vld [vmem:[#allocation3 + $0xcd0] sm:$0xff]
    %v513 = vld [vmem:[#allocation3 + $0xcd8] sm:$0xff]
    %v514 = vld [vmem:[#allocation3 + $0xce0] sm:$0xff]
    %v515 = vld [vmem:[#allocation3 + $0xce8] sm:$0xff]
    %v516 = vld [vmem:[#allocation3 + $0xcf0] sm:$0xff]
    %v517 = vld [vmem:[#allocation3 + $0xcf8] sm:$0xff]
    %v518 = vld [vmem:[#allocation3 + $0xd00] sm:$0xff]
    %v519 = vld [vmem:[#allocation3 + $0xd08] sm:$0xff]
    %v520 = vld [vmem:[#allocation3 + $0xd10] sm:$0xff]
    %v521 = vld [vmem:[#allocation3 + $0xd18] sm:$0xff]
    %v522 = vld [vmem:[#allocation3 + $0xd20] sm:$0xff]
    %v523 = vld [vmem:[#allocation3 + $0xd28] sm:$0xff]
    %v524 = vld [vmem:[#allocation3 + $0xd30] sm:$0xff]
    %v525 = vld [vmem:[#allocation3 + $0xd38] sm:$0xff]
    %v526 = vld [vmem:[#allocation3 + $0xd40] sm:$0xff]
    %v527 = vld [vmem:[#allocation3 + $0xd48] sm:$0xff]
    %v528 = vld [vmem:[#allocation3 + $0xd50] sm:$0xff]
    %v529 = vld [vmem:[#allocation3 + $0xd58] sm:$0xff]
    %v530 = vld [vmem:[#allocation3 + $0xd60] sm:$0xff]
    %v531 = vld [vmem:[#allocation3 + $0xd68] sm:$0xff]
    %v532 = vld [vmem:[#allocation3 + $0xd70] sm:$0xff]
    %v533 = vld [vmem:[#allocation3 + $0xd78] sm:$0xff]
    %v534 = vld [vmem:[#allocation3 + $0xd80] sm:$0xff]
    %v535 = vld [vmem:[#allocation3 + $0xd88] sm:$0xff]
    %v536 = vld [vmem:[#allocation3 + $0xd90] sm:$0xff]
    %v537 = vld [vmem:[#allocation3 + $0xd98] sm:$0xff]
    %v538 = vld [vmem:[#allocation3 + $0xda0] sm:$0xff]
    %v539 = vld [vmem:[#allocation3 + $0xda8] sm:$0xff]
    %v540 = vld [vmem:[#allocation3 + $0xdb0] sm:$0xff]
    %v541 = vld [vmem:[#allocation3 + $0xdb8] sm:$0xff]
    %v542 = vld [vmem:[#allocation3 + $0xdc0] sm:$0xff]
    %v543 = vld [vmem:[#allocation3 + $0xdc8] sm:$0xff]
    %v544 = vld [vmem:[#allocation3 + $0xdd0] sm:$0xff]
    %v545 = vld [vmem:[#allocation3 + $0xdd8] sm:$0xff]
    %v546 = vld [vmem:[#allocation3 + $0xde0] sm:$0xff]
    %v547 = vld [vmem:[#allocation3 + $0xde8] sm:$0xff]
    %v548 = vld [vmem:[#allocation3 + $0xdf0] sm:$0xff]
    %v549 = vld [vmem:[#allocation3 + $0xdf8] sm:$0xff]
    %v550 = vld [vmem:[#allocation3 + $0xe00] sm:$0xff]
    %v551 = vld [vmem:[#allocation3 + $0xe08] sm:$0xff]
    %v552 = vld [vmem:[#allocation3 + $0xe10] sm:$0xff]
    %v553 = vld [vmem:[#allocation3 + $0xe18] sm:$0xff]
    %v554 = vld [vmem:[#allocation3 + $0xe20] sm:$0xff]
    %v555 = vld [vmem:[#allocation3 + $0xe28] sm:$0xff]
    %v556 = vld [vmem:[#allocation3 + $0xe30] sm:$0xff]
    %v557 = vld [vmem:[#allocation3 + $0xe38] sm:$0xff]
    %v558 = vld [vmem:[#allocation3 + $0xe40] sm:$0xff]
    %v559 = vld [vmem:[#allocation3 + $0xe48] sm:$0xff]
    %v560 = vld [vmem:[#allocation3 + $0xe50] sm:$0xff]
    %v561 = vld [vmem:[#allocation3 + $0xe58] sm:$0xff]
    %v562 = vld [vmem:[#allocation3 + $0xe60] sm:$0xff]
    %v563 = vld [vmem:[#allocation3 + $0xe68] sm:$0xff]
    %v564 = vld [vmem:[#allocation3 + $0xe70] sm:$0xff]
    %v565 = vld [vmem:[#allocation3 + $0xe78] sm:$0xff]
    %v566 = vld [vmem:[#allocation3 + $0xe80] sm:$0xff]
    %v567 = vld [vmem:[#allocation3 + $0xe88] sm:$0xff]
    %v568 = vld [vmem:[#allocation3 + $0xe90] sm:$0xff]
    %v569 = vld [vmem:[#allocation3 + $0xe98] sm:$0xff]
    %v570 = vld [vmem:[#allocation3 + $0xea0] sm:$0xff]
    %v571 = vld [vmem:[#allocation3 + $0xea8] sm:$0xff]
    %v572 = vld [vmem:[#allocation3 + $0xeb0] sm:$0xff]
    %v573 = vld [vmem:[#allocation3 + $0xeb8] sm:$0xff]
    %v574 = vld [vmem:[#allocation3 + $0xec0] sm:$0xff]
    %v575 = vld [vmem:[#allocation3 + $0xec8] sm:$0xff]
    %v576 = vld [vmem:[#allocation3 + $0xed0] sm:$0xff]
    %v577 = vld [vmem:[#allocation3 + $0xed8] sm:$0xff]
    %v578 = vld [vmem:[#allocation3 + $0xee0] sm:$0xff]
    %v579 = vld [vmem:[#allocation3 + $0xee8] sm:$0xff]
    %v580 = vld [vmem:[#allocation3 + $0xef0] sm:$0xff]
    %v581 = vld [vmem:[#allocation3 + $0xef8] sm:$0xff]
    %v582 = vld [vmem:[#allocation3 + $0xf00] sm:$0xff]
    %v583 = vld [vmem:[#allocation3 + $0xf08] sm:$0xff]
    %v584 = vld [vmem:[#allocation3 + $0xf10] sm:$0xff]
    %v585 = vld [vmem:[#allocation3 + $0xf18] sm:$0xff]
    %v586 = vld [vmem:[#allocation3 + $0xf20] sm:$0xff]
    %v587 = vld [vmem:[#allocation3 + $0xf28] sm:$0xff]
    %v588 = vld [vmem:[#allocation3 + $0xf30] sm:$0xff]
    %v589 = vld [vmem:[#allocation3 + $0xf38] sm:$0xff]
    %v590 = vld [vmem:[#allocation3 + $0xf40] sm:$0xff]
    %v591 = vld [vmem:[#allocation3 + $0xf48] sm:$0xff]
    %v592 = vld [vmem:[#allocation3 + $0xf50] sm:$0xff]
    %v593 = vld [vmem:[#allocation3 + $0xf58] sm:$0xff]
    %v594 = vld [vmem:[#allocation3 + $0xf60] sm:$0xff]
    %v595 = vld [vmem:[#allocation3 + $0xf68] sm:$0xff]
    %v596 = vld [vmem:[#allocation3 + $0xf70] sm:$0xff]
    %v597 = vld [vmem:[#allocation3 + $0xf78] sm:$0xff]
    %v598 = vld [vmem:[#allocation3 + $0xf80] sm:$0xff]
    %v599 = vld [vmem:[#allocation3 + $0xf88] sm:$0xff]
    %v600 = vld [vmem:[#allocation3 + $0xf90] sm:$0xff]
    %v601 = vld [vmem:[#allocation3 + $0xf98] sm:$0xff]
    %v602 = vld [vmem:[#allocation3 + $0xfa0] sm:$0xff]
    %v603 = vld [vmem:[#allocation3 + $0xfa8] sm:$0xff]
    %v604 = vld [vmem:[#allocation3 + $0xfb0] sm:$0xff]
    %v605 = vld [vmem:[#allocation3 + $0xfb8] sm:$0xff]
    %v606 = vld [vmem:[#allocation3 + $0xfc0] sm:$0xff]
    %v607 = vld [vmem:[#allocation3 + $0xfc8] sm:$0xff]
    %v608 = vld [vmem:[#allocation3 + $0xfd0] sm:$0xff]
    %v609 = vld [vmem:[#allocation3 + $0xfd8] sm:$0xff]
    %v610 = vld [vmem:[#allocation3 + $0xfe0] sm:$0xff]
    %v611 = vld [vmem:[#allocation3 + $0xfe8] sm:$0xff]
    %v612 = vld [vmem:[#allocation3 + $0xff0] sm:$0xff]
    %v613 = vld [vmem:[#allocation3 + $0xff8] sm:$0xff]
    %v614 = vld [vmem:[#allocation3 + $0x1000] sm:$0xff]
    %v615 = vld [vmem:[#allocation3 + $0x1008] sm:$0xff]
    %v616 = vld [vmem:[#allocation3 + $0x1010] sm:$0xff]
    %v617 = vld [vmem:[#allocation3 + $0x1018] sm:$0xff]
    %v618 = vld [vmem:[#allocation3 + $0x1020] sm:$0xff]
    %v619 = vld [vmem:[#allocation3 + $0x1028] sm:$0xff]
    %v620 = vld [vmem:[#allocation3 + $0x1030] sm:$0xff]
    %v621 = vld [vmem:[#allocation3 + $0x1038] sm:$0xff]
    %v622 = vld [vmem:[#allocation3 + $0x1040] sm:$0xff]
    %v623 = vld [vmem:[#allocation3 + $0x1048] sm:$0xff]
    %v624 = vld [vmem:[#allocation3 + $0x1050] sm:$0xff]
    %v625 = vld [vmem:[#allocation3 + $0x1058] sm:$0xff]
    %v626 = vld [vmem:[#allocation3 + $0x1060] sm:$0xff]
    %v627 = vld [vmem:[#allocation3 + $0x1068] sm:$0xff]
    %v628 = vld [vmem:[#allocation3 + $0x1070] sm:$0xff]
    %v629 = vld [vmem:[#allocation3 + $0x1078] sm:$0xff]
    %v630 = vld [vmem:[#allocation3 + $0x1080] sm:$0xff]
    %v631 = vld [vmem:[#allocation3 + $0x1088] sm:$0xff]
    %v632 = vld [vmem:[#allocation3 + $0x1090] sm:$0xff]
    %v633 = vld [vmem:[#allocation3 + $0x1098] sm:$0xff]
    %v634 = vld [vmem:[#allocation3 + $0x10a0] sm:$0xff]
    %v635 = vld [vmem:[#allocation3 + $0x10a8] sm:$0xff]
    %v636 = vld [vmem:[#allocation3 + $0x10b0] sm:$0xff]
    %v637 = vld [vmem:[#allocation3 + $0x10b8] sm:$0xff]
    %v638 = vld [vmem:[#allocation3 + $0x10c0] sm:$0xff]
    %v639 = vld [vmem:[#allocation3 + $0x10c8] sm:$0xff]
    %v640 = vld [vmem:[#allocation3 + $0x10d0] sm:$0xff]
    %v641 = vld [vmem:[#allocation3 + $0x10d8] sm:$0xff]
    %v642 = vld [vmem:[#allocation3 + $0x10e0] sm:$0xff]
    %v643 = vld [vmem:[#allocation3 + $0x10e8] sm:$0xff]
    %v644 = vld [vmem:[#allocation3 + $0x10f0] sm:$0xff]
    %v645 = vld [vmem:[#allocation3 + $0x10f8] sm:$0xff]
    %v646 = vld [vmem:[#allocation3 + $0x1100] sm:$0xff]
    %v647 = vld [vmem:[#allocation3 + $0x1108] sm:$0xff]
    %v648 = vld [vmem:[#allocation3 + $0x1110] sm:$0xff]
    %v649 = vld [vmem:[#allocation3 + $0x1118] sm:$0xff]
    %v650 = vld [vmem:[#allocation3 + $0x1120] sm:$0xff]
    %v651 = vld [vmem:[#allocation3 + $0x1128] sm:$0xff]
    %v652 = vld [vmem:[#allocation3 + $0x1130] sm:$0xff]
    %v653 = vld [vmem:[#allocation3 + $0x1138] sm:$0xff]
    %v654 = vld [vmem:[#allocation3 + $0x1140] sm:$0xff]
    %v655 = vld [vmem:[#allocation3 + $0x1148] sm:$0xff]
    %v656 = vld [vmem:[#allocation3 + $0x1150] sm:$0xff]
    %v657 = vld [vmem:[#allocation3 + $0x1158] sm:$0xff]
    %v658 = vld [vmem:[#allocation3 + $0x1160] sm:$0xff]
    %v659 = vld [vmem:[#allocation3 + $0x1168] sm:$0xff]
    %v660 = vld [vmem:[#allocation3 + $0x1170] sm:$0xff]
    %v661 = vld [vmem:[#allocation3 + $0x1178] sm:$0xff]
    %v662 = vld [vmem:[#allocation3 + $0x1180] sm:$0xff]
    %v663 = vld [vmem:[#allocation3 + $0x1188] sm:$0xff]
    %v664 = vld [vmem:[#allocation3 + $0x1190] sm:$0xff]
    %v665 = vld [vmem:[#allocation3 + $0x1198] sm:$0xff]
    %v666 = vld [vmem:[#allocation3 + $0x11a0] sm:$0xff]
    %v667 = vld [vmem:[#allocation3 + $0x11a8] sm:$0xff]
    %v668 = vld [vmem:[#allocation3 + $0x11b0] sm:$0xff]
    %v669 = vld [vmem:[#allocation3 + $0x11b8] sm:$0xff]
    %v670 = vld [vmem:[#allocation3 + $0x11c0] sm:$0xff]
    %v671 = vld [vmem:[#allocation3 + $0x11c8] sm:$0xff]
    %v672 = vld [vmem:[#allocation3 + $0x11d0] sm:$0xff]
    %v673 = vld [vmem:[#allocation3 + $0x11d8] sm:$0xff]
    %v674 = vld [vmem:[#allocation3 + $0x11e0] sm:$0xff]
    %v675 = vld [vmem:[#allocation3 + $0x11e8] sm:$0xff]
    %v676 = vld [vmem:[#allocation3 + $0x11f0] sm:$0xff]
    %v677 = vld [vmem:[#allocation3 + $0x11f8] sm:$0xff]
    %v678 = vld [vmem:[#allocation3 + $0x1200] sm:$0xff]
    %v679 = vld [vmem:[#allocation3 + $0x1208] sm:$0xff]
    %v680 = vld [vmem:[#allocation3 + $0x1210] sm:$0xff]
    %v681 = vld [vmem:[#allocation3 + $0x1218] sm:$0xff]
    %v682 = vld [vmem:[#allocation3 + $0x1220] sm:$0xff]
    %v683 = vld [vmem:[#allocation3 + $0x1228] sm:$0xff]
    %v684 = vld [vmem:[#allocation3 + $0x1230] sm:$0xff]
    %v685 = vld [vmem:[#allocation3 + $0x1238] sm:$0xff]
    %v686 = vld [vmem:[#allocation3 + $0x1240] sm:$0xff]
    %v687 = vld [vmem:[#allocation3 + $0x1248] sm:$0xff]
    %v688 = vld [vmem:[#allocation3 + $0x1250] sm:$0xff]
    %v689 = vld [vmem:[#allocation3 + $0x1258] sm:$0xff]
    %v690 = vld [vmem:[#allocation3 + $0x1260] sm:$0xff]
    %v691 = vld [vmem:[#allocation3 + $0x1268] sm:$0xff]
    %v692 = vld [vmem:[#allocation3 + $0x1270] sm:$0xff]
    %v693 = vld [vmem:[#allocation3 + $0x1278] sm:$0xff]
    %v694 = vld [vmem:[#allocation3 + $0x1280] sm:$0xff]
    %v695 = vld [vmem:[#allocation3 + $0x1288] sm:$0xff]
    %v696 = vld [vmem:[#allocation3 + $0x1290] sm:$0xff]
    %v697 = vld [vmem:[#allocation3 + $0x1298] sm:$0xff]
    %v698 = vld [vmem:[#allocation3 + $0x12a0] sm:$0xff]
    %v699 = vld [vmem:[#allocation3 + $0x12a8] sm:$0xff]
    %v700 = vld [vmem:[#allocation3 + $0x12b0] sm:$0xff]
    %v701 = vld [vmem:[#allocation3 + $0x12b8] sm:$0xff]
    %v702 = vld [vmem:[#allocation3 + $0x12c0] sm:$0xff]
    %v703 = vld [vmem:[#allocation3 + $0x12c8] sm:$0xff]
    %v704 = vld [vmem:[#allocation3 + $0x12d0] sm:$0xff]
    %v705 = vld [vmem:[#allocation3 + $0x12d8] sm:$0xff]
    %v706 = vld [vmem:[#allocation3 + $0x12e0] sm:$0xff]
    %v707 = vld [vmem:[#allocation3 + $0x12e8] sm:$0xff]
    %v708 = vld [vmem:[#allocation3 + $0x12f0] sm:$0xff]
    %v709 = vld [vmem:[#allocation3 + $0x12f8] sm:$0xff]
    %v710 = vld [vmem:[#allocation3 + $0x1300] sm:$0xff]
    %v711 = vld [vmem:[#allocation3 + $0x1308] sm:$0xff]
    %v712 = vld [vmem:[#allocation3 + $0x1310] sm:$0xff]
    %v713 = vld [vmem:[#allocation3 + $0x1318] sm:$0xff]
    %v714 = vld [vmem:[#allocation3 + $0x1320] sm:$0xff]
    %v715 = vld [vmem:[#allocation3 + $0x1328] sm:$0xff]
    %v716 = vld [vmem:[#allocation3 + $0x1330] sm:$0xff]
    %v717 = vld [vmem:[#allocation3 + $0x1338] sm:$0xff]
    %v718 = vld [vmem:[#allocation3 + $0x1340] sm:$0xff]
    %v719 = vld [vmem:[#allocation3 + $0x1348] sm:$0xff]
    %v720 = vld [vmem:[#allocation3 + $0x1350] sm:$0xff]
    %v721 = vld [vmem:[#allocation3 + $0x1358] sm:$0xff]
    %v722 = vld [vmem:[#allocation3 + $0x1360] sm:$0xff]
    %v723 = vld [vmem:[#allocation3 + $0x1368] sm:$0xff]
    %v724 = vld [vmem:[#allocation3 + $0x1370] sm:$0xff]
    %v725 = vld [vmem:[#allocation3 + $0x1378] sm:$0xff]
    %v726 = vld [vmem:[#allocation3 + $0x1380] sm:$0xff]
    %v727 = vld [vmem:[#allocation3 + $0x1388] sm:$0xff]
    %v728 = vld [vmem:[#allocation3 + $0x1390] sm:$0xff]
    %v729 = vld [vmem:[#allocation3 + $0x1398] sm:$0xff]
    %v730 = vld [vmem:[#allocation3 + $0x13a0] sm:$0xff]
    %v731 = vld [vmem:[#allocation3 + $0x13a8] sm:$0xff]
    %v732 = vld [vmem:[#allocation3 + $0x13b0] sm:$0xff]
    %v733 = vld [vmem:[#allocation3 + $0x13b8] sm:$0xff]
    %v734 = vld [vmem:[#allocation3 + $0x13c0] sm:$0xff]
    %v735 = vld [vmem:[#allocation3 + $0x13c8] sm:$0xff]
    %v736 = vld [vmem:[#allocation3 + $0x13d0] sm:$0xff]
    %v737 = vld [vmem:[#allocation3 + $0x13d8] sm:$0xff]
    %v738 = vld [vmem:[#allocation3 + $0x13e0] sm:$0xff]
    %v739 = vld [vmem:[#allocation3 + $0x13e8] sm:$0xff]
    %v740 = vld [vmem:[#allocation3 + $0x13f0] sm:$0xff]
    %v741 = vld [vmem:[#allocation3 + $0x13f8] sm:$0xff]
    %v742 = vld [vmem:[#allocation3 + $0x1400] sm:$0xff]
    %v743 = vld [vmem:[#allocation3 + $0x1408] sm:$0xff]
    %v744 = vld [vmem:[#allocation3 + $0x1410] sm:$0xff]
    %v745 = vld [vmem:[#allocation3 + $0x1418] sm:$0xff]
    %v746 = vld [vmem:[#allocation3 + $0x1420] sm:$0xff]
    %v747 = vld [vmem:[#allocation3 + $0x1428] sm:$0xff]
    %v748 = vld [vmem:[#allocation3 + $0x1430] sm:$0xff]
    %v749 = vld [vmem:[#allocation3 + $0x1438] sm:$0xff]
    %v750 = vld [vmem:[#allocation3 + $0x1440] sm:$0xff]
    %v751 = vld [vmem:[#allocation3 + $0x1448] sm:$0xff]
    %v752 = vld [vmem:[#allocation3 + $0x1450] sm:$0xff]
    %v753 = vld [vmem:[#allocation3 + $0x1458] sm:$0xff]
    %v754 = vld [vmem:[#allocation3 + $0x1460] sm:$0xff]
    %v755 = vld [vmem:[#allocation3 + $0x1468] sm:$0xff]
    %v756 = vld [vmem:[#allocation3 + $0x1470] sm:$0xff]
    %v757 = vld [vmem:[#allocation3 + $0x1478] sm:$0xff]
    %v758 = vld [vmem:[#allocation3 + $0x1480] sm:$0xff]
    %v759 = vld [vmem:[#allocation3 + $0x1488] sm:$0xff]
    %v760 = vld [vmem:[#allocation3 + $0x1490] sm:$0xff]
    %v761 = vld [vmem:[#allocation3 + $0x1498] sm:$0xff]
    %v762 = vld [vmem:[#allocation3 + $0x14a0] sm:$0xff]
    %v763 = vld [vmem:[#allocation3 + $0x14a8] sm:$0xff]
    %v764 = vld [vmem:[#allocation3 + $0x14b0] sm:$0xff]
    %v765 = vld [vmem:[#allocation3 + $0x14b8] sm:$0xff]
    %v766 = vld [vmem:[#allocation3 + $0x14c0] sm:$0xff]
    %v767 = vld [vmem:[#allocation3 + $0x14c8] sm:$0xff]
    %v768 = vld [vmem:[#allocation3 + $0x14d0] sm:$0xff]
    %v769 = vld [vmem:[#allocation3 + $0x14d8] sm:$0xff]
    %v770 = vld [vmem:[#allocation3 + $0x14e0] sm:$0xff]
    %v771 = vld [vmem:[#allocation3 + $0x14e8] sm:$0xff]
    %v772 = vld [vmem:[#allocation3 + $0x14f0] sm:$0xff]
    %v773 = vld [vmem:[#allocation3 + $0x14f8] sm:$0xff]
    %v774 = vld [vmem:[#allocation3 + $0x1500] sm:$0xff]
    %v775 = vld [vmem:[#allocation3 + $0x1508] sm:$0xff]
    %v776 = vld [vmem:[#allocation3 + $0x1510] sm:$0xff]
    %v777 = vld [vmem:[#allocation3 + $0x1518] sm:$0xff]
    %v778 = vld [vmem:[#allocation3 + $0x1520] sm:$0xff]
    %v779 = vld [vmem:[#allocation3 + $0x1528] sm:$0xff]
    %v780 = vld [vmem:[#allocation3 + $0x1530] sm:$0xff]
    %v781 = vld [vmem:[#allocation3 + $0x1538] sm:$0xff]
    %v782 = vld [vmem:[#allocation3 + $0x1540] sm:$0xff]
    %v783 = vld [vmem:[#allocation3 + $0x1548] sm:$0xff]
    %v784 = vld [vmem:[#allocation3 + $0x1550] sm:$0xff]
    %v785 = vld [vmem:[#allocation3 + $0x1558] sm:$0xff]
    %v786 = vld [vmem:[#allocation3 + $0x1560] sm:$0xff]
    %v787 = vld [vmem:[#allocation3 + $0x1568] sm:$0xff]
    %v788 = vld [vmem:[#allocation3 + $0x1570] sm:$0xff]
    %v789 = vld [vmem:[#allocation3 + $0x1578] sm:$0xff]
    %v790 = vld [vmem:[#allocation3 + $0x1580] sm:$0xff]
    %v791 = vld [vmem:[#allocation3 + $0x1588] sm:$0xff]
    %v792 = vld [vmem:[#allocation3 + $0x1590] sm:$0xff]
    %v793 = vld [vmem:[#allocation3 + $0x1598] sm:$0xff]
    %v794 = vld [vmem:[#allocation3 + $0x15a0] sm:$0xff]
    %v795 = vld [vmem:[#allocation3 + $0x15a8] sm:$0xff]
    %v796 = vld [vmem:[#allocation3 + $0x15b0] sm:$0xff]
    %v797 = vld [vmem:[#allocation3 + $0x15b8] sm:$0xff]
    %v798 = vld [vmem:[#allocation3 + $0x15c0] sm:$0xff]
    %v799 = vld [vmem:[#allocation3 + $0x15c8] sm:$0xff]
    %v800 = vld [vmem:[#allocation3 + $0x15d0] sm:$0xff]
    %v801 = vld [vmem:[#allocation3 + $0x15d8] sm:$0xff]
    %v802 = vld [vmem:[#allocation3 + $0x15e0] sm:$0xff]
    %v803 = vld [vmem:[#allocation3 + $0x15e8] sm:$0xff]
    %v804 = vld [vmem:[#allocation3 + $0x15f0] sm:$0xff]
    %v805 = vld [vmem:[#allocation3 + $0x15f8] sm:$0xff]
    %v806 = vld [vmem:[#allocation3 + $0x1600] sm:$0xff]
    %v807 = vld [vmem:[#allocation3 + $0x1608] sm:$0xff]
    %v808 = vld [vmem:[#allocation3 + $0x1610] sm:$0xff]
    %v809 = vld [vmem:[#allocation3 + $0x1618] sm:$0xff]
    %v810 = vld [vmem:[#allocation3 + $0x1620] sm:$0xff]
    %v811 = vld [vmem:[#allocation3 + $0x1628] sm:$0xff]
    %v812 = vld [vmem:[#allocation3 + $0x1630] sm:$0xff]
    %v813 = vld [vmem:[#allocation3 + $0x1638] sm:$0xff]
    %v814 = vld [vmem:[#allocation3 + $0x1640] sm:$0xff]
    %v815 = vld [vmem:[#allocation3 + $0x1648] sm:$0xff]
    %v816 = vld [vmem:[#allocation3 + $0x1650] sm:$0xff]
    %v817 = vld [vmem:[#allocation3 + $0x1658] sm:$0xff]
    %v818 = vld [vmem:[#allocation3 + $0x1660] sm:$0xff]
    %v819 = vld [vmem:[#allocation3 + $0x1668] sm:$0xff]
    %v820 = vld [vmem:[#allocation3 + $0x1670] sm:$0xff]
    %v821 = vld [vmem:[#allocation3 + $0x1678] sm:$0xff]
    %v822 = vld [vmem:[#allocation3 + $0x1680] sm:$0xff]
    %v823 = vld [vmem:[#allocation3 + $0x1688] sm:$0xff]
    %v824 = vld [vmem:[#allocation3 + $0x1690] sm:$0xff]
    %v825 = vld [vmem:[#allocation3 + $0x1698] sm:$0xff]
    %v826 = vld [vmem:[#allocation3 + $0x16a0] sm:$0xff]
    %v827 = vld [vmem:[#allocation3 + $0x16a8] sm:$0xff]
    %v828 = vld [vmem:[#allocation3 + $0x16b0] sm:$0xff]
    %v829 = vld [vmem:[#allocation3 + $0x16b8] sm:$0xff]
    %v830 = vld [vmem:[#allocation3 + $0x16c0] sm:$0xff]
    %v831 = vld [vmem:[#allocation3 + $0x16c8] sm:$0xff]
    %v832 = vld [vmem:[#allocation3 + $0x16d0] sm:$0xff]
    %v833 = vld [vmem:[#allocation3 + $0x16d8] sm:$0xff]
    %v834 = vld [vmem:[#allocation3 + $0x16e0] sm:$0xff]
    %v835 = vld [vmem:[#allocation3 + $0x16e8] sm:$0xff]
    %v836 = vld [vmem:[#allocation3 + $0x16f0] sm:$0xff]
    %v837 = vld [vmem:[#allocation3 + $0x16f8] sm:$0xff]
    %v838 = vld [vmem:[#allocation3 + $0x1700] sm:$0xff]
    %v839 = vld [vmem:[#allocation3 + $0x1708] sm:$0xff]
    %v840 = vld [vmem:[#allocation3 + $0x1710] sm:$0xff]
    %v841 = vld [vmem:[#allocation3 + $0x1718] sm:$0xff]
    %v842 = vld [vmem:[#allocation3 + $0x1720] sm:$0xff]
    %v843 = vld [vmem:[#allocation3 + $0x1728] sm:$0xff]
    %v844 = vld [vmem:[#allocation3 + $0x1730] sm:$0xff]
    %v845 = vld [vmem:[#allocation3 + $0x1738] sm:$0xff]
    %v846 = vld [vmem:[#allocation3 + $0x1740] sm:$0xff]
    %v847 = vld [vmem:[#allocation3 + $0x1748] sm:$0xff]
    %v848 = vld [vmem:[#allocation3 + $0x1750] sm:$0xff]
    %v849 = vld [vmem:[#allocation3 + $0x1758] sm:$0xff]
    %v850 = vld [vmem:[#allocation3 + $0x1760] sm:$0xff]
    %v851 = vld [vmem:[#allocation3 + $0x1768] sm:$0xff]
    %v852 = vld [vmem:[#allocation3 + $0x1770] sm:$0xff]
    %v853 = vld [vmem:[#allocation3 + $0x1778] sm:$0xff]
    %v854 = vld [vmem:[#allocation3 + $0x1780] sm:$0xff]
    %v855 = vld [vmem:[#allocation3 + $0x1788] sm:$0xff]
    %v856 = vld [vmem:[#allocation3 + $0x1790] sm:$0xff]
    %v857 = vld [vmem:[#allocation3 + $0x1798] sm:$0xff]
    %v858 = vld [vmem:[#allocation3 + $0x17a0] sm:$0xff]
    %v859 = vld [vmem:[#allocation3 + $0x17a8] sm:$0xff]
    %v860 = vld [vmem:[#allocation3 + $0x17b0] sm:$0xff]
    %v861 = vld [vmem:[#allocation3 + $0x17b8] sm:$0xff]
    %v862 = vld [vmem:[#allocation3 + $0x17c0] sm:$0xff]
    %v863 = vld [vmem:[#allocation3 + $0x17c8] sm:$0xff]
    %v864 = vld [vmem:[#allocation3 + $0x17d0] sm:$0xff]
    %v865 = vld [vmem:[#allocation3 + $0x17d8] sm:$0xff]
    %v866 = vld [vmem:[#allocation3 + $0x17e0] sm:$0xff]
    %v867 = vld [vmem:[#allocation3 + $0x17e8] sm:$0xff]
    %v868 = vld [vmem:[#allocation3 + $0x17f0] sm:$0xff]
    %v869 = vld [vmem:[#allocation3 + $0x17f8] sm:$0xff]
    %v870 = vld [vmem:[#allocation5] sm:$0xf]
    %v872 = vlaneseq
    %v873 = vshrl.u32 %v872, 7
    %v874 = vsub.s32 0, %v873
    %v875 = vrot.slane %v870, %v874
    %v876 = vlaneseq
    %v877 = vshrl.u32 %v876, 7
    %v878 = vsub.s32 1, %v877
    %v879 = vrot.slane %v870, %v878
    %v880 = vlaneseq
    %v881 = vshrl.u32 %v880, 7
    %v882 = vsub.s32 2, %v881
    %v883 = vrot.slane %v870, %v882
    %v884 = vlaneseq
    %v885 = vshrl.u32 %v884, 7
    %v886 = vsub.s32 3, %v885
    %v887 = vrot.slane %v870, %v886
    %v904 = vunpack.c.l.b16 %v90
    %v905 = vunpack.c.h.b16 %v90
    %v906 = vunpack.c.l.b16 %v91
    %v907 = vunpack.c.h.b16 %v91
    %v908 = vunpack.c.l.b16 %v92
    %v909 = vunpack.c.h.b16 %v92
    %v910 = vunpack.c.l.b16 %v93
    %v911 = vunpack.c.h.b16 %v93
    %v912 = vunpack.c.l.b16 %v94
    %v913 = vunpack.c.h.b16 %v94
    %v914 = vunpack.c.l.b16 %v95
    %v915 = vunpack.c.h.b16 %v95
    %v916 = vunpack.c.l.b16 %v96
    %v917 = vunpack.c.h.b16 %v96
    %v918 = vunpack.c.l.b16 %v97
    %v919 = vunpack.c.h.b16 %v97
    %v920 = vunpack.c.l.b16 %v98
    %v921 = vunpack.c.h.b16 %v98
    %v922 = vunpack.c.l.b16 %v99
    %v923 = vunpack.c.h.b16 %v99
    %v924 = vunpack.c.l.b16 %v100
    %v925 = vunpack.c.h.b16 %v100
    %v926 = vunpack.c.l.b16 %v101
    %v927 = vunpack.c.h.b16 %v101
    %v928 = vpack.c.b16 %v904, %v904
    %v929 = vpack.c.b16 %v905, %v905
    %v930 = vpack.c.b16 %v906, %v906
    %v931 = vpack.c.b16 %v907, %v907
    %v932 = vpack.c.b16 %v908, %v908
    %v933 = vpack.c.b16 %v909, %v909
    %v934 = vpack.c.b16 %v910, %v910
    %v935 = vpack.c.b16 %v911, %v911
    %v936 = vpack.c.b16 %v912, %v912
    %v937 = vpack.c.b16 %v913, %v913
    %v938 = vpack.c.b16 %v914, %v914
    %v939 = vpack.c.b16 %v915, %v915
    %v940 = vpack.c.b16 %v916, %v916
    %v941 = vpack.c.b16 %v917, %v917
    %v942 = vpack.c.b16 %v918, %v918
    %v943 = vpack.c.b16 %v919, %v919
    %v944 = vpack.c.b16 %v920, %v920
    %v945 = vpack.c.b16 %v921, %v921
    %v946 = vpack.c.b16 %v922, %v922
    %v947 = vpack.c.b16 %v923, %v923
    %v948 = vpack.c.b16 %v924, %v924
    %v949 = vpack.c.b16 %v925, %v925
    %v950 = vpack.c.b16 %v926, %v926
    %v951 = vpack.c.b16 %v927, %v927
    %v1744 = vunpack.c.l.b16 %v102
    %v1745 = vunpack.c.h.b16 %v102
    %v1746 = vunpack.c.l.b16 %v103
    %v1747 = vunpack.c.h.b16 %v103
    %v1748 = vunpack.c.l.b16 %v104
    %v1749 = vunpack.c.h.b16 %v104
    %v1750 = vunpack.c.l.b16 %v105
    %v1751 = vunpack.c.h.b16 %v105
    %v1752 = vunpack.c.l.b16 %v106
    %v1753 = vunpack.c.h.b16 %v106
    %v1754 = vunpack.c.l.b16 %v107
    %v1755 = vunpack.c.h.b16 %v107
    %v1756 = vunpack.c.l.b16 %v108
    %v1757 = vunpack.c.h.b16 %v108
    %v1758 = vunpack.c.l.b16 %v109
    %v1759 = vunpack.c.h.b16 %v109
    %v1760 = vunpack.c.l.b16 %v110
    %v1761 = vunpack.c.h.b16 %v110
    %v1762 = vunpack.c.l.b16 %v111
    %v1763 = vunpack.c.h.b16 %v111
    %v1764 = vunpack.c.l.b16 %v112
    %v1765 = vunpack.c.h.b16 %v112
    %v1766 = vunpack.c.l.b16 %v113
    %v1767 = vunpack.c.h.b16 %v113
    %v1768 = vunpack.c.l.b16 %v114
    %v1769 = vunpack.c.h.b16 %v114
    %v1770 = vunpack.c.l.b16 %v115
    %v1771 = vunpack.c.h.b16 %v115
    %v1772 = vunpack.c.l.b16 %v116
    %v1773 = vunpack.c.h.b16 %v116
    %v1774 = vunpack.c.l.b16 %v117
    %v1775 = vunpack.c.h.b16 %v117
    %v1776 = vunpack.c.l.b16 %v118
    %v1777 = vunpack.c.h.b16 %v118
    %v1778 = vunpack.c.l.b16 %v119
    %v1779 = vunpack.c.h.b16 %v119
    %v1780 = vunpack.c.l.b16 %v120
    %v1781 = vunpack.c.h.b16 %v120
    %v1782 = vunpack.c.l.b16 %v121
    %v1783 = vunpack.c.h.b16 %v121
    %v1784 = vunpack.c.l.b16 %v122
    %v1785 = vunpack.c.h.b16 %v122
    %v1786 = vunpack.c.l.b16 %v123
    %v1787 = vunpack.c.h.b16 %v123
    %v1788 = vunpack.c.l.b16 %v124
    %v1789 = vunpack.c.h.b16 %v124
    %v1790 = vunpack.c.l.b16 %v125
    %v1791 = vunpack.c.h.b16 %v125
    %v1792 = vunpack.c.l.b16 %v126
    %v1793 = vunpack.c.h.b16 %v126
    %v1794 = vunpack.c.l.b16 %v127
    %v1795 = vunpack.c.h.b16 %v127
    %v1796 = vunpack.c.l.b16 %v128
    %v1797 = vunpack.c.h.b16 %v128
    %v1798 = vunpack.c.l.b16 %v129
    %v1799 = vunpack.c.h.b16 %v129
    %v1800 = vunpack.c.l.b16 %v130
    %v1801 = vunpack.c.h.b16 %v130
    %v1802 = vunpack.c.l.b16 %v131
    %v1803 = vunpack.c.h.b16 %v131
    %v1804 = vunpack.c.l.b16 %v132
    %v1805 = vunpack.c.h.b16 %v132
    %v1806 = vunpack.c.l.b16 %v133
    %v1807 = vunpack.c.h.b16 %v133
    %v1808 = vunpack.c.l.b16 %v134
    %v1809 = vunpack.c.h.b16 %v134
    %v1810 = vunpack.c.l.b16 %v135
    %v1811 = vunpack.c.h.b16 %v135
    %v1812 = vunpack.c.l.b16 %v136
    %v1813 = vunpack.c.h.b16 %v136
    %v1814 = vunpack.c.l.b16 %v137
    %v1815 = vunpack.c.h.b16 %v137
    %v1816 = vunpack.c.l.b16 %v138
    %v1817 = vunpack.c.h.b16 %v138
    %v1818 = vunpack.c.l.b16 %v139
    %v1819 = vunpack.c.h.b16 %v139
    %v1820 = vunpack.c.l.b16 %v140
    %v1821 = vunpack.c.h.b16 %v140
    %v1822 = vunpack.c.l.b16 %v141
    %v1823 = vunpack.c.h.b16 %v141
    %v1824 = vunpack.c.l.b16 %v142
    %v1825 = vunpack.c.h.b16 %v142
    %v1826 = vunpack.c.l.b16 %v143
    %v1827 = vunpack.c.h.b16 %v143
    %v1828 = vunpack.c.l.b16 %v144
    %v1829 = vunpack.c.h.b16 %v144
    %v1830 = vunpack.c.l.b16 %v145
    %v1831 = vunpack.c.h.b16 %v145
    %v1832 = vunpack.c.l.b16 %v146
    %v1833 = vunpack.c.h.b16 %v146
    %v1834 = vunpack.c.l.b16 %v147
    %v1835 = vunpack.c.h.b16 %v147
    %v1836 = vunpack.c.l.b16 %v148
    %v1837 = vunpack.c.h.b16 %v148
    %v1838 = vunpack.c.l.b16 %v149
    %v1839 = vunpack.c.h.b16 %v149
    %v1840 = vunpack.c.l.b16 %v150
    %v1841 = vunpack.c.h.b16 %v150
    %v1842 = vunpack.c.l.b16 %v151
    %v1843 = vunpack.c.h.b16 %v151
    %v1844 = vunpack.c.l.b16 %v152
    %v1845 = vunpack.c.h.b16 %v152
    %v1846 = vunpack.c.l.b16 %v153
    %v1847 = vunpack.c.h.b16 %v153
    %v1848 = vunpack.c.l.b16 %v154
    %v1849 = vunpack.c.h.b16 %v154
    %v1850 = vunpack.c.l.b16 %v155
    %v1851 = vunpack.c.h.b16 %v155
    %v1852 = vunpack.c.l.b16 %v156
    %v1853 = vunpack.c.h.b16 %v156
    %v1854 = vunpack.c.l.b16 %v157
    %v1855 = vunpack.c.h.b16 %v157
    %v1856 = vunpack.c.l.b16 %v158
    %v1857 = vunpack.c.h.b16 %v158
    %v1858 = vunpack.c.l.b16 %v159
    %v1859 = vunpack.c.h.b16 %v159
    %v1860 = vunpack.c.l.b16 %v160
    %v1861 = vunpack.c.h.b16 %v160
    %v1862 = vunpack.c.l.b16 %v161
    %v1863 = vunpack.c.h.b16 %v161
    %v1864 = vunpack.c.l.b16 %v162
    %v1865 = vunpack.c.h.b16 %v162
    %v1866 = vunpack.c.l.b16 %v163
    %v1867 = vunpack.c.h.b16 %v163
    %v1868 = vunpack.c.l.b16 %v164
    %v1869 = vunpack.c.h.b16 %v164
    %v1870 = vunpack.c.l.b16 %v165
    %v1871 = vunpack.c.h.b16 %v165
    %v1872 = vunpack.c.l.b16 %v166
    %v1873 = vunpack.c.h.b16 %v166
    %v1874 = vunpack.c.l.b16 %v167
    %v1875 = vunpack.c.h.b16 %v167
    %v1876 = vunpack.c.l.b16 %v168
    %v1877 = vunpack.c.h.b16 %v168
    %v1878 = vunpack.c.l.b16 %v169
    %v1879 = vunpack.c.h.b16 %v169
    %v1880 = vunpack.c.l.b16 %v170
    %v1881 = vunpack.c.h.b16 %v170
    %v1882 = vunpack.c.l.b16 %v171
    %v1883 = vunpack.c.h.b16 %v171
    %v1884 = vunpack.c.l.b16 %v172
    %v1885 = vunpack.c.h.b16 %v172
    %v1886 = vunpack.c.l.b16 %v173
    %v1887 = vunpack.c.h.b16 %v173
    %v1888 = vunpack.c.l.b16 %v174
    %v1889 = vunpack.c.h.b16 %v174
    %v1890 = vunpack.c.l.b16 %v175
    %v1891 = vunpack.c.h.b16 %v175
    %v1892 = vunpack.c.l.b16 %v176
    %v1893 = vunpack.c.h.b16 %v176
    %v1894 = vunpack.c.l.b16 %v177
    %v1895 = vunpack.c.h.b16 %v177
    %v1896 = vunpack.c.l.b16 %v178
    %v1897 = vunpack.c.h.b16 %v178
    %v1898 = vunpack.c.l.b16 %v179
    %v1899 = vunpack.c.h.b16 %v179
    %v1900 = vunpack.c.l.b16 %v180
    %v1901 = vunpack.c.h.b16 %v180
    %v1902 = vunpack.c.l.b16 %v181
    %v1903 = vunpack.c.h.b16 %v181
    %v1904 = vunpack.c.l.b16 %v182
    %v1905 = vunpack.c.h.b16 %v182
    %v1906 = vunpack.c.l.b16 %v183
    %v1907 = vunpack.c.h.b16 %v183
    %v1908 = vunpack.c.l.b16 %v184
    %v1909 = vunpack.c.h.b16 %v184
    %v1910 = vunpack.c.l.b16 %v185
    %v1911 = vunpack.c.h.b16 %v185
    %v1912 = vunpack.c.l.b16 %v186
    %v1913 = vunpack.c.h.b16 %v186
    %v1914 = vunpack.c.l.b16 %v187
    %v1915 = vunpack.c.h.b16 %v187
    %v1916 = vunpack.c.l.b16 %v188
    %v1917 = vunpack.c.h.b16 %v188
    %v1918 = vunpack.c.l.b16 %v189
    %v1919 = vunpack.c.h.b16 %v189
    %v1920 = vunpack.c.l.b16 %v190
    %v1921 = vunpack.c.h.b16 %v190
    %v1922 = vunpack.c.l.b16 %v191
    %v1923 = vunpack.c.h.b16 %v191
    %v1924 = vunpack.c.l.b16 %v192
    %v1925 = vunpack.c.h.b16 %v192
    %v1926 = vunpack.c.l.b16 %v193
    %v1927 = vunpack.c.h.b16 %v193
    %v1928 = vunpack.c.l.b16 %v194
    %v1929 = vunpack.c.h.b16 %v194
    %v1930 = vunpack.c.l.b16 %v195
    %v1931 = vunpack.c.h.b16 %v195
    %v1932 = vunpack.c.l.b16 %v196
    %v1933 = vunpack.c.h.b16 %v196
    %v1934 = vunpack.c.l.b16 %v197
    %v1935 = vunpack.c.h.b16 %v197
    %v1936 = vunpack.c.l.b16 %v198
    %v1937 = vunpack.c.h.b16 %v198
    %v1938 = vunpack.c.l.b16 %v199
    %v1939 = vunpack.c.h.b16 %v199
    %v1940 = vunpack.c.l.b16 %v200
    %v1941 = vunpack.c.h.b16 %v200
    %v1942 = vunpack.c.l.b16 %v201
    %v1943 = vunpack.c.h.b16 %v201
    %v1944 = vunpack.c.l.b16 %v202
    %v1945 = vunpack.c.h.b16 %v202
    %v1946 = vunpack.c.l.b16 %v203
    %v1947 = vunpack.c.h.b16 %v203
    %v1948 = vunpack.c.l.b16 %v204
    %v1949 = vunpack.c.h.b16 %v204
    %v1950 = vunpack.c.l.b16 %v205
    %v1951 = vunpack.c.h.b16 %v205
    %v1952 = vunpack.c.l.b16 %v206
    %v1953 = vunpack.c.h.b16 %v206
    %v1954 = vunpack.c.l.b16 %v207
    %v1955 = vunpack.c.h.b16 %v207
    %v1956 = vunpack.c.l.b16 %v208
    %v1957 = vunpack.c.h.b16 %v208
    %v1958 = vunpack.c.l.b16 %v209
    %v1959 = vunpack.c.h.b16 %v209
    %v1960 = vunpack.c.l.b16 %v210
    %v1961 = vunpack.c.h.b16 %v210
    %v1962 = vunpack.c.l.b16 %v211
    %v1963 = vunpack.c.h.b16 %v211
    %v1964 = vunpack.c.l.b16 %v212
    %v1965 = vunpack.c.h.b16 %v212
    %v1966 = vunpack.c.l.b16 %v213
    %v1967 = vunpack.c.h.b16 %v213
    %v1968 = vunpack.c.l.b16 %v214
    %v1969 = vunpack.c.h.b16 %v214
    %v1970 = vunpack.c.l.b16 %v215
    %v1971 = vunpack.c.h.b16 %v215
    %v1972 = vunpack.c.l.b16 %v216
    %v1973 = vunpack.c.h.b16 %v216
    %v1974 = vunpack.c.l.b16 %v217
    %v1975 = vunpack.c.h.b16 %v217
    %v1976 = vunpack.c.l.b16 %v218
    %v1977 = vunpack.c.h.b16 %v218
    %v1978 = vunpack.c.l.b16 %v219
    %v1979 = vunpack.c.h.b16 %v219
    %v1980 = vunpack.c.l.b16 %v220
    %v1981 = vunpack.c.h.b16 %v220
    %v1982 = vunpack.c.l.b16 %v221
    %v1983 = vunpack.c.h.b16 %v221
    %v1984 = vunpack.c.l.b16 %v222
    %v1985 = vunpack.c.h.b16 %v222
    %v1986 = vunpack.c.l.b16 %v223
    %v1987 = vunpack.c.h.b16 %v223
    %v1988 = vunpack.c.l.b16 %v224
    %v1989 = vunpack.c.h.b16 %v224
    %v1990 = vunpack.c.l.b16 %v225
    %v1991 = vunpack.c.h.b16 %v225
    %v1992 = vunpack.c.l.b16 %v226
    %v1993 = vunpack.c.h.b16 %v226
    %v1994 = vunpack.c.l.b16 %v227
    %v1995 = vunpack.c.h.b16 %v227
    %v1996 = vunpack.c.l.b16 %v228
    %v1997 = vunpack.c.h.b16 %v228
    %v1998 = vunpack.c.l.b16 %v229
    %v1999 = vunpack.c.h.b16 %v229
    %v2000 = vunpack.c.l.b16 %v230
    %v2001 = vunpack.c.h.b16 %v230
    %v2002 = vunpack.c.l.b16 %v231
    %v2003 = vunpack.c.h.b16 %v231
    %v2004 = vunpack.c.l.b16 %v232
    %v2005 = vunpack.c.h.b16 %v232
    %v2006 = vunpack.c.l.b16 %v233
    %v2007 = vunpack.c.h.b16 %v233
    %v2008 = vunpack.c.l.b16 %v234
    %v2009 = vunpack.c.h.b16 %v234
    %v2010 = vunpack.c.l.b16 %v235
    %v2011 = vunpack.c.h.b16 %v235
    %v2012 = vunpack.c.l.b16 %v236
    %v2013 = vunpack.c.h.b16 %v236
    %v2014 = vunpack.c.l.b16 %v237
    %v2015 = vunpack.c.h.b16 %v237
    %v2016 = vunpack.c.l.b16 %v238
    %v2017 = vunpack.c.h.b16 %v238
    %v2018 = vunpack.c.l.b16 %v239
    %v2019 = vunpack.c.h.b16 %v239
    %v2020 = vunpack.c.l.b16 %v240
    %v2021 = vunpack.c.h.b16 %v240
    %v2022 = vunpack.c.l.b16 %v241
    %v2023 = vunpack.c.h.b16 %v241
    %v2024 = vunpack.c.l.b16 %v242
    %v2025 = vunpack.c.h.b16 %v242
    %v2026 = vunpack.c.l.b16 %v243
    %v2027 = vunpack.c.h.b16 %v243
    %v2028 = vunpack.c.l.b16 %v244
    %v2029 = vunpack.c.h.b16 %v244
    %v2030 = vunpack.c.l.b16 %v245
    %v2031 = vunpack.c.h.b16 %v245
    %v2032 = vunpack.c.l.b16 %v246
    %v2033 = vunpack.c.h.b16 %v246
    %v2034 = vunpack.c.l.b16 %v247
    %v2035 = vunpack.c.h.b16 %v247
    %v2036 = vunpack.c.l.b16 %v248
    %v2037 = vunpack.c.h.b16 %v248
    %v2038 = vunpack.c.l.b16 %v249
    %v2039 = vunpack.c.h.b16 %v249
    %v2040 = vunpack.c.l.b16 %v250
    %v2041 = vunpack.c.h.b16 %v250
    %v2042 = vunpack.c.l.b16 %v251
    %v2043 = vunpack.c.h.b16 %v251
    %v2044 = vunpack.c.l.b16 %v252
    %v2045 = vunpack.c.h.b16 %v252
    %v2046 = vunpack.c.l.b16 %v253
    %v2047 = vunpack.c.h.b16 %v253
    %v2048 = vunpack.c.l.b16 %v254
    %v2049 = vunpack.c.h.b16 %v254
    %v2050 = vunpack.c.l.b16 %v255
    %v2051 = vunpack.c.h.b16 %v255
    %v2052 = vunpack.c.l.b16 %v256
    %v2053 = vunpack.c.h.b16 %v256
    %v2054 = vunpack.c.l.b16 %v257
    %v2055 = vunpack.c.h.b16 %v257
    %v2056 = vunpack.c.l.b16 %v258
    %v2057 = vunpack.c.h.b16 %v258
    %v2058 = vunpack.c.l.b16 %v259
    %v2059 = vunpack.c.h.b16 %v259
    %v2060 = vunpack.c.l.b16 %v260
    %v2061 = vunpack.c.h.b16 %v260
    %v2062 = vunpack.c.l.b16 %v261
    %v2063 = vunpack.c.h.b16 %v261
    %v2064 = vunpack.c.l.b16 %v262
    %v2065 = vunpack.c.h.b16 %v262
    %v2066 = vunpack.c.l.b16 %v263
    %v2067 = vunpack.c.h.b16 %v263
    %v2068 = vunpack.c.l.b16 %v264
    %v2069 = vunpack.c.h.b16 %v264
    %v2070 = vunpack.c.l.b16 %v265
    %v2071 = vunpack.c.h.b16 %v265
    %v2072 = vunpack.c.l.b16 %v266
    %v2073 = vunpack.c.h.b16 %v266
    %v2074 = vunpack.c.l.b16 %v267
    %v2075 = vunpack.c.h.b16 %v267
    %v2076 = vunpack.c.l.b16 %v268
    %v2077 = vunpack.c.h.b16 %v268
    %v2078 = vunpack.c.l.b16 %v269
    %v2079 = vunpack.c.h.b16 %v269
    %v2080 = vunpack.c.l.b16 %v270
    %v2081 = vunpack.c.h.b16 %v270
    %v2082 = vunpack.c.l.b16 %v271
    %v2083 = vunpack.c.h.b16 %v271
    %v2084 = vunpack.c.l.b16 %v272
    %v2085 = vunpack.c.h.b16 %v272
    %v2086 = vunpack.c.l.b16 %v273
    %v2087 = vunpack.c.h.b16 %v273
    %v2088 = vunpack.c.l.b16 %v274
    %v2089 = vunpack.c.h.b16 %v274
    %v2090 = vunpack.c.l.b16 %v275
    %v2091 = vunpack.c.h.b16 %v275
    %v2092 = vunpack.c.l.b16 %v276
    %v2093 = vunpack.c.h.b16 %v276
    %v2094 = vunpack.c.l.b16 %v277
    %v2095 = vunpack.c.h.b16 %v277
    %v2096 = vunpack.c.l.b16 %v278
    %v2097 = vunpack.c.h.b16 %v278
    %v2098 = vunpack.c.l.b16 %v279
    %v2099 = vunpack.c.h.b16 %v279
    %v2100 = vunpack.c.l.b16 %v280
    %v2101 = vunpack.c.h.b16 %v280
    %v2102 = vunpack.c.l.b16 %v281
    %v2103 = vunpack.c.h.b16 %v281
    %v2104 = vunpack.c.l.b16 %v282
    %v2105 = vunpack.c.h.b16 %v282
    %v2106 = vunpack.c.l.b16 %v283
    %v2107 = vunpack.c.h.b16 %v283
    %v2108 = vunpack.c.l.b16 %v284
    %v2109 = vunpack.c.h.b16 %v284
    %v2110 = vunpack.c.l.b16 %v285
    %v2111 = vunpack.c.h.b16 %v285
    %v2112 = vunpack.c.l.b16 %v286
    %v2113 = vunpack.c.h.b16 %v286
    %v2114 = vunpack.c.l.b16 %v287
    %v2115 = vunpack.c.h.b16 %v287
    %v2116 = vunpack.c.l.b16 %v288
    %v2117 = vunpack.c.h.b16 %v288
    %v2118 = vunpack.c.l.b16 %v289
    %v2119 = vunpack.c.h.b16 %v289
    %v2120 = vunpack.c.l.b16 %v290
    %v2121 = vunpack.c.h.b16 %v290
    %v2122 = vunpack.c.l.b16 %v291
    %v2123 = vunpack.c.h.b16 %v291
    %v2124 = vunpack.c.l.b16 %v292
    %v2125 = vunpack.c.h.b16 %v292
    %v2126 = vunpack.c.l.b16 %v293
    %v2127 = vunpack.c.h.b16 %v293
    %v2128 = vunpack.c.l.b16 %v294
    %v2129 = vunpack.c.h.b16 %v294
    %v2130 = vunpack.c.l.b16 %v295
    %v2131 = vunpack.c.h.b16 %v295
    %v2132 = vunpack.c.l.b16 %v296
    %v2133 = vunpack.c.h.b16 %v296
    %v2134 = vunpack.c.l.b16 %v297
    %v2135 = vunpack.c.h.b16 %v297
    %v2136 = vunpack.c.l.b16 %v298
    %v2137 = vunpack.c.h.b16 %v298
    %v2138 = vunpack.c.l.b16 %v299
    %v2139 = vunpack.c.h.b16 %v299
    %v2140 = vunpack.c.l.b16 %v300
    %v2141 = vunpack.c.h.b16 %v300
    %v2142 = vunpack.c.l.b16 %v301
    %v2143 = vunpack.c.h.b16 %v301
    %v2144 = vunpack.c.l.b16 %v302
    %v2145 = vunpack.c.h.b16 %v302
    %v2146 = vunpack.c.l.b16 %v303
    %v2147 = vunpack.c.h.b16 %v303
    %v2148 = vunpack.c.l.b16 %v304
    %v2149 = vunpack.c.h.b16 %v304
    %v2150 = vunpack.c.l.b16 %v305
    %v2151 = vunpack.c.h.b16 %v305
    %v2152 = vunpack.c.l.b16 %v306
    %v2153 = vunpack.c.h.b16 %v306
    %v2154 = vunpack.c.l.b16 %v307
    %v2155 = vunpack.c.h.b16 %v307
    %v2156 = vunpack.c.l.b16 %v308
    %v2157 = vunpack.c.h.b16 %v308
    %v2158 = vunpack.c.l.b16 %v309
    %v2159 = vunpack.c.h.b16 %v309
    %v2160 = vunpack.c.l.b16 %v310
    %v2161 = vunpack.c.h.b16 %v310
    %v2162 = vunpack.c.l.b16 %v311
    %v2163 = vunpack.c.h.b16 %v311
    %v2164 = vunpack.c.l.b16 %v312
    %v2165 = vunpack.c.h.b16 %v312
    %v2166 = vunpack.c.l.b16 %v313
    %v2167 = vunpack.c.h.b16 %v313
    %v2168 = vunpack.c.l.b16 %v314
    %v2169 = vunpack.c.h.b16 %v314
    %v2170 = vunpack.c.l.b16 %v315
    %v2171 = vunpack.c.h.b16 %v315
    %v2172 = vunpack.c.l.b16 %v316
    %v2173 = vunpack.c.h.b16 %v316
    %v2174 = vunpack.c.l.b16 %v317
    %v2175 = vunpack.c.h.b16 %v317
    %v2176 = vunpack.c.l.b16 %v318
    %v2177 = vunpack.c.h.b16 %v318
    %v2178 = vunpack.c.l.b16 %v319
    %v2179 = vunpack.c.h.b16 %v319
    %v2180 = vunpack.c.l.b16 %v320
    %v2181 = vunpack.c.h.b16 %v320
    %v2182 = vunpack.c.l.b16 %v321
    %v2183 = vunpack.c.h.b16 %v321
    %v2184 = vunpack.c.l.b16 %v322
    %v2185 = vunpack.c.h.b16 %v322
    %v2186 = vunpack.c.l.b16 %v323
    %v2187 = vunpack.c.h.b16 %v323
    %v2188 = vunpack.c.l.b16 %v324
    %v2189 = vunpack.c.h.b16 %v324
    %v2190 = vunpack.c.l.b16 %v325
    %v2191 = vunpack.c.h.b16 %v325
    %v2192 = vunpack.c.l.b16 %v326
    %v2193 = vunpack.c.h.b16 %v326
    %v2194 = vunpack.c.l.b16 %v327
    %v2195 = vunpack.c.h.b16 %v327
    %v2196 = vunpack.c.l.b16 %v328
    %v2197 = vunpack.c.h.b16 %v328
    %v2198 = vunpack.c.l.b16 %v329
    %v2199 = vunpack.c.h.b16 %v329
    %v2200 = vunpack.c.l.b16 %v330
    %v2201 = vunpack.c.h.b16 %v330
    %v2202 = vunpack.c.l.b16 %v331
    %v2203 = vunpack.c.h.b16 %v331
    %v2204 = vunpack.c.l.b16 %v332
    %v2205 = vunpack.c.h.b16 %v332
    %v2206 = vunpack.c.l.b16 %v333
    %v2207 = vunpack.c.h.b16 %v333
    %v2208 = vunpack.c.l.b16 %v334
    %v2209 = vunpack.c.h.b16 %v334
    %v2210 = vunpack.c.l.b16 %v335
    %v2211 = vunpack.c.h.b16 %v335
    %v2212 = vunpack.c.l.b16 %v336
    %v2213 = vunpack.c.h.b16 %v336
    %v2214 = vunpack.c.l.b16 %v337
    %v2215 = vunpack.c.h.b16 %v337
    %v2216 = vunpack.c.l.b16 %v338
    %v2217 = vunpack.c.h.b16 %v338
    %v2218 = vunpack.c.l.b16 %v339
    %v2219 = vunpack.c.h.b16 %v339
    %v2220 = vunpack.c.l.b16 %v340
    %v2221 = vunpack.c.h.b16 %v340
    %v2222 = vunpack.c.l.b16 %v341
    %v2223 = vunpack.c.h.b16 %v341
    %v2224 = vunpack.c.l.b16 %v342
    %v2225 = vunpack.c.h.b16 %v342
    %v2226 = vunpack.c.l.b16 %v343
    %v2227 = vunpack.c.h.b16 %v343
    %v2228 = vunpack.c.l.b16 %v344
    %v2229 = vunpack.c.h.b16 %v344
    %v2230 = vunpack.c.l.b16 %v345
    %v2231 = vunpack.c.h.b16 %v345
    %v2232 = vunpack.c.l.b16 %v346
    %v2233 = vunpack.c.h.b16 %v346
    %v2234 = vunpack.c.l.b16 %v347
    %v2235 = vunpack.c.h.b16 %v347
    %v2236 = vunpack.c.l.b16 %v348
    %v2237 = vunpack.c.h.b16 %v348
    %v2238 = vunpack.c.l.b16 %v349
    %v2239 = vunpack.c.h.b16 %v349
    %v2240 = vunpack.c.l.b16 %v350
    %v2241 = vunpack.c.h.b16 %v350
    %v2242 = vunpack.c.l.b16 %v351
    %v2243 = vunpack.c.h.b16 %v351
    %v2244 = vunpack.c.l.b16 %v352
    %v2245 = vunpack.c.h.b16 %v352
    %v2246 = vunpack.c.l.b16 %v353
    %v2247 = vunpack.c.h.b16 %v353
    %v2248 = vunpack.c.l.b16 %v354
    %v2249 = vunpack.c.h.b16 %v354
    %v2250 = vunpack.c.l.b16 %v355
    %v2251 = vunpack.c.h.b16 %v355
    %v2252 = vunpack.c.l.b16 %v356
    %v2253 = vunpack.c.h.b16 %v356
    %v2254 = vunpack.c.l.b16 %v357
    %v2255 = vunpack.c.h.b16 %v357
    %v2256 = vunpack.c.l.b16 %v358
    %v2257 = vunpack.c.h.b16 %v358
    %v2258 = vunpack.c.l.b16 %v359
    %v2259 = vunpack.c.h.b16 %v359
    %v2260 = vunpack.c.l.b16 %v360
    %v2261 = vunpack.c.h.b16 %v360
    %v2262 = vunpack.c.l.b16 %v361
    %v2263 = vunpack.c.h.b16 %v361
    %v2264 = vunpack.c.l.b16 %v362
    %v2265 = vunpack.c.h.b16 %v362
    %v2266 = vunpack.c.l.b16 %v363
    %v2267 = vunpack.c.h.b16 %v363
    %v2268 = vunpack.c.l.b16 %v364
    %v2269 = vunpack.c.h.b16 %v364
    %v2270 = vunpack.c.l.b16 %v365
    %v2271 = vunpack.c.h.b16 %v365
    %v2272 = vunpack.c.l.b16 %v366
    %v2273 = vunpack.c.h.b16 %v366
    %v2274 = vunpack.c.l.b16 %v367
    %v2275 = vunpack.c.h.b16 %v367
    %v2276 = vunpack.c.l.b16 %v368
    %v2277 = vunpack.c.h.b16 %v368
    %v2278 = vunpack.c.l.b16 %v369
    %v2279 = vunpack.c.h.b16 %v369
    %v2280 = vunpack.c.l.b16 %v370
    %v2281 = vunpack.c.h.b16 %v370
    %v2282 = vunpack.c.l.b16 %v371
    %v2283 = vunpack.c.h.b16 %v371
    %v2284 = vunpack.c.l.b16 %v372
    %v2285 = vunpack.c.h.b16 %v372
    %v2286 = vunpack.c.l.b16 %v373
    %v2287 = vunpack.c.h.b16 %v373
    %v2288 = vunpack.c.l.b16 %v374
    %v2289 = vunpack.c.h.b16 %v374
    %v2290 = vunpack.c.l.b16 %v375
    %v2291 = vunpack.c.h.b16 %v375
    %v2292 = vunpack.c.l.b16 %v376
    %v2293 = vunpack.c.h.b16 %v376
    %v2294 = vunpack.c.l.b16 %v377
    %v2295 = vunpack.c.h.b16 %v377
    %v2296 = vunpack.c.l.b16 %v378
    %v2297 = vunpack.c.h.b16 %v378
    %v2298 = vunpack.c.l.b16 %v379
    %v2299 = vunpack.c.h.b16 %v379
    %v2300 = vunpack.c.l.b16 %v380
    %v2301 = vunpack.c.h.b16 %v380
    %v2302 = vunpack.c.l.b16 %v381
    %v2303 = vunpack.c.h.b16 %v381
    %v2304 = vunpack.c.l.b16 %v382
    %v2305 = vunpack.c.h.b16 %v382
    %v2306 = vunpack.c.l.b16 %v383
    %v2307 = vunpack.c.h.b16 %v383
    %v2308 = vunpack.c.l.b16 %v384
    %v2309 = vunpack.c.h.b16 %v384
    %v2310 = vunpack.c.l.b16 %v385
    %v2311 = vunpack.c.h.b16 %v385
    %v2312 = vunpack.c.l.b16 %v386
    %v2313 = vunpack.c.h.b16 %v386
    %v2314 = vunpack.c.l.b16 %v387
    %v2315 = vunpack.c.h.b16 %v387
    %v2316 = vunpack.c.l.b16 %v388
    %v2317 = vunpack.c.h.b16 %v388
    %v2318 = vunpack.c.l.b16 %v389
    %v2319 = vunpack.c.h.b16 %v389
    %v2320 = vunpack.c.l.b16 %v390
    %v2321 = vunpack.c.h.b16 %v390
    %v2322 = vunpack.c.l.b16 %v391
    %v2323 = vunpack.c.h.b16 %v391
    %v2324 = vunpack.c.l.b16 %v392
    %v2325 = vunpack.c.h.b16 %v392
    %v2326 = vunpack.c.l.b16 %v393
    %v2327 = vunpack.c.h.b16 %v393
    %v2328 = vunpack.c.l.b16 %v394
    %v2329 = vunpack.c.h.b16 %v394
    %v2330 = vunpack.c.l.b16 %v395
    %v2331 = vunpack.c.h.b16 %v395
    %v2332 = vunpack.c.l.b16 %v396
    %v2333 = vunpack.c.h.b16 %v396
    %v2334 = vunpack.c.l.b16 %v397
    %v2335 = vunpack.c.h.b16 %v397
    %v2336 = vunpack.c.l.b16 %v398
    %v2337 = vunpack.c.h.b16 %v398
    %v2338 = vunpack.c.l.b16 %v399
    %v2339 = vunpack.c.h.b16 %v399
    %v2340 = vunpack.c.l.b16 %v400
    %v2341 = vunpack.c.h.b16 %v400
    %v2342 = vunpack.c.l.b16 %v401
    %v2343 = vunpack.c.h.b16 %v401
    %v2344 = vunpack.c.l.b16 %v402
    %v2345 = vunpack.c.h.b16 %v402
    %v2346 = vunpack.c.l.b16 %v403
    %v2347 = vunpack.c.h.b16 %v403
    %v2348 = vunpack.c.l.b16 %v404
    %v2349 = vunpack.c.h.b16 %v404
    %v2350 = vunpack.c.l.b16 %v405
    %v2351 = vunpack.c.h.b16 %v405
    %v2352 = vunpack.c.l.b16 %v406
    %v2353 = vunpack.c.h.b16 %v406
    %v2354 = vunpack.c.l.b16 %v407
    %v2355 = vunpack.c.h.b16 %v407
    %v2356 = vunpack.c.l.b16 %v408
    %v2357 = vunpack.c.h.b16 %v408
    %v2358 = vunpack.c.l.b16 %v409
    %v2359 = vunpack.c.h.b16 %v409
    %v2360 = vunpack.c.l.b16 %v410
    %v2361 = vunpack.c.h.b16 %v410
    %v2362 = vunpack.c.l.b16 %v411
    %v2363 = vunpack.c.h.b16 %v411
    %v2364 = vunpack.c.l.b16 %v412
    %v2365 = vunpack.c.h.b16 %v412
    %v2366 = vunpack.c.l.b16 %v413
    %v2367 = vunpack.c.h.b16 %v413
    %v2368 = vunpack.c.l.b16 %v414
    %v2369 = vunpack.c.h.b16 %v414
    %v2370 = vunpack.c.l.b16 %v415
    %v2371 = vunpack.c.h.b16 %v415
    %v2372 = vunpack.c.l.b16 %v416
    %v2373 = vunpack.c.h.b16 %v416
    %v2374 = vunpack.c.l.b16 %v417
    %v2375 = vunpack.c.h.b16 %v417
    %v2376 = vunpack.c.l.b16 %v418
    %v2377 = vunpack.c.h.b16 %v418
    %v2378 = vunpack.c.l.b16 %v419
    %v2379 = vunpack.c.h.b16 %v419
    %v2380 = vunpack.c.l.b16 %v420
    %v2381 = vunpack.c.h.b16 %v420
    %v2382 = vunpack.c.l.b16 %v421
    %v2383 = vunpack.c.h.b16 %v421
    %v2384 = vunpack.c.l.b16 %v422
    %v2385 = vunpack.c.h.b16 %v422
    %v2386 = vunpack.c.l.b16 %v423
    %v2387 = vunpack.c.h.b16 %v423
    %v2388 = vunpack.c.l.b16 %v424
    %v2389 = vunpack.c.h.b16 %v424
    %v2390 = vunpack.c.l.b16 %v425
    %v2391 = vunpack.c.h.b16 %v425
    %v2392 = vunpack.c.l.b16 %v426
    %v2393 = vunpack.c.h.b16 %v426
    %v2394 = vunpack.c.l.b16 %v427
    %v2395 = vunpack.c.h.b16 %v427
    %v2396 = vunpack.c.l.b16 %v428
    %v2397 = vunpack.c.h.b16 %v428
    %v2398 = vunpack.c.l.b16 %v429
    %v2399 = vunpack.c.h.b16 %v429
    %v2400 = vunpack.c.l.b16 %v430
    %v2401 = vunpack.c.h.b16 %v430
    %v2402 = vunpack.c.l.b16 %v431
    %v2403 = vunpack.c.h.b16 %v431
    %v2404 = vunpack.c.l.b16 %v432
    %v2405 = vunpack.c.h.b16 %v432
    %v2406 = vunpack.c.l.b16 %v433
    %v2407 = vunpack.c.h.b16 %v433
    %v2408 = vunpack.c.l.b16 %v434
    %v2409 = vunpack.c.h.b16 %v434
    %v2410 = vunpack.c.l.b16 %v435
    %v2411 = vunpack.c.h.b16 %v435
    %v2412 = vunpack.c.l.b16 %v436
    %v2413 = vunpack.c.h.b16 %v436
    %v2414 = vunpack.c.l.b16 %v437
    %v2415 = vunpack.c.h.b16 %v437
    %v2416 = vunpack.c.l.b16 %v438
    %v2417 = vunpack.c.h.b16 %v438
    %v2418 = vunpack.c.l.b16 %v439
    %v2419 = vunpack.c.h.b16 %v439
    %v2420 = vunpack.c.l.b16 %v440
    %v2421 = vunpack.c.h.b16 %v440
    %v2422 = vunpack.c.l.b16 %v441
    %v2423 = vunpack.c.h.b16 %v441
    %v2424 = vunpack.c.l.b16 %v442
    %v2425 = vunpack.c.h.b16 %v442
    %v2426 = vunpack.c.l.b16 %v443
    %v2427 = vunpack.c.h.b16 %v443
    %v2428 = vunpack.c.l.b16 %v444
    %v2429 = vunpack.c.h.b16 %v444
    %v2430 = vunpack.c.l.b16 %v445
    %v2431 = vunpack.c.h.b16 %v445
    %v2432 = vunpack.c.l.b16 %v446
    %v2433 = vunpack.c.h.b16 %v446
    %v2434 = vunpack.c.l.b16 %v447
    %v2435 = vunpack.c.h.b16 %v447
    %v2436 = vunpack.c.l.b16 %v448
    %v2437 = vunpack.c.h.b16 %v448
    %v2438 = vunpack.c.l.b16 %v449
    %v2439 = vunpack.c.h.b16 %v449
    %v2440 = vunpack.c.l.b16 %v450
    %v2441 = vunpack.c.h.b16 %v450
    %v2442 = vunpack.c.l.b16 %v451
    %v2443 = vunpack.c.h.b16 %v451
    %v2444 = vunpack.c.l.b16 %v452
    %v2445 = vunpack.c.h.b16 %v452
    %v2446 = vunpack.c.l.b16 %v453
    %v2447 = vunpack.c.h.b16 %v453
    %v2448 = vunpack.c.l.b16 %v454
    %v2449 = vunpack.c.h.b16 %v454
    %v2450 = vunpack.c.l.b16 %v455
    %v2451 = vunpack.c.h.b16 %v455
    %v2452 = vunpack.c.l.b16 %v456
    %v2453 = vunpack.c.h.b16 %v456
    %v2454 = vunpack.c.l.b16 %v457
    %v2455 = vunpack.c.h.b16 %v457
    %v2456 = vunpack.c.l.b16 %v458
    %v2457 = vunpack.c.h.b16 %v458
    %v2458 = vunpack.c.l.b16 %v459
    %v2459 = vunpack.c.h.b16 %v459
    %v2460 = vunpack.c.l.b16 %v460
    %v2461 = vunpack.c.h.b16 %v460
    %v2462 = vunpack.c.l.b16 %v461
    %v2463 = vunpack.c.h.b16 %v461
    %v2464 = vunpack.c.l.b16 %v462
    %v2465 = vunpack.c.h.b16 %v462
    %v2466 = vunpack.c.l.b16 %v463
    %v2467 = vunpack.c.h.b16 %v463
    %v2468 = vunpack.c.l.b16 %v464
    %v2469 = vunpack.c.h.b16 %v464
    %v2470 = vunpack.c.l.b16 %v465
    %v2471 = vunpack.c.h.b16 %v465
    %v2472 = vunpack.c.l.b16 %v466
    %v2473 = vunpack.c.h.b16 %v466
    %v2474 = vunpack.c.l.b16 %v467
    %v2475 = vunpack.c.h.b16 %v467
    %v2476 = vunpack.c.l.b16 %v468
    %v2477 = vunpack.c.h.b16 %v468
    %v2478 = vunpack.c.l.b16 %v469
    %v2479 = vunpack.c.h.b16 %v469
    %v2480 = vunpack.c.l.b16 %v470
    %v2481 = vunpack.c.h.b16 %v470
    %v2482 = vunpack.c.l.b16 %v471
    %v2483 = vunpack.c.h.b16 %v471
    %v2484 = vunpack.c.l.b16 %v472
    %v2485 = vunpack.c.h.b16 %v472
    %v2486 = vunpack.c.l.b16 %v473
    %v2487 = vunpack.c.h.b16 %v473
    %v2488 = vunpack.c.l.b16 %v474
    %v2489 = vunpack.c.h.b16 %v474
    %v2490 = vunpack.c.l.b16 %v475
    %v2491 = vunpack.c.h.b16 %v475
    %v2492 = vunpack.c.l.b16 %v476
    %v2493 = vunpack.c.h.b16 %v476
    %v2494 = vunpack.c.l.b16 %v477
    %v2495 = vunpack.c.h.b16 %v477
    %v2496 = vunpack.c.l.b16 %v478
    %v2497 = vunpack.c.h.b16 %v478
    %v2498 = vunpack.c.l.b16 %v479
    %v2499 = vunpack.c.h.b16 %v479
    %v2500 = vunpack.c.l.b16 %v480
    %v2501 = vunpack.c.h.b16 %v480
    %v2502 = vunpack.c.l.b16 %v481
    %v2503 = vunpack.c.h.b16 %v481
    %v2504 = vunpack.c.l.b16 %v482
    %v2505 = vunpack.c.h.b16 %v482
    %v2506 = vunpack.c.l.b16 %v483
    %v2507 = vunpack.c.h.b16 %v483
    %v2508 = vunpack.c.l.b16 %v484
    %v2509 = vunpack.c.h.b16 %v484
    %v2510 = vunpack.c.l.b16 %v485
    %v2511 = vunpack.c.h.b16 %v485
    %v2512 = vunpack.c.l.b16 %v486
    %v2513 = vunpack.c.h.b16 %v486
    %v2514 = vunpack.c.l.b16 %v487
    %v2515 = vunpack.c.h.b16 %v487
    %v2516 = vunpack.c.l.b16 %v488
    %v2517 = vunpack.c.h.b16 %v488
    %v2518 = vunpack.c.l.b16 %v489
    %v2519 = vunpack.c.h.b16 %v489
    %v2520 = vunpack.c.l.b16 %v490
    %v2521 = vunpack.c.h.b16 %v490
    %v2522 = vunpack.c.l.b16 %v491
    %v2523 = vunpack.c.h.b16 %v491
    %v2524 = vunpack.c.l.b16 %v492
    %v2525 = vunpack.c.h.b16 %v492
    %v2526 = vunpack.c.l.b16 %v493
    %v2527 = vunpack.c.h.b16 %v493
    %v2528 = vunpack.c.l.b16 %v494
    %v2529 = vunpack.c.h.b16 %v494
    %v2530 = vunpack.c.l.b16 %v495
    %v2531 = vunpack.c.h.b16 %v495
    %v2532 = vunpack.c.l.b16 %v496
    %v2533 = vunpack.c.h.b16 %v496
    %v2534 = vunpack.c.l.b16 %v497
    %v2535 = vunpack.c.h.b16 %v497
    %v2536 = vunpack.c.l.b16 %v498
    %v2537 = vunpack.c.h.b16 %v498
    %v2538 = vunpack.c.l.b16 %v499
    %v2539 = vunpack.c.h.b16 %v499
    %v2540 = vunpack.c.l.b16 %v500
    %v2541 = vunpack.c.h.b16 %v500
    %v2542 = vunpack.c.l.b16 %v501
    %v2543 = vunpack.c.h.b16 %v501
    %v2544 = vunpack.c.l.b16 %v502
    %v2545 = vunpack.c.h.b16 %v502
    %v2546 = vunpack.c.l.b16 %v503
    %v2547 = vunpack.c.h.b16 %v503
    %v2548 = vunpack.c.l.b16 %v504
    %v2549 = vunpack.c.h.b16 %v504
    %v2550 = vunpack.c.l.b16 %v505
    %v2551 = vunpack.c.h.b16 %v505
    %v2552 = vunpack.c.l.b16 %v506
    %v2553 = vunpack.c.h.b16 %v506
    %v2554 = vunpack.c.l.b16 %v507
    %v2555 = vunpack.c.h.b16 %v507
    %v2556 = vunpack.c.l.b16 %v508
    %v2557 = vunpack.c.h.b16 %v508
    %v2558 = vunpack.c.l.b16 %v509
    %v2559 = vunpack.c.h.b16 %v509
    %v2560 = vunpack.c.l.b16 %v510
    %v2561 = vunpack.c.h.b16 %v510
    %v2562 = vunpack.c.l.b16 %v511
    %v2563 = vunpack.c.h.b16 %v511
    %v2564 = vunpack.c.l.b16 %v512
    %v2565 = vunpack.c.h.b16 %v512
    %v2566 = vunpack.c.l.b16 %v513
    %v2567 = vunpack.c.h.b16 %v513
    %v2568 = vunpack.c.l.b16 %v514
    %v2569 = vunpack.c.h.b16 %v514
    %v2570 = vunpack.c.l.b16 %v515
    %v2571 = vunpack.c.h.b16 %v515
    %v2572 = vunpack.c.l.b16 %v516
    %v2573 = vunpack.c.h.b16 %v516
    %v2574 = vunpack.c.l.b16 %v517
    %v2575 = vunpack.c.h.b16 %v517
    %v2576 = vunpack.c.l.b16 %v518
    %v2577 = vunpack.c.h.b16 %v518
    %v2578 = vunpack.c.l.b16 %v519
    %v2579 = vunpack.c.h.b16 %v519
    %v2580 = vunpack.c.l.b16 %v520
    %v2581 = vunpack.c.h.b16 %v520
    %v2582 = vunpack.c.l.b16 %v521
    %v2583 = vunpack.c.h.b16 %v521
    %v2584 = vunpack.c.l.b16 %v522
    %v2585 = vunpack.c.h.b16 %v522
    %v2586 = vunpack.c.l.b16 %v523
    %v2587 = vunpack.c.h.b16 %v523
    %v2588 = vunpack.c.l.b16 %v524
    %v2589 = vunpack.c.h.b16 %v524
    %v2590 = vunpack.c.l.b16 %v525
    %v2591 = vunpack.c.h.b16 %v525
    %v2592 = vunpack.c.l.b16 %v526
    %v2593 = vunpack.c.h.b16 %v526
    %v2594 = vunpack.c.l.b16 %v527
    %v2595 = vunpack.c.h.b16 %v527
    %v2596 = vunpack.c.l.b16 %v528
    %v2597 = vunpack.c.h.b16 %v528
    %v2598 = vunpack.c.l.b16 %v529
    %v2599 = vunpack.c.h.b16 %v529
    %v2600 = vunpack.c.l.b16 %v530
    %v2601 = vunpack.c.h.b16 %v530
    %v2602 = vunpack.c.l.b16 %v531
    %v2603 = vunpack.c.h.b16 %v531
    %v2604 = vunpack.c.l.b16 %v532
    %v2605 = vunpack.c.h.b16 %v532
    %v2606 = vunpack.c.l.b16 %v533
    %v2607 = vunpack.c.h.b16 %v533
    %v2608 = vunpack.c.l.b16 %v534
    %v2609 = vunpack.c.h.b16 %v534
    %v2610 = vunpack.c.l.b16 %v535
    %v2611 = vunpack.c.h.b16 %v535
    %v2612 = vunpack.c.l.b16 %v536
    %v2613 = vunpack.c.h.b16 %v536
    %v2614 = vunpack.c.l.b16 %v537
    %v2615 = vunpack.c.h.b16 %v537
    %v2616 = vunpack.c.l.b16 %v538
    %v2617 = vunpack.c.h.b16 %v538
    %v2618 = vunpack.c.l.b16 %v539
    %v2619 = vunpack.c.h.b16 %v539
    %v2620 = vunpack.c.l.b16 %v540
    %v2621 = vunpack.c.h.b16 %v540
    %v2622 = vunpack.c.l.b16 %v541
    %v2623 = vunpack.c.h.b16 %v541
    %v2624 = vunpack.c.l.b16 %v542
    %v2625 = vunpack.c.h.b16 %v542
    %v2626 = vunpack.c.l.b16 %v543
    %v2627 = vunpack.c.h.b16 %v543
    %v2628 = vunpack.c.l.b16 %v544
    %v2629 = vunpack.c.h.b16 %v544
    %v2630 = vunpack.c.l.b16 %v545
    %v2631 = vunpack.c.h.b16 %v545
    %v2632 = vunpack.c.l.b16 %v546
    %v2633 = vunpack.c.h.b16 %v546
    %v2634 = vunpack.c.l.b16 %v547
    %v2635 = vunpack.c.h.b16 %v547
    %v2636 = vunpack.c.l.b16 %v548
    %v2637 = vunpack.c.h.b16 %v548
    %v2638 = vunpack.c.l.b16 %v549
    %v2639 = vunpack.c.h.b16 %v549
    %v2640 = vunpack.c.l.b16 %v550
    %v2641 = vunpack.c.h.b16 %v550
    %v2642 = vunpack.c.l.b16 %v551
    %v2643 = vunpack.c.h.b16 %v551
    %v2644 = vunpack.c.l.b16 %v552
    %v2645 = vunpack.c.h.b16 %v552
    %v2646 = vunpack.c.l.b16 %v553
    %v2647 = vunpack.c.h.b16 %v553
    %v2648 = vunpack.c.l.b16 %v554
    %v2649 = vunpack.c.h.b16 %v554
    %v2650 = vunpack.c.l.b16 %v555
    %v2651 = vunpack.c.h.b16 %v555
    %v2652 = vunpack.c.l.b16 %v556
    %v2653 = vunpack.c.h.b16 %v556
    %v2654 = vunpack.c.l.b16 %v557
    %v2655 = vunpack.c.h.b16 %v557
    %v2656 = vunpack.c.l.b16 %v558
    %v2657 = vunpack.c.h.b16 %v558
    %v2658 = vunpack.c.l.b16 %v559
    %v2659 = vunpack.c.h.b16 %v559
    %v2660 = vunpack.c.l.b16 %v560
    %v2661 = vunpack.c.h.b16 %v560
    %v2662 = vunpack.c.l.b16 %v561
    %v2663 = vunpack.c.h.b16 %v561
    %v2664 = vunpack.c.l.b16 %v562
    %v2665 = vunpack.c.h.b16 %v562
    %v2666 = vunpack.c.l.b16 %v563
    %v2667 = vunpack.c.h.b16 %v563
    %v2668 = vunpack.c.l.b16 %v564
    %v2669 = vunpack.c.h.b16 %v564
    %v2670 = vunpack.c.l.b16 %v565
    %v2671 = vunpack.c.h.b16 %v565
    %v2672 = vunpack.c.l.b16 %v566
    %v2673 = vunpack.c.h.b16 %v566
    %v2674 = vunpack.c.l.b16 %v567
    %v2675 = vunpack.c.h.b16 %v567
    %v2676 = vunpack.c.l.b16 %v568
    %v2677 = vunpack.c.h.b16 %v568
    %v2678 = vunpack.c.l.b16 %v569
    %v2679 = vunpack.c.h.b16 %v569
    %v2680 = vunpack.c.l.b16 %v570
    %v2681 = vunpack.c.h.b16 %v570
    %v2682 = vunpack.c.l.b16 %v571
    %v2683 = vunpack.c.h.b16 %v571
    %v2684 = vunpack.c.l.b16 %v572
    %v2685 = vunpack.c.h.b16 %v572
    %v2686 = vunpack.c.l.b16 %v573
    %v2687 = vunpack.c.h.b16 %v573
    %v2688 = vunpack.c.l.b16 %v574
    %v2689 = vunpack.c.h.b16 %v574
    %v2690 = vunpack.c.l.b16 %v575
    %v2691 = vunpack.c.h.b16 %v575
    %v2692 = vunpack.c.l.b16 %v576
    %v2693 = vunpack.c.h.b16 %v576
    %v2694 = vunpack.c.l.b16 %v577
    %v2695 = vunpack.c.h.b16 %v577
    %v2696 = vunpack.c.l.b16 %v578
    %v2697 = vunpack.c.h.b16 %v578
    %v2698 = vunpack.c.l.b16 %v579
    %v2699 = vunpack.c.h.b16 %v579
    %v2700 = vunpack.c.l.b16 %v580
    %v2701 = vunpack.c.h.b16 %v580
    %v2702 = vunpack.c.l.b16 %v581
    %v2703 = vunpack.c.h.b16 %v581
    %v2704 = vunpack.c.l.b16 %v582
    %v2705 = vunpack.c.h.b16 %v582
    %v2706 = vunpack.c.l.b16 %v583
    %v2707 = vunpack.c.h.b16 %v583
    %v2708 = vunpack.c.l.b16 %v584
    %v2709 = vunpack.c.h.b16 %v584
    %v2710 = vunpack.c.l.b16 %v585
    %v2711 = vunpack.c.h.b16 %v585
    %v2712 = vunpack.c.l.b16 %v586
    %v2713 = vunpack.c.h.b16 %v586
    %v2714 = vunpack.c.l.b16 %v587
    %v2715 = vunpack.c.h.b16 %v587
    %v2716 = vunpack.c.l.b16 %v588
    %v2717 = vunpack.c.h.b16 %v588
    %v2718 = vunpack.c.l.b16 %v589
    %v2719 = vunpack.c.h.b16 %v589
    %v2720 = vunpack.c.l.b16 %v590
    %v2721 = vunpack.c.h.b16 %v590
    %v2722 = vunpack.c.l.b16 %v591
    %v2723 = vunpack.c.h.b16 %v591
    %v2724 = vunpack.c.l.b16 %v592
    %v2725 = vunpack.c.h.b16 %v592
    %v2726 = vunpack.c.l.b16 %v593
    %v2727 = vunpack.c.h.b16 %v593
    %v2728 = vunpack.c.l.b16 %v594
    %v2729 = vunpack.c.h.b16 %v594
    %v2730 = vunpack.c.l.b16 %v595
    %v2731 = vunpack.c.h.b16 %v595
    %v2732 = vunpack.c.l.b16 %v596
    %v2733 = vunpack.c.h.b16 %v596
    %v2734 = vunpack.c.l.b16 %v597
    %v2735 = vunpack.c.h.b16 %v597
    %v2736 = vunpack.c.l.b16 %v598
    %v2737 = vunpack.c.h.b16 %v598
    %v2738 = vunpack.c.l.b16 %v599
    %v2739 = vunpack.c.h.b16 %v599
    %v2740 = vunpack.c.l.b16 %v600
    %v2741 = vunpack.c.h.b16 %v600
    %v2742 = vunpack.c.l.b16 %v601
    %v2743 = vunpack.c.h.b16 %v601
    %v2744 = vunpack.c.l.b16 %v602
    %v2745 = vunpack.c.h.b16 %v602
    %v2746 = vunpack.c.l.b16 %v603
    %v2747 = vunpack.c.h.b16 %v603
    %v2748 = vunpack.c.l.b16 %v604
    %v2749 = vunpack.c.h.b16 %v604
    %v2750 = vunpack.c.l.b16 %v605
    %v2751 = vunpack.c.h.b16 %v605
    %v2752 = vunpack.c.l.b16 %v606
    %v2753 = vunpack.c.h.b16 %v606
    %v2754 = vunpack.c.l.b16 %v607
    %v2755 = vunpack.c.h.b16 %v607
    %v2756 = vunpack.c.l.b16 %v608
    %v2757 = vunpack.c.h.b16 %v608
    %v2758 = vunpack.c.l.b16 %v609
    %v2759 = vunpack.c.h.b16 %v609
    %v2760 = vunpack.c.l.b16 %v610
    %v2761 = vunpack.c.h.b16 %v610
    %v2762 = vunpack.c.l.b16 %v611
    %v2763 = vunpack.c.h.b16 %v611
    %v2764 = vunpack.c.l.b16 %v612
    %v2765 = vunpack.c.h.b16 %v612
    %v2766 = vunpack.c.l.b16 %v613
    %v2767 = vunpack.c.h.b16 %v613
    %v2768 = vunpack.c.l.b16 %v614
    %v2769 = vunpack.c.h.b16 %v614
    %v2770 = vunpack.c.l.b16 %v615
    %v2771 = vunpack.c.h.b16 %v615
    %v2772 = vunpack.c.l.b16 %v616
    %v2773 = vunpack.c.h.b16 %v616
    %v2774 = vunpack.c.l.b16 %v617
    %v2775 = vunpack.c.h.b16 %v617
    %v2776 = vunpack.c.l.b16 %v618
    %v2777 = vunpack.c.h.b16 %v618
    %v2778 = vunpack.c.l.b16 %v619
    %v2779 = vunpack.c.h.b16 %v619
    %v2780 = vunpack.c.l.b16 %v620
    %v2781 = vunpack.c.h.b16 %v620
    %v2782 = vunpack.c.l.b16 %v621
    %v2783 = vunpack.c.h.b16 %v621
    %v2784 = vunpack.c.l.b16 %v622
    %v2785 = vunpack.c.h.b16 %v622
    %v2786 = vunpack.c.l.b16 %v623
    %v2787 = vunpack.c.h.b16 %v623
    %v2788 = vunpack.c.l.b16 %v624
    %v2789 = vunpack.c.h.b16 %v624
    %v2790 = vunpack.c.l.b16 %v625
    %v2791 = vunpack.c.h.b16 %v625
    %v2792 = vunpack.c.l.b16 %v626
    %v2793 = vunpack.c.h.b16 %v626
    %v2794 = vunpack.c.l.b16 %v627
    %v2795 = vunpack.c.h.b16 %v627
    %v2796 = vunpack.c.l.b16 %v628
    %v2797 = vunpack.c.h.b16 %v628
    %v2798 = vunpack.c.l.b16 %v629
    %v2799 = vunpack.c.h.b16 %v629
    %v2800 = vunpack.c.l.b16 %v630
    %v2801 = vunpack.c.h.b16 %v630
    %v2802 = vunpack.c.l.b16 %v631
    %v2803 = vunpack.c.h.b16 %v631
    %v2804 = vunpack.c.l.b16 %v632
    %v2805 = vunpack.c.h.b16 %v632
    %v2806 = vunpack.c.l.b16 %v633
    %v2807 = vunpack.c.h.b16 %v633
    %v2808 = vunpack.c.l.b16 %v634
    %v2809 = vunpack.c.h.b16 %v634
    %v2810 = vunpack.c.l.b16 %v635
    %v2811 = vunpack.c.h.b16 %v635
    %v2812 = vunpack.c.l.b16 %v636
    %v2813 = vunpack.c.h.b16 %v636
    %v2814 = vunpack.c.l.b16 %v637
    %v2815 = vunpack.c.h.b16 %v637
    %v2816 = vunpack.c.l.b16 %v638
    %v2817 = vunpack.c.h.b16 %v638
    %v2818 = vunpack.c.l.b16 %v639
    %v2819 = vunpack.c.h.b16 %v639
    %v2820 = vunpack.c.l.b16 %v640
    %v2821 = vunpack.c.h.b16 %v640
    %v2822 = vunpack.c.l.b16 %v641
    %v2823 = vunpack.c.h.b16 %v641
    %v2824 = vunpack.c.l.b16 %v642
    %v2825 = vunpack.c.h.b16 %v642
    %v2826 = vunpack.c.l.b16 %v643
    %v2827 = vunpack.c.h.b16 %v643
    %v2828 = vunpack.c.l.b16 %v644
    %v2829 = vunpack.c.h.b16 %v644
    %v2830 = vunpack.c.l.b16 %v645
    %v2831 = vunpack.c.h.b16 %v645
    %v2832 = vunpack.c.l.b16 %v646
    %v2833 = vunpack.c.h.b16 %v646
    %v2834 = vunpack.c.l.b16 %v647
    %v2835 = vunpack.c.h.b16 %v647
    %v2836 = vunpack.c.l.b16 %v648
    %v2837 = vunpack.c.h.b16 %v648
    %v2838 = vunpack.c.l.b16 %v649
    %v2839 = vunpack.c.h.b16 %v649
    %v2840 = vunpack.c.l.b16 %v650
    %v2841 = vunpack.c.h.b16 %v650
    %v2842 = vunpack.c.l.b16 %v651
    %v2843 = vunpack.c.h.b16 %v651
    %v2844 = vunpack.c.l.b16 %v652
    %v2845 = vunpack.c.h.b16 %v652
    %v2846 = vunpack.c.l.b16 %v653
    %v2847 = vunpack.c.h.b16 %v653
    %v2848 = vunpack.c.l.b16 %v654
    %v2849 = vunpack.c.h.b16 %v654
    %v2850 = vunpack.c.l.b16 %v655
    %v2851 = vunpack.c.h.b16 %v655
    %v2852 = vunpack.c.l.b16 %v656
    %v2853 = vunpack.c.h.b16 %v656
    %v2854 = vunpack.c.l.b16 %v657
    %v2855 = vunpack.c.h.b16 %v657
    %v2856 = vunpack.c.l.b16 %v658
    %v2857 = vunpack.c.h.b16 %v658
    %v2858 = vunpack.c.l.b16 %v659
    %v2859 = vunpack.c.h.b16 %v659
    %v2860 = vunpack.c.l.b16 %v660
    %v2861 = vunpack.c.h.b16 %v660
    %v2862 = vunpack.c.l.b16 %v661
    %v2863 = vunpack.c.h.b16 %v661
    %v2864 = vunpack.c.l.b16 %v662
    %v2865 = vunpack.c.h.b16 %v662
    %v2866 = vunpack.c.l.b16 %v663
    %v2867 = vunpack.c.h.b16 %v663
    %v2868 = vunpack.c.l.b16 %v664
    %v2869 = vunpack.c.h.b16 %v664
    %v2870 = vunpack.c.l.b16 %v665
    %v2871 = vunpack.c.h.b16 %v665
    %v2872 = vunpack.c.l.b16 %v666
    %v2873 = vunpack.c.h.b16 %v666
    %v2874 = vunpack.c.l.b16 %v667
    %v2875 = vunpack.c.h.b16 %v667
    %v2876 = vunpack.c.l.b16 %v668
    %v2877 = vunpack.c.h.b16 %v668
    %v2878 = vunpack.c.l.b16 %v669
    %v2879 = vunpack.c.h.b16 %v669
    %v2880 = vunpack.c.l.b16 %v670
    %v2881 = vunpack.c.h.b16 %v670
    %v2882 = vunpack.c.l.b16 %v671
    %v2883 = vunpack.c.h.b16 %v671
    %v2884 = vunpack.c.l.b16 %v672
    %v2885 = vunpack.c.h.b16 %v672
    %v2886 = vunpack.c.l.b16 %v673
    %v2887 = vunpack.c.h.b16 %v673
    %v2888 = vunpack.c.l.b16 %v674
    %v2889 = vunpack.c.h.b16 %v674
    %v2890 = vunpack.c.l.b16 %v675
    %v2891 = vunpack.c.h.b16 %v675
    %v2892 = vunpack.c.l.b16 %v676
    %v2893 = vunpack.c.h.b16 %v676
    %v2894 = vunpack.c.l.b16 %v677
    %v2895 = vunpack.c.h.b16 %v677
    %v2896 = vunpack.c.l.b16 %v678
    %v2897 = vunpack.c.h.b16 %v678
    %v2898 = vunpack.c.l.b16 %v679
    %v2899 = vunpack.c.h.b16 %v679
    %v2900 = vunpack.c.l.b16 %v680
    %v2901 = vunpack.c.h.b16 %v680
    %v2902 = vunpack.c.l.b16 %v681
    %v2903 = vunpack.c.h.b16 %v681
    %v2904 = vunpack.c.l.b16 %v682
    %v2905 = vunpack.c.h.b16 %v682
    %v2906 = vunpack.c.l.b16 %v683
    %v2907 = vunpack.c.h.b16 %v683
    %v2908 = vunpack.c.l.b16 %v684
    %v2909 = vunpack.c.h.b16 %v684
    %v2910 = vunpack.c.l.b16 %v685
    %v2911 = vunpack.c.h.b16 %v685
    %v2912 = vunpack.c.l.b16 %v686
    %v2913 = vunpack.c.h.b16 %v686
    %v2914 = vunpack.c.l.b16 %v687
    %v2915 = vunpack.c.h.b16 %v687
    %v2916 = vunpack.c.l.b16 %v688
    %v2917 = vunpack.c.h.b16 %v688
    %v2918 = vunpack.c.l.b16 %v689
    %v2919 = vunpack.c.h.b16 %v689
    %v2920 = vunpack.c.l.b16 %v690
    %v2921 = vunpack.c.h.b16 %v690
    %v2922 = vunpack.c.l.b16 %v691
    %v2923 = vunpack.c.h.b16 %v691
    %v2924 = vunpack.c.l.b16 %v692
    %v2925 = vunpack.c.h.b16 %v692
    %v2926 = vunpack.c.l.b16 %v693
    %v2927 = vunpack.c.h.b16 %v693
    %v2928 = vunpack.c.l.b16 %v694
    %v2929 = vunpack.c.h.b16 %v694
    %v2930 = vunpack.c.l.b16 %v695
    %v2931 = vunpack.c.h.b16 %v695
    %v2932 = vunpack.c.l.b16 %v696
    %v2933 = vunpack.c.h.b16 %v696
    %v2934 = vunpack.c.l.b16 %v697
    %v2935 = vunpack.c.h.b16 %v697
    %v2936 = vunpack.c.l.b16 %v698
    %v2937 = vunpack.c.h.b16 %v698
    %v2938 = vunpack.c.l.b16 %v699
    %v2939 = vunpack.c.h.b16 %v699
    %v2940 = vunpack.c.l.b16 %v700
    %v2941 = vunpack.c.h.b16 %v700
    %v2942 = vunpack.c.l.b16 %v701
    %v2943 = vunpack.c.h.b16 %v701
    %v2944 = vunpack.c.l.b16 %v702
    %v2945 = vunpack.c.h.b16 %v702
    %v2946 = vunpack.c.l.b16 %v703
    %v2947 = vunpack.c.h.b16 %v703
    %v2948 = vunpack.c.l.b16 %v704
    %v2949 = vunpack.c.h.b16 %v704
    %v2950 = vunpack.c.l.b16 %v705
    %v2951 = vunpack.c.h.b16 %v705
    %v2952 = vunpack.c.l.b16 %v706
    %v2953 = vunpack.c.h.b16 %v706
    %v2954 = vunpack.c.l.b16 %v707
    %v2955 = vunpack.c.h.b16 %v707
    %v2956 = vunpack.c.l.b16 %v708
    %v2957 = vunpack.c.h.b16 %v708
    %v2958 = vunpack.c.l.b16 %v709
    %v2959 = vunpack.c.h.b16 %v709
    %v2960 = vunpack.c.l.b16 %v710
    %v2961 = vunpack.c.h.b16 %v710
    %v2962 = vunpack.c.l.b16 %v711
    %v2963 = vunpack.c.h.b16 %v711
    %v2964 = vunpack.c.l.b16 %v712
    %v2965 = vunpack.c.h.b16 %v712
    %v2966 = vunpack.c.l.b16 %v713
    %v2967 = vunpack.c.h.b16 %v713
    %v2968 = vunpack.c.l.b16 %v714
    %v2969 = vunpack.c.h.b16 %v714
    %v2970 = vunpack.c.l.b16 %v715
    %v2971 = vunpack.c.h.b16 %v715
    %v2972 = vunpack.c.l.b16 %v716
    %v2973 = vunpack.c.h.b16 %v716
    %v2974 = vunpack.c.l.b16 %v717
    %v2975 = vunpack.c.h.b16 %v717
    %v2976 = vunpack.c.l.b16 %v718
    %v2977 = vunpack.c.h.b16 %v718
    %v2978 = vunpack.c.l.b16 %v719
    %v2979 = vunpack.c.h.b16 %v719
    %v2980 = vunpack.c.l.b16 %v720
    %v2981 = vunpack.c.h.b16 %v720
    %v2982 = vunpack.c.l.b16 %v721
    %v2983 = vunpack.c.h.b16 %v721
    %v2984 = vunpack.c.l.b16 %v722
    %v2985 = vunpack.c.h.b16 %v722
    %v2986 = vunpack.c.l.b16 %v723
    %v2987 = vunpack.c.h.b16 %v723
    %v2988 = vunpack.c.l.b16 %v724
    %v2989 = vunpack.c.h.b16 %v724
    %v2990 = vunpack.c.l.b16 %v725
    %v2991 = vunpack.c.h.b16 %v725
    %v2992 = vunpack.c.l.b16 %v726
    %v2993 = vunpack.c.h.b16 %v726
    %v2994 = vunpack.c.l.b16 %v727
    %v2995 = vunpack.c.h.b16 %v727
    %v2996 = vunpack.c.l.b16 %v728
    %v2997 = vunpack.c.h.b16 %v728
    %v2998 = vunpack.c.l.b16 %v729
    %v2999 = vunpack.c.h.b16 %v729
    %v3000 = vunpack.c.l.b16 %v730
    %v3001 = vunpack.c.h.b16 %v730
    %v3002 = vunpack.c.l.b16 %v731
    %v3003 = vunpack.c.h.b16 %v731
    %v3004 = vunpack.c.l.b16 %v732
    %v3005 = vunpack.c.h.b16 %v732
    %v3006 = vunpack.c.l.b16 %v733
    %v3007 = vunpack.c.h.b16 %v733
    %v3008 = vunpack.c.l.b16 %v734
    %v3009 = vunpack.c.h.b16 %v734
    %v3010 = vunpack.c.l.b16 %v735
    %v3011 = vunpack.c.h.b16 %v735
    %v3012 = vunpack.c.l.b16 %v736
    %v3013 = vunpack.c.h.b16 %v736
    %v3014 = vunpack.c.l.b16 %v737
    %v3015 = vunpack.c.h.b16 %v737
    %v3016 = vunpack.c.l.b16 %v738
    %v3017 = vunpack.c.h.b16 %v738
    %v3018 = vunpack.c.l.b16 %v739
    %v3019 = vunpack.c.h.b16 %v739
    %v3020 = vunpack.c.l.b16 %v740
    %v3021 = vunpack.c.h.b16 %v740
    %v3022 = vunpack.c.l.b16 %v741
    %v3023 = vunpack.c.h.b16 %v741
    %v3024 = vunpack.c.l.b16 %v742
    %v3025 = vunpack.c.h.b16 %v742
    %v3026 = vunpack.c.l.b16 %v743
    %v3027 = vunpack.c.h.b16 %v743
    %v3028 = vunpack.c.l.b16 %v744
    %v3029 = vunpack.c.h.b16 %v744
    %v3030 = vunpack.c.l.b16 %v745
    %v3031 = vunpack.c.h.b16 %v745
    %v3032 = vunpack.c.l.b16 %v746
    %v3033 = vunpack.c.h.b16 %v746
    %v3034 = vunpack.c.l.b16 %v747
    %v3035 = vunpack.c.h.b16 %v747
    %v3036 = vunpack.c.l.b16 %v748
    %v3037 = vunpack.c.h.b16 %v748
    %v3038 = vunpack.c.l.b16 %v749
    %v3039 = vunpack.c.h.b16 %v749
    %v3040 = vunpack.c.l.b16 %v750
    %v3041 = vunpack.c.h.b16 %v750
    %v3042 = vunpack.c.l.b16 %v751
    %v3043 = vunpack.c.h.b16 %v751
    %v3044 = vunpack.c.l.b16 %v752
    %v3045 = vunpack.c.h.b16 %v752
    %v3046 = vunpack.c.l.b16 %v753
    %v3047 = vunpack.c.h.b16 %v753
    %v3048 = vunpack.c.l.b16 %v754
    %v3049 = vunpack.c.h.b16 %v754
    %v3050 = vunpack.c.l.b16 %v755
    %v3051 = vunpack.c.h.b16 %v755
    %v3052 = vunpack.c.l.b16 %v756
    %v3053 = vunpack.c.h.b16 %v756
    %v3054 = vunpack.c.l.b16 %v757
    %v3055 = vunpack.c.h.b16 %v757
    %v3056 = vunpack.c.l.b16 %v758
    %v3057 = vunpack.c.h.b16 %v758
    %v3058 = vunpack.c.l.b16 %v759
    %v3059 = vunpack.c.h.b16 %v759
    %v3060 = vunpack.c.l.b16 %v760
    %v3061 = vunpack.c.h.b16 %v760
    %v3062 = vunpack.c.l.b16 %v761
    %v3063 = vunpack.c.h.b16 %v761
    %v3064 = vunpack.c.l.b16 %v762
    %v3065 = vunpack.c.h.b16 %v762
    %v3066 = vunpack.c.l.b16 %v763
    %v3067 = vunpack.c.h.b16 %v763
    %v3068 = vunpack.c.l.b16 %v764
    %v3069 = vunpack.c.h.b16 %v764
    %v3070 = vunpack.c.l.b16 %v765
    %v3071 = vunpack.c.h.b16 %v765
    %v3072 = vunpack.c.l.b16 %v766
    %v3073 = vunpack.c.h.b16 %v766
    %v3074 = vunpack.c.l.b16 %v767
    %v3075 = vunpack.c.h.b16 %v767
    %v3076 = vunpack.c.l.b16 %v768
    %v3077 = vunpack.c.h.b16 %v768
    %v3078 = vunpack.c.l.b16 %v769
    %v3079 = vunpack.c.h.b16 %v769
    %v3080 = vunpack.c.l.b16 %v770
    %v3081 = vunpack.c.h.b16 %v770
    %v3082 = vunpack.c.l.b16 %v771
    %v3083 = vunpack.c.h.b16 %v771
    %v3084 = vunpack.c.l.b16 %v772
    %v3085 = vunpack.c.h.b16 %v772
    %v3086 = vunpack.c.l.b16 %v773
    %v3087 = vunpack.c.h.b16 %v773
    %v3088 = vunpack.c.l.b16 %v774
    %v3089 = vunpack.c.h.b16 %v774
    %v3090 = vunpack.c.l.b16 %v775
    %v3091 = vunpack.c.h.b16 %v775
    %v3092 = vunpack.c.l.b16 %v776
    %v3093 = vunpack.c.h.b16 %v776
    %v3094 = vunpack.c.l.b16 %v777
    %v3095 = vunpack.c.h.b16 %v777
    %v3096 = vunpack.c.l.b16 %v778
    %v3097 = vunpack.c.h.b16 %v778
    %v3098 = vunpack.c.l.b16 %v779
    %v3099 = vunpack.c.h.b16 %v779
    %v3100 = vunpack.c.l.b16 %v780
    %v3101 = vunpack.c.h.b16 %v780
    %v3102 = vunpack.c.l.b16 %v781
    %v3103 = vunpack.c.h.b16 %v781
    %v3104 = vunpack.c.l.b16 %v782
    %v3105 = vunpack.c.h.b16 %v782
    %v3106 = vunpack.c.l.b16 %v783
    %v3107 = vunpack.c.h.b16 %v783
    %v3108 = vunpack.c.l.b16 %v784
    %v3109 = vunpack.c.h.b16 %v784
    %v3110 = vunpack.c.l.b16 %v785
    %v3111 = vunpack.c.h.b16 %v785
    %v3112 = vunpack.c.l.b16 %v786
    %v3113 = vunpack.c.h.b16 %v786
    %v3114 = vunpack.c.l.b16 %v787
    %v3115 = vunpack.c.h.b16 %v787
    %v3116 = vunpack.c.l.b16 %v788
    %v3117 = vunpack.c.h.b16 %v788
    %v3118 = vunpack.c.l.b16 %v789
    %v3119 = vunpack.c.h.b16 %v789
    %v3120 = vunpack.c.l.b16 %v790
    %v3121 = vunpack.c.h.b16 %v790
    %v3122 = vunpack.c.l.b16 %v791
    %v3123 = vunpack.c.h.b16 %v791
    %v3124 = vunpack.c.l.b16 %v792
    %v3125 = vunpack.c.h.b16 %v792
    %v3126 = vunpack.c.l.b16 %v793
    %v3127 = vunpack.c.h.b16 %v793
    %v3128 = vunpack.c.l.b16 %v794
    %v3129 = vunpack.c.h.b16 %v794
    %v3130 = vunpack.c.l.b16 %v795
    %v3131 = vunpack.c.h.b16 %v795
    %v3132 = vunpack.c.l.b16 %v796
    %v3133 = vunpack.c.h.b16 %v796
    %v3134 = vunpack.c.l.b16 %v797
    %v3135 = vunpack.c.h.b16 %v797
    %v3136 = vunpack.c.l.b16 %v798
    %v3137 = vunpack.c.h.b16 %v798
    %v3138 = vunpack.c.l.b16 %v799
    %v3139 = vunpack.c.h.b16 %v799
    %v3140 = vunpack.c.l.b16 %v800
    %v3141 = vunpack.c.h.b16 %v800
    %v3142 = vunpack.c.l.b16 %v801
    %v3143 = vunpack.c.h.b16 %v801
    %v3144 = vunpack.c.l.b16 %v802
    %v3145 = vunpack.c.h.b16 %v802
    %v3146 = vunpack.c.l.b16 %v803
    %v3147 = vunpack.c.h.b16 %v803
    %v3148 = vunpack.c.l.b16 %v804
    %v3149 = vunpack.c.h.b16 %v804
    %v3150 = vunpack.c.l.b16 %v805
    %v3151 = vunpack.c.h.b16 %v805
    %v3152 = vunpack.c.l.b16 %v806
    %v3153 = vunpack.c.h.b16 %v806
    %v3154 = vunpack.c.l.b16 %v807
    %v3155 = vunpack.c.h.b16 %v807
    %v3156 = vunpack.c.l.b16 %v808
    %v3157 = vunpack.c.h.b16 %v808
    %v3158 = vunpack.c.l.b16 %v809
    %v3159 = vunpack.c.h.b16 %v809
    %v3160 = vunpack.c.l.b16 %v810
    %v3161 = vunpack.c.h.b16 %v810
    %v3162 = vunpack.c.l.b16 %v811
    %v3163 = vunpack.c.h.b16 %v811
    %v3164 = vunpack.c.l.b16 %v812
    %v3165 = vunpack.c.h.b16 %v812
    %v3166 = vunpack.c.l.b16 %v813
    %v3167 = vunpack.c.h.b16 %v813
    %v3168 = vunpack.c.l.b16 %v814
    %v3169 = vunpack.c.h.b16 %v814
    %v3170 = vunpack.c.l.b16 %v815
    %v3171 = vunpack.c.h.b16 %v815
    %v3172 = vunpack.c.l.b16 %v816
    %v3173 = vunpack.c.h.b16 %v816
    %v3174 = vunpack.c.l.b16 %v817
    %v3175 = vunpack.c.h.b16 %v817
    %v3176 = vunpack.c.l.b16 %v818
    %v3177 = vunpack.c.h.b16 %v818
    %v3178 = vunpack.c.l.b16 %v819
    %v3179 = vunpack.c.h.b16 %v819
    %v3180 = vunpack.c.l.b16 %v820
    %v3181 = vunpack.c.h.b16 %v820
    %v3182 = vunpack.c.l.b16 %v821
    %v3183 = vunpack.c.h.b16 %v821
    %v3184 = vunpack.c.l.b16 %v822
    %v3185 = vunpack.c.h.b16 %v822
    %v3186 = vunpack.c.l.b16 %v823
    %v3187 = vunpack.c.h.b16 %v823
    %v3188 = vunpack.c.l.b16 %v824
    %v3189 = vunpack.c.h.b16 %v824
    %v3190 = vunpack.c.l.b16 %v825
    %v3191 = vunpack.c.h.b16 %v825
    %v3192 = vunpack.c.l.b16 %v826
    %v3193 = vunpack.c.h.b16 %v826
    %v3194 = vunpack.c.l.b16 %v827
    %v3195 = vunpack.c.h.b16 %v827
    %v3196 = vunpack.c.l.b16 %v828
    %v3197 = vunpack.c.h.b16 %v828
    %v3198 = vunpack.c.l.b16 %v829
    %v3199 = vunpack.c.h.b16 %v829
    %v3200 = vunpack.c.l.b16 %v830
    %v3201 = vunpack.c.h.b16 %v830
    %v3202 = vunpack.c.l.b16 %v831
    %v3203 = vunpack.c.h.b16 %v831
    %v3204 = vunpack.c.l.b16 %v832
    %v3205 = vunpack.c.h.b16 %v832
    %v3206 = vunpack.c.l.b16 %v833
    %v3207 = vunpack.c.h.b16 %v833
    %v3208 = vunpack.c.l.b16 %v834
    %v3209 = vunpack.c.h.b16 %v834
    %v3210 = vunpack.c.l.b16 %v835
    %v3211 = vunpack.c.h.b16 %v835
    %v3212 = vunpack.c.l.b16 %v836
    %v3213 = vunpack.c.h.b16 %v836
    %v3214 = vunpack.c.l.b16 %v837
    %v3215 = vunpack.c.h.b16 %v837
    %v3216 = vunpack.c.l.b16 %v838
    %v3217 = vunpack.c.h.b16 %v838
    %v3218 = vunpack.c.l.b16 %v839
    %v3219 = vunpack.c.h.b16 %v839
    %v3220 = vunpack.c.l.b16 %v840
    %v3221 = vunpack.c.h.b16 %v840
    %v3222 = vunpack.c.l.b16 %v841
    %v3223 = vunpack.c.h.b16 %v841
    %v3224 = vunpack.c.l.b16 %v842
    %v3225 = vunpack.c.h.b16 %v842
    %v3226 = vunpack.c.l.b16 %v843
    %v3227 = vunpack.c.h.b16 %v843
    %v3228 = vunpack.c.l.b16 %v844
    %v3229 = vunpack.c.h.b16 %v844
    %v3230 = vunpack.c.l.b16 %v845
    %v3231 = vunpack.c.h.b16 %v845
    %v3232 = vunpack.c.l.b16 %v846
    %v3233 = vunpack.c.h.b16 %v846
    %v3234 = vunpack.c.l.b16 %v847
    %v3235 = vunpack.c.h.b16 %v847
    %v3236 = vunpack.c.l.b16 %v848
    %v3237 = vunpack.c.h.b16 %v848
    %v3238 = vunpack.c.l.b16 %v849
    %v3239 = vunpack.c.h.b16 %v849
    %v3240 = vunpack.c.l.b16 %v850
    %v3241 = vunpack.c.h.b16 %v850
    %v3242 = vunpack.c.l.b16 %v851
    %v3243 = vunpack.c.h.b16 %v851
    %v3244 = vunpack.c.l.b16 %v852
    %v3245 = vunpack.c.h.b16 %v852
    %v3246 = vunpack.c.l.b16 %v853
    %v3247 = vunpack.c.h.b16 %v853
    %v3248 = vunpack.c.l.b16 %v854
    %v3249 = vunpack.c.h.b16 %v854
    %v3250 = vunpack.c.l.b16 %v855
    %v3251 = vunpack.c.h.b16 %v855
    %v3252 = vunpack.c.l.b16 %v856
    %v3253 = vunpack.c.h.b16 %v856
    %v3254 = vunpack.c.l.b16 %v857
    %v3255 = vunpack.c.h.b16 %v857
    %v3256 = vunpack.c.l.b16 %v858
    %v3257 = vunpack.c.h.b16 %v858
    %v3258 = vunpack.c.l.b16 %v859
    %v3259 = vunpack.c.h.b16 %v859
    %v3260 = vunpack.c.l.b16 %v860
    %v3261 = vunpack.c.h.b16 %v860
    %v3262 = vunpack.c.l.b16 %v861
    %v3263 = vunpack.c.h.b16 %v861
    %v3264 = vunpack.c.l.b16 %v862
    %v3265 = vunpack.c.h.b16 %v862
    %v3266 = vunpack.c.l.b16 %v863
    %v3267 = vunpack.c.h.b16 %v863
    %v3268 = vunpack.c.l.b16 %v864
    %v3269 = vunpack.c.h.b16 %v864
    %v3270 = vunpack.c.l.b16 %v865
    %v3271 = vunpack.c.h.b16 %v865
    %v3272 = vunpack.c.l.b16 %v866
    %v3273 = vunpack.c.h.b16 %v866
    %v3274 = vunpack.c.l.b16 %v867
    %v3275 = vunpack.c.h.b16 %v867
    %v3276 = vunpack.c.l.b16 %v868
    %v3277 = vunpack.c.h.b16 %v868
    %v3278 = vunpack.c.l.b16 %v869
    %v3279 = vunpack.c.h.b16 %v869
    %v3280 = vpack.c.b16 %v1748, %v1744
    %v3281 = vpack.c.b16 %v1749, %v1745
    %v3282 = vpack.c.b16 %v1750, %v1746
    %v3283 = vpack.c.b16 %v1751, %v1747
    %v3284 = vpack.c.b16 %v1756, %v1752
    %v3285 = vpack.c.b16 %v1757, %v1753
    %v3286 = vpack.c.b16 %v1758, %v1754
    %v3287 = vpack.c.b16 %v1759, %v1755
    %v3288 = vpack.c.b16 %v1764, %v1760
    %v3289 = vpack.c.b16 %v1765, %v1761
    %v3290 = vpack.c.b16 %v1766, %v1762
    %v3291 = vpack.c.b16 %v1767, %v1763
    %v3292 = vpack.c.b16 %v1772, %v1768
    %v3293 = vpack.c.b16 %v1773, %v1769
    %v3294 = vpack.c.b16 %v1774, %v1770
    %v3295 = vpack.c.b16 %v1775, %v1771
    %v3296 = vpack.c.b16 %v1780, %v1776
    %v3297 = vpack.c.b16 %v1781, %v1777
    %v3298 = vpack.c.b16 %v1782, %v1778
    %v3299 = vpack.c.b16 %v1783, %v1779
    %v3300 = vpack.c.b16 %v1788, %v1784
    %v3301 = vpack.c.b16 %v1789, %v1785
    %v3302 = vpack.c.b16 %v1790, %v1786
    %v3303 = vpack.c.b16 %v1791, %v1787
    %v3304 = vpack.c.b16 %v1796, %v1792
    %v3305 = vpack.c.b16 %v1797, %v1793
    %v3306 = vpack.c.b16 %v1798, %v1794
    %v3307 = vpack.c.b16 %v1799, %v1795
    %v3308 = vpack.c.b16 %v1804, %v1800
    %v3309 = vpack.c.b16 %v1805, %v1801
    %v3310 = vpack.c.b16 %v1806, %v1802
    %v3311 = vpack.c.b16 %v1807, %v1803
    %v3312 = vpack.c.b16 %v1812, %v1808
    %v3313 = vpack.c.b16 %v1813, %v1809
    %v3314 = vpack.c.b16 %v1814, %v1810
    %v3315 = vpack.c.b16 %v1815, %v1811
    %v3316 = vpack.c.b16 %v1820, %v1816
    %v3317 = vpack.c.b16 %v1821, %v1817
    %v3318 = vpack.c.b16 %v1822, %v1818
    %v3319 = vpack.c.b16 %v1823, %v1819
    %v3320 = vpack.c.b16 %v1828, %v1824
    %v3321 = vpack.c.b16 %v1829, %v1825
    %v3322 = vpack.c.b16 %v1830, %v1826
    %v3323 = vpack.c.b16 %v1831, %v1827
    %v3324 = vpack.c.b16 %v1836, %v1832
    %v3325 = vpack.c.b16 %v1837, %v1833
    %v3326 = vpack.c.b16 %v1838, %v1834
    %v3327 = vpack.c.b16 %v1839, %v1835
    %v3328 = vpack.c.b16 %v1844, %v1840
    %v3329 = vpack.c.b16 %v1845, %v1841
    %v3330 = vpack.c.b16 %v1846, %v1842
    %v3331 = vpack.c.b16 %v1847, %v1843
    %v3332 = vpack.c.b16 %v1852, %v1848
    %v3333 = vpack.c.b16 %v1853, %v1849
    %v3334 = vpack.c.b16 %v1854, %v1850
    %v3335 = vpack.c.b16 %v1855, %v1851
    %v3336 = vpack.c.b16 %v1860, %v1856
    %v3337 = vpack.c.b16 %v1861, %v1857
    %v3338 = vpack.c.b16 %v1862, %v1858
    %v3339 = vpack.c.b16 %v1863, %v1859
    %v3340 = vpack.c.b16 %v1868, %v1864
    %v3341 = vpack.c.b16 %v1869, %v1865
    %v3342 = vpack.c.b16 %v1870, %v1866
    %v3343 = vpack.c.b16 %v1871, %v1867
    %v3344 = vpack.c.b16 %v1876, %v1872
    %v3345 = vpack.c.b16 %v1877, %v1873
    %v3346 = vpack.c.b16 %v1878, %v1874
    %v3347 = vpack.c.b16 %v1879, %v1875
    %v3348 = vpack.c.b16 %v1884, %v1880
    %v3349 = vpack.c.b16 %v1885, %v1881
    %v3350 = vpack.c.b16 %v1886, %v1882
    %v3351 = vpack.c.b16 %v1887, %v1883
    %v3352 = vpack.c.b16 %v1892, %v1888
    %v3353 = vpack.c.b16 %v1893, %v1889
    %v3354 = vpack.c.b16 %v1894, %v1890
    %v3355 = vpack.c.b16 %v1895, %v1891
    %v3356 = vpack.c.b16 %v1900, %v1896
    %v3357 = vpack.c.b16 %v1901, %v1897
    %v3358 = vpack.c.b16 %v1902, %v1898
    %v3359 = vpack.c.b16 %v1903, %v1899
    %v3360 = vpack.c.b16 %v1908, %v1904
    %v3361 = vpack.c.b16 %v1909, %v1905
    %v3362 = vpack.c.b16 %v1910, %v1906
    %v3363 = vpack.c.b16 %v1911, %v1907
    %v3364 = vpack.c.b16 %v1916, %v1912
    %v3365 = vpack.c.b16 %v1917, %v1913
    %v3366 = vpack.c.b16 %v1918, %v1914
    %v3367 = vpack.c.b16 %v1919, %v1915
    %v3368 = vpack.c.b16 %v1924, %v1920
    %v3369 = vpack.c.b16 %v1925, %v1921
    %v3370 = vpack.c.b16 %v1926, %v1922
    %v3371 = vpack.c.b16 %v1927, %v1923
    %v3372 = vpack.c.b16 %v1932, %v1928
    %v3373 = vpack.c.b16 %v1933, %v1929
    %v3374 = vpack.c.b16 %v1934, %v1930
    %v3375 = vpack.c.b16 %v1935, %v1931
    %v3376 = vpack.c.b16 %v1940, %v1936
    %v3377 = vpack.c.b16 %v1941, %v1937
    %v3378 = vpack.c.b16 %v1942, %v1938
    %v3379 = vpack.c.b16 %v1943, %v1939
    %v3380 = vpack.c.b16 %v1948, %v1944
    %v3381 = vpack.c.b16 %v1949, %v1945
    %v3382 = vpack.c.b16 %v1950, %v1946
    %v3383 = vpack.c.b16 %v1951, %v1947
    %v3384 = vpack.c.b16 %v1956, %v1952
    %v3385 = vpack.c.b16 %v1957, %v1953
    %v3386 = vpack.c.b16 %v1958, %v1954
    %v3387 = vpack.c.b16 %v1959, %v1955
    %v3388 = vpack.c.b16 %v1964, %v1960
    %v3389 = vpack.c.b16 %v1965, %v1961
    %v3390 = vpack.c.b16 %v1966, %v1962
    %v3391 = vpack.c.b16 %v1967, %v1963
    %v3392 = vpack.c.b16 %v1972, %v1968
    %v3393 = vpack.c.b16 %v1973, %v1969
    %v3394 = vpack.c.b16 %v1974, %v1970
    %v3395 = vpack.c.b16 %v1975, %v1971
    %v3396 = vpack.c.b16 %v1980, %v1976
    %v3397 = vpack.c.b16 %v1981, %v1977
    %v3398 = vpack.c.b16 %v1982, %v1978
    %v3399 = vpack.c.b16 %v1983, %v1979
    %v3400 = vpack.c.b16 %v1988, %v1984
    %v3401 = vpack.c.b16 %v1989, %v1985
    %v3402 = vpack.c.b16 %v1990, %v1986
    %v3403 = vpack.c.b16 %v1991, %v1987
    %v3404 = vpack.c.b16 %v1996, %v1992
    %v3405 = vpack.c.b16 %v1997, %v1993
    %v3406 = vpack.c.b16 %v1998, %v1994
    %v3407 = vpack.c.b16 %v1999, %v1995
    %v3408 = vpack.c.b16 %v2004, %v2000
    %v3409 = vpack.c.b16 %v2005, %v2001
    %v3410 = vpack.c.b16 %v2006, %v2002
    %v3411 = vpack.c.b16 %v2007, %v2003
    %v3412 = vpack.c.b16 %v2012, %v2008
    %v3413 = vpack.c.b16 %v2013, %v2009
    %v3414 = vpack.c.b16 %v2014, %v2010
    %v3415 = vpack.c.b16 %v2015, %v2011
    %v3416 = vpack.c.b16 %v2020, %v2016
    %v3417 = vpack.c.b16 %v2021, %v2017
    %v3418 = vpack.c.b16 %v2022, %v2018
    %v3419 = vpack.c.b16 %v2023, %v2019
    %v3420 = vpack.c.b16 %v2028, %v2024
    %v3421 = vpack.c.b16 %v2029, %v2025
    %v3422 = vpack.c.b16 %v2030, %v2026
    %v3423 = vpack.c.b16 %v2031, %v2027
    %v3424 = vpack.c.b16 %v2036, %v2032
    %v3425 = vpack.c.b16 %v2037, %v2033
    %v3426 = vpack.c.b16 %v2038, %v2034
    %v3427 = vpack.c.b16 %v2039, %v2035
    %v3428 = vpack.c.b16 %v2044, %v2040
    %v3429 = vpack.c.b16 %v2045, %v2041
    %v3430 = vpack.c.b16 %v2046, %v2042
    %v3431 = vpack.c.b16 %v2047, %v2043
    %v3432 = vpack.c.b16 %v2052, %v2048
    %v3433 = vpack.c.b16 %v2053, %v2049
    %v3434 = vpack.c.b16 %v2054, %v2050
    %v3435 = vpack.c.b16 %v2055, %v2051
    %v3436 = vpack.c.b16 %v2060, %v2056
    %v3437 = vpack.c.b16 %v2061, %v2057
    %v3438 = vpack.c.b16 %v2062, %v2058
    %v3439 = vpack.c.b16 %v2063, %v2059
    %v3440 = vpack.c.b16 %v2068, %v2064
    %v3441 = vpack.c.b16 %v2069, %v2065
    %v3442 = vpack.c.b16 %v2070, %v2066
    %v3443 = vpack.c.b16 %v2071, %v2067
    %v3444 = vpack.c.b16 %v2076, %v2072
    %v3445 = vpack.c.b16 %v2077, %v2073
    %v3446 = vpack.c.b16 %v2078, %v2074
    %v3447 = vpack.c.b16 %v2079, %v2075
    %v3448 = vpack.c.b16 %v2084, %v2080
    %v3449 = vpack.c.b16 %v2085, %v2081
    %v3450 = vpack.c.b16 %v2086, %v2082
    %v3451 = vpack.c.b16 %v2087, %v2083
    %v3452 = vpack.c.b16 %v2092, %v2088
    %v3453 = vpack.c.b16 %v2093, %v2089
    %v3454 = vpack.c.b16 %v2094, %v2090
    %v3455 = vpack.c.b16 %v2095, %v2091
    %v3456 = vpack.c.b16 %v2100, %v2096
    %v3457 = vpack.c.b16 %v2101, %v2097
    %v3458 = vpack.c.b16 %v2102, %v2098
    %v3459 = vpack.c.b16 %v2103, %v2099
    %v3460 = vpack.c.b16 %v2108, %v2104
    %v3461 = vpack.c.b16 %v2109, %v2105
    %v3462 = vpack.c.b16 %v2110, %v2106
    %v3463 = vpack.c.b16 %v2111, %v2107
    %v3464 = vpack.c.b16 %v2116, %v2112
    %v3465 = vpack.c.b16 %v2117, %v2113
    %v3466 = vpack.c.b16 %v2118, %v2114
    %v3467 = vpack.c.b16 %v2119, %v2115
    %v3468 = vpack.c.b16 %v2124, %v2120
    %v3469 = vpack.c.b16 %v2125, %v2121
    %v3470 = vpack.c.b16 %v2126, %v2122
    %v3471 = vpack.c.b16 %v2127, %v2123
    %v3472 = vpack.c.b16 %v2132, %v2128
    %v3473 = vpack.c.b16 %v2133, %v2129
    %v3474 = vpack.c.b16 %v2134, %v2130
    %v3475 = vpack.c.b16 %v2135, %v2131
    %v3476 = vpack.c.b16 %v2140, %v2136
    %v3477 = vpack.c.b16 %v2141, %v2137
    %v3478 = vpack.c.b16 %v2142, %v2138
    %v3479 = vpack.c.b16 %v2143, %v2139
    %v3480 = vpack.c.b16 %v2148, %v2144
    %v3481 = vpack.c.b16 %v2149, %v2145
    %v3482 = vpack.c.b16 %v2150, %v2146
    %v3483 = vpack.c.b16 %v2151, %v2147
    %v3484 = vpack.c.b16 %v2156, %v2152
    %v3485 = vpack.c.b16 %v2157, %v2153
    %v3486 = vpack.c.b16 %v2158, %v2154
    %v3487 = vpack.c.b16 %v2159, %v2155
    %v3488 = vpack.c.b16 %v2164, %v2160
    %v3489 = vpack.c.b16 %v2165, %v2161
    %v3490 = vpack.c.b16 %v2166, %v2162
    %v3491 = vpack.c.b16 %v2167, %v2163
    %v3492 = vpack.c.b16 %v2172, %v2168
    %v3493 = vpack.c.b16 %v2173, %v2169
    %v3494 = vpack.c.b16 %v2174, %v2170
    %v3495 = vpack.c.b16 %v2175, %v2171
    %v3496 = vpack.c.b16 %v2180, %v2176
    %v3497 = vpack.c.b16 %v2181, %v2177
    %v3498 = vpack.c.b16 %v2182, %v2178
    %v3499 = vpack.c.b16 %v2183, %v2179
    %v3500 = vpack.c.b16 %v2188, %v2184
    %v3501 = vpack.c.b16 %v2189, %v2185
    %v3502 = vpack.c.b16 %v2190, %v2186
    %v3503 = vpack.c.b16 %v2191, %v2187
    %v3504 = vpack.c.b16 %v2196, %v2192
    %v3505 = vpack.c.b16 %v2197, %v2193
    %v3506 = vpack.c.b16 %v2198, %v2194
    %v3507 = vpack.c.b16 %v2199, %v2195
    %v3508 = vpack.c.b16 %v2204, %v2200
    %v3509 = vpack.c.b16 %v2205, %v2201
    %v3510 = vpack.c.b16 %v2206, %v2202
    %v3511 = vpack.c.b16 %v2207, %v2203
    %v3512 = vpack.c.b16 %v2212, %v2208
    %v3513 = vpack.c.b16 %v2213, %v2209
    %v3514 = vpack.c.b16 %v2214, %v2210
    %v3515 = vpack.c.b16 %v2215, %v2211
    %v3516 = vpack.c.b16 %v2220, %v2216
    %v3517 = vpack.c.b16 %v2221, %v2217
    %v3518 = vpack.c.b16 %v2222, %v2218
    %v3519 = vpack.c.b16 %v2223, %v2219
    %v3520 = vpack.c.b16 %v2228, %v2224
    %v3521 = vpack.c.b16 %v2229, %v2225
    %v3522 = vpack.c.b16 %v2230, %v2226
    %v3523 = vpack.c.b16 %v2231, %v2227
    %v3524 = vpack.c.b16 %v2236, %v2232
    %v3525 = vpack.c.b16 %v2237, %v2233
    %v3526 = vpack.c.b16 %v2238, %v2234
    %v3527 = vpack.c.b16 %v2239, %v2235
    %v3528 = vpack.c.b16 %v2244, %v2240
    %v3529 = vpack.c.b16 %v2245, %v2241
    %v3530 = vpack.c.b16 %v2246, %v2242
    %v3531 = vpack.c.b16 %v2247, %v2243
    %v3532 = vpack.c.b16 %v2252, %v2248
    %v3533 = vpack.c.b16 %v2253, %v2249
    %v3534 = vpack.c.b16 %v2254, %v2250
    %v3535 = vpack.c.b16 %v2255, %v2251
    %v3536 = vpack.c.b16 %v2260, %v2256
    %v3537 = vpack.c.b16 %v2261, %v2257
    %v3538 = vpack.c.b16 %v2262, %v2258
    %v3539 = vpack.c.b16 %v2263, %v2259
    %v3540 = vpack.c.b16 %v2268, %v2264
    %v3541 = vpack.c.b16 %v2269, %v2265
    %v3542 = vpack.c.b16 %v2270, %v2266
    %v3543 = vpack.c.b16 %v2271, %v2267
    %v3544 = vpack.c.b16 %v2276, %v2272
    %v3545 = vpack.c.b16 %v2277, %v2273
    %v3546 = vpack.c.b16 %v2278, %v2274
    %v3547 = vpack.c.b16 %v2279, %v2275
    %v3548 = vpack.c.b16 %v2284, %v2280
    %v3549 = vpack.c.b16 %v2285, %v2281
    %v3550 = vpack.c.b16 %v2286, %v2282
    %v3551 = vpack.c.b16 %v2287, %v2283
    %v3552 = vpack.c.b16 %v2292, %v2288
    %v3553 = vpack.c.b16 %v2293, %v2289
    %v3554 = vpack.c.b16 %v2294, %v2290
    %v3555 = vpack.c.b16 %v2295, %v2291
    %v3556 = vpack.c.b16 %v2300, %v2296
    %v3557 = vpack.c.b16 %v2301, %v2297
    %v3558 = vpack.c.b16 %v2302, %v2298
    %v3559 = vpack.c.b16 %v2303, %v2299
    %v3560 = vpack.c.b16 %v2308, %v2304
    %v3561 = vpack.c.b16 %v2309, %v2305
    %v3562 = vpack.c.b16 %v2310, %v2306
    %v3563 = vpack.c.b16 %v2311, %v2307
    %v3564 = vpack.c.b16 %v2316, %v2312
    %v3565 = vpack.c.b16 %v2317, %v2313
    %v3566 = vpack.c.b16 %v2318, %v2314
    %v3567 = vpack.c.b16 %v2319, %v2315
    %v3568 = vpack.c.b16 %v2324, %v2320
    %v3569 = vpack.c.b16 %v2325, %v2321
    %v3570 = vpack.c.b16 %v2326, %v2322
    %v3571 = vpack.c.b16 %v2327, %v2323
    %v3572 = vpack.c.b16 %v2332, %v2328
    %v3573 = vpack.c.b16 %v2333, %v2329
    %v3574 = vpack.c.b16 %v2334, %v2330
    %v3575 = vpack.c.b16 %v2335, %v2331
    %v3576 = vpack.c.b16 %v2340, %v2336
    %v3577 = vpack.c.b16 %v2341, %v2337
    %v3578 = vpack.c.b16 %v2342, %v2338
    %v3579 = vpack.c.b16 %v2343, %v2339
    %v3580 = vpack.c.b16 %v2348, %v2344
    %v3581 = vpack.c.b16 %v2349, %v2345
    %v3582 = vpack.c.b16 %v2350, %v2346
    %v3583 = vpack.c.b16 %v2351, %v2347
    %v3584 = vpack.c.b16 %v2356, %v2352
    %v3585 = vpack.c.b16 %v2357, %v2353
    %v3586 = vpack.c.b16 %v2358, %v2354
    %v3587 = vpack.c.b16 %v2359, %v2355
    %v3588 = vpack.c.b16 %v2364, %v2360
    %v3589 = vpack.c.b16 %v2365, %v2361
    %v3590 = vpack.c.b16 %v2366, %v2362
    %v3591 = vpack.c.b16 %v2367, %v2363
    %v3592 = vpack.c.b16 %v2372, %v2368
    %v3593 = vpack.c.b16 %v2373, %v2369
    %v3594 = vpack.c.b16 %v2374, %v2370
    %v3595 = vpack.c.b16 %v2375, %v2371
    %v3596 = vpack.c.b16 %v2380, %v2376
    %v3597 = vpack.c.b16 %v2381, %v2377
    %v3598 = vpack.c.b16 %v2382, %v2378
    %v3599 = vpack.c.b16 %v2383, %v2379
    %v3600 = vpack.c.b16 %v2388, %v2384
    %v3601 = vpack.c.b16 %v2389, %v2385
    %v3602 = vpack.c.b16 %v2390, %v2386
    %v3603 = vpack.c.b16 %v2391, %v2387
    %v3604 = vpack.c.b16 %v2396, %v2392
    %v3605 = vpack.c.b16 %v2397, %v2393
    %v3606 = vpack.c.b16 %v2398, %v2394
    %v3607 = vpack.c.b16 %v2399, %v2395
    %v3608 = vpack.c.b16 %v2404, %v2400
    %v3609 = vpack.c.b16 %v2405, %v2401
    %v3610 = vpack.c.b16 %v2406, %v2402
    %v3611 = vpack.c.b16 %v2407, %v2403
    %v3612 = vpack.c.b16 %v2412, %v2408
    %v3613 = vpack.c.b16 %v2413, %v2409
    %v3614 = vpack.c.b16 %v2414, %v2410
    %v3615 = vpack.c.b16 %v2415, %v2411
    %v3616 = vpack.c.b16 %v2420, %v2416
    %v3617 = vpack.c.b16 %v2421, %v2417
    %v3618 = vpack.c.b16 %v2422, %v2418
    %v3619 = vpack.c.b16 %v2423, %v2419
    %v3620 = vpack.c.b16 %v2428, %v2424
    %v3621 = vpack.c.b16 %v2429, %v2425
    %v3622 = vpack.c.b16 %v2430, %v2426
    %v3623 = vpack.c.b16 %v2431, %v2427
    %v3624 = vpack.c.b16 %v2436, %v2432
    %v3625 = vpack.c.b16 %v2437, %v2433
    %v3626 = vpack.c.b16 %v2438, %v2434
    %v3627 = vpack.c.b16 %v2439, %v2435
    %v3628 = vpack.c.b16 %v2444, %v2440
    %v3629 = vpack.c.b16 %v2445, %v2441
    %v3630 = vpack.c.b16 %v2446, %v2442
    %v3631 = vpack.c.b16 %v2447, %v2443
    %v3632 = vpack.c.b16 %v2452, %v2448
    %v3633 = vpack.c.b16 %v2453, %v2449
    %v3634 = vpack.c.b16 %v2454, %v2450
    %v3635 = vpack.c.b16 %v2455, %v2451
    %v3636 = vpack.c.b16 %v2460, %v2456
    %v3637 = vpack.c.b16 %v2461, %v2457
    %v3638 = vpack.c.b16 %v2462, %v2458
    %v3639 = vpack.c.b16 %v2463, %v2459
    %v3640 = vpack.c.b16 %v2468, %v2464
    %v3641 = vpack.c.b16 %v2469, %v2465
    %v3642 = vpack.c.b16 %v2470, %v2466
    %v3643 = vpack.c.b16 %v2471, %v2467
    %v3644 = vpack.c.b16 %v2476, %v2472
    %v3645 = vpack.c.b16 %v2477, %v2473
    %v3646 = vpack.c.b16 %v2478, %v2474
    %v3647 = vpack.c.b16 %v2479, %v2475
    %v3648 = vpack.c.b16 %v2484, %v2480
    %v3649 = vpack.c.b16 %v2485, %v2481
    %v3650 = vpack.c.b16 %v2486, %v2482
    %v3651 = vpack.c.b16 %v2487, %v2483
    %v3652 = vpack.c.b16 %v2492, %v2488
    %v3653 = vpack.c.b16 %v2493, %v2489
    %v3654 = vpack.c.b16 %v2494, %v2490
    %v3655 = vpack.c.b16 %v2495, %v2491
    %v3656 = vpack.c.b16 %v2500, %v2496
    %v3657 = vpack.c.b16 %v2501, %v2497
    %v3658 = vpack.c.b16 %v2502, %v2498
    %v3659 = vpack.c.b16 %v2503, %v2499
    %v3660 = vpack.c.b16 %v2508, %v2504
    %v3661 = vpack.c.b16 %v2509, %v2505
    %v3662 = vpack.c.b16 %v2510, %v2506
    %v3663 = vpack.c.b16 %v2511, %v2507
    %v3664 = vpack.c.b16 %v2516, %v2512
    %v3665 = vpack.c.b16 %v2517, %v2513
    %v3666 = vpack.c.b16 %v2518, %v2514
    %v3667 = vpack.c.b16 %v2519, %v2515
    %v3668 = vpack.c.b16 %v2524, %v2520
    %v3669 = vpack.c.b16 %v2525, %v2521
    %v3670 = vpack.c.b16 %v2526, %v2522
    %v3671 = vpack.c.b16 %v2527, %v2523
    %v3672 = vpack.c.b16 %v2532, %v2528
    %v3673 = vpack.c.b16 %v2533, %v2529
    %v3674 = vpack.c.b16 %v2534, %v2530
    %v3675 = vpack.c.b16 %v2535, %v2531
    %v3676 = vpack.c.b16 %v2540, %v2536
    %v3677 = vpack.c.b16 %v2541, %v2537
    %v3678 = vpack.c.b16 %v2542, %v2538
    %v3679 = vpack.c.b16 %v2543, %v2539
    %v3680 = vpack.c.b16 %v2548, %v2544
    %v3681 = vpack.c.b16 %v2549, %v2545
    %v3682 = vpack.c.b16 %v2550, %v2546
    %v3683 = vpack.c.b16 %v2551, %v2547
    %v3684 = vpack.c.b16 %v2556, %v2552
    %v3685 = vpack.c.b16 %v2557, %v2553
    %v3686 = vpack.c.b16 %v2558, %v2554
    %v3687 = vpack.c.b16 %v2559, %v2555
    %v3688 = vpack.c.b16 %v2564, %v2560
    %v3689 = vpack.c.b16 %v2565, %v2561
    %v3690 = vpack.c.b16 %v2566, %v2562
    %v3691 = vpack.c.b16 %v2567, %v2563
    %v3692 = vpack.c.b16 %v2572, %v2568
    %v3693 = vpack.c.b16 %v2573, %v2569
    %v3694 = vpack.c.b16 %v2574, %v2570
    %v3695 = vpack.c.b16 %v2575, %v2571
    %v3696 = vpack.c.b16 %v2580, %v2576
    %v3697 = vpack.c.b16 %v2581, %v2577
    %v3698 = vpack.c.b16 %v2582, %v2578
    %v3699 = vpack.c.b16 %v2583, %v2579
    %v3700 = vpack.c.b16 %v2588, %v2584
    %v3701 = vpack.c.b16 %v2589, %v2585
    %v3702 = vpack.c.b16 %v2590, %v2586
    %v3703 = vpack.c.b16 %v2591, %v2587
    %v3704 = vpack.c.b16 %v2596, %v2592
    %v3705 = vpack.c.b16 %v2597, %v2593
    %v3706 = vpack.c.b16 %v2598, %v2594
    %v3707 = vpack.c.b16 %v2599, %v2595
    %v3708 = vpack.c.b16 %v2604, %v2600
    %v3709 = vpack.c.b16 %v2605, %v2601
    %v3710 = vpack.c.b16 %v2606, %v2602
    %v3711 = vpack.c.b16 %v2607, %v2603
    %v3712 = vpack.c.b16 %v2612, %v2608
    %v3713 = vpack.c.b16 %v2613, %v2609
    %v3714 = vpack.c.b16 %v2614, %v2610
    %v3715 = vpack.c.b16 %v2615, %v2611
    %v3716 = vpack.c.b16 %v2620, %v2616
    %v3717 = vpack.c.b16 %v2621, %v2617
    %v3718 = vpack.c.b16 %v2622, %v2618
    %v3719 = vpack.c.b16 %v2623, %v2619
    %v3720 = vpack.c.b16 %v2628, %v2624
    %v3721 = vpack.c.b16 %v2629, %v2625
    %v3722 = vpack.c.b16 %v2630, %v2626
    %v3723 = vpack.c.b16 %v2631, %v2627
    %v3724 = vpack.c.b16 %v2636, %v2632
    %v3725 = vpack.c.b16 %v2637, %v2633
    %v3726 = vpack.c.b16 %v2638, %v2634
    %v3727 = vpack.c.b16 %v2639, %v2635
    %v3728 = vpack.c.b16 %v2644, %v2640
    %v3729 = vpack.c.b16 %v2645, %v2641
    %v3730 = vpack.c.b16 %v2646, %v2642
    %v3731 = vpack.c.b16 %v2647, %v2643
    %v3732 = vpack.c.b16 %v2652, %v2648
    %v3733 = vpack.c.b16 %v2653, %v2649
    %v3734 = vpack.c.b16 %v2654, %v2650
    %v3735 = vpack.c.b16 %v2655, %v2651
    %v3736 = vpack.c.b16 %v2660, %v2656
    %v3737 = vpack.c.b16 %v2661, %v2657
    %v3738 = vpack.c.b16 %v2662, %v2658
    %v3739 = vpack.c.b16 %v2663, %v2659
    %v3740 = vpack.c.b16 %v2668, %v2664
    %v3741 = vpack.c.b16 %v2669, %v2665
    %v3742 = vpack.c.b16 %v2670, %v2666
    %v3743 = vpack.c.b16 %v2671, %v2667
    %v3744 = vpack.c.b16 %v2676, %v2672
    %v3745 = vpack.c.b16 %v2677, %v2673
    %v3746 = vpack.c.b16 %v2678, %v2674
    %v3747 = vpack.c.b16 %v2679, %v2675
    %v3748 = vpack.c.b16 %v2684, %v2680
    %v3749 = vpack.c.b16 %v2685, %v2681
    %v3750 = vpack.c.b16 %v2686, %v2682
    %v3751 = vpack.c.b16 %v2687, %v2683
    %v3752 = vpack.c.b16 %v2692, %v2688
    %v3753 = vpack.c.b16 %v2693, %v2689
    %v3754 = vpack.c.b16 %v2694, %v2690
    %v3755 = vpack.c.b16 %v2695, %v2691
    %v3756 = vpack.c.b16 %v2700, %v2696
    %v3757 = vpack.c.b16 %v2701, %v2697
    %v3758 = vpack.c.b16 %v2702, %v2698
    %v3759 = vpack.c.b16 %v2703, %v2699
    %v3760 = vpack.c.b16 %v2708, %v2704
    %v3761 = vpack.c.b16 %v2709, %v2705
    %v3762 = vpack.c.b16 %v2710, %v2706
    %v3763 = vpack.c.b16 %v2711, %v2707
    %v3764 = vpack.c.b16 %v2716, %v2712
    %v3765 = vpack.c.b16 %v2717, %v2713
    %v3766 = vpack.c.b16 %v2718, %v2714
    %v3767 = vpack.c.b16 %v2719, %v2715
    %v3768 = vpack.c.b16 %v2724, %v2720
    %v3769 = vpack.c.b16 %v2725, %v2721
    %v3770 = vpack.c.b16 %v2726, %v2722
    %v3771 = vpack.c.b16 %v2727, %v2723
    %v3772 = vpack.c.b16 %v2732, %v2728
    %v3773 = vpack.c.b16 %v2733, %v2729
    %v3774 = vpack.c.b16 %v2734, %v2730
    %v3775 = vpack.c.b16 %v2735, %v2731
    %v3776 = vpack.c.b16 %v2740, %v2736
    %v3777 = vpack.c.b16 %v2741, %v2737
    %v3778 = vpack.c.b16 %v2742, %v2738
    %v3779 = vpack.c.b16 %v2743, %v2739
    %v3780 = vpack.c.b16 %v2748, %v2744
    %v3781 = vpack.c.b16 %v2749, %v2745
    %v3782 = vpack.c.b16 %v2750, %v2746
    %v3783 = vpack.c.b16 %v2751, %v2747
    %v3784 = vpack.c.b16 %v2756, %v2752
    %v3785 = vpack.c.b16 %v2757, %v2753
    %v3786 = vpack.c.b16 %v2758, %v2754
    %v3787 = vpack.c.b16 %v2759, %v2755
    %v3788 = vpack.c.b16 %v2764, %v2760
    %v3789 = vpack.c.b16 %v2765, %v2761
    %v3790 = vpack.c.b16 %v2766, %v2762
    %v3791 = vpack.c.b16 %v2767, %v2763
    %v3792 = vpack.c.b16 %v2772, %v2768
    %v3793 = vpack.c.b16 %v2773, %v2769
    %v3794 = vpack.c.b16 %v2774, %v2770
    %v3795 = vpack.c.b16 %v2775, %v2771
    %v3796 = vpack.c.b16 %v2780, %v2776
    %v3797 = vpack.c.b16 %v2781, %v2777
    %v3798 = vpack.c.b16 %v2782, %v2778
    %v3799 = vpack.c.b16 %v2783, %v2779
    %v3800 = vpack.c.b16 %v2788, %v2784
    %v3801 = vpack.c.b16 %v2789, %v2785
    %v3802 = vpack.c.b16 %v2790, %v2786
    %v3803 = vpack.c.b16 %v2791, %v2787
    %v3804 = vpack.c.b16 %v2796, %v2792
    %v3805 = vpack.c.b16 %v2797, %v2793
    %v3806 = vpack.c.b16 %v2798, %v2794
    %v3807 = vpack.c.b16 %v2799, %v2795
    %v3808 = vpack.c.b16 %v2804, %v2800
    %v3809 = vpack.c.b16 %v2805, %v2801
    %v3810 = vpack.c.b16 %v2806, %v2802
    %v3811 = vpack.c.b16 %v2807, %v2803
    %v3812 = vpack.c.b16 %v2812, %v2808
    %v3813 = vpack.c.b16 %v2813, %v2809
    %v3814 = vpack.c.b16 %v2814, %v2810
    %v3815 = vpack.c.b16 %v2815, %v2811
    %v3816 = vpack.c.b16 %v2820, %v2816
    %v3817 = vpack.c.b16 %v2821, %v2817
    %v3818 = vpack.c.b16 %v2822, %v2818
    %v3819 = vpack.c.b16 %v2823, %v2819
    %v3820 = vpack.c.b16 %v2828, %v2824
    %v3821 = vpack.c.b16 %v2829, %v2825
    %v3822 = vpack.c.b16 %v2830, %v2826
    %v3823 = vpack.c.b16 %v2831, %v2827
    %v3824 = vpack.c.b16 %v2836, %v2832
    %v3825 = vpack.c.b16 %v2837, %v2833
    %v3826 = vpack.c.b16 %v2838, %v2834
    %v3827 = vpack.c.b16 %v2839, %v2835
    %v3828 = vpack.c.b16 %v2844, %v2840
    %v3829 = vpack.c.b16 %v2845, %v2841
    %v3830 = vpack.c.b16 %v2846, %v2842
    %v3831 = vpack.c.b16 %v2847, %v2843
    %v3832 = vpack.c.b16 %v2852, %v2848
    %v3833 = vpack.c.b16 %v2853, %v2849
    %v3834 = vpack.c.b16 %v2854, %v2850
    %v3835 = vpack.c.b16 %v2855, %v2851
    %v3836 = vpack.c.b16 %v2860, %v2856
    %v3837 = vpack.c.b16 %v2861, %v2857
    %v3838 = vpack.c.b16 %v2862, %v2858
    %v3839 = vpack.c.b16 %v2863, %v2859
    %v3840 = vpack.c.b16 %v2868, %v2864
    %v3841 = vpack.c.b16 %v2869, %v2865
    %v3842 = vpack.c.b16 %v2870, %v2866
    %v3843 = vpack.c.b16 %v2871, %v2867
    %v3844 = vpack.c.b16 %v2876, %v2872
    %v3845 = vpack.c.b16 %v2877, %v2873
    %v3846 = vpack.c.b16 %v2878, %v2874
    %v3847 = vpack.c.b16 %v2879, %v2875
    %v3848 = vpack.c.b16 %v2884, %v2880
    %v3849 = vpack.c.b16 %v2885, %v2881
    %v3850 = vpack.c.b16 %v2886, %v2882
    %v3851 = vpack.c.b16 %v2887, %v2883
    %v3852 = vpack.c.b16 %v2892, %v2888
    %v3853 = vpack.c.b16 %v2893, %v2889
    %v3854 = vpack.c.b16 %v2894, %v2890
    %v3855 = vpack.c.b16 %v2895, %v2891
    %v3856 = vpack.c.b16 %v2900, %v2896
    %v3857 = vpack.c.b16 %v2901, %v2897
    %v3858 = vpack.c.b16 %v2902, %v2898
    %v3859 = vpack.c.b16 %v2903, %v2899
    %v3860 = vpack.c.b16 %v2908, %v2904
    %v3861 = vpack.c.b16 %v2909, %v2905
    %v3862 = vpack.c.b16 %v2910, %v2906
    %v3863 = vpack.c.b16 %v2911, %v2907
    %v3864 = vpack.c.b16 %v2916, %v2912
    %v3865 = vpack.c.b16 %v2917, %v2913
    %v3866 = vpack.c.b16 %v2918, %v2914
    %v3867 = vpack.c.b16 %v2919, %v2915
    %v3868 = vpack.c.b16 %v2924, %v2920
    %v3869 = vpack.c.b16 %v2925, %v2921
    %v3870 = vpack.c.b16 %v2926, %v2922
    %v3871 = vpack.c.b16 %v2927, %v2923
    %v3872 = vpack.c.b16 %v2932, %v2928
    %v3873 = vpack.c.b16 %v2933, %v2929
    %v3874 = vpack.c.b16 %v2934, %v2930
    %v3875 = vpack.c.b16 %v2935, %v2931
    %v3876 = vpack.c.b16 %v2940, %v2936
    %v3877 = vpack.c.b16 %v2941, %v2937
    %v3878 = vpack.c.b16 %v2942, %v2938
    %v3879 = vpack.c.b16 %v2943, %v2939
    %v3880 = vpack.c.b16 %v2948, %v2944
    %v3881 = vpack.c.b16 %v2949, %v2945
    %v3882 = vpack.c.b16 %v2950, %v2946
    %v3883 = vpack.c.b16 %v2951, %v2947
    %v3884 = vpack.c.b16 %v2956, %v2952
    %v3885 = vpack.c.b16 %v2957, %v2953
    %v3886 = vpack.c.b16 %v2958, %v2954
    %v3887 = vpack.c.b16 %v2959, %v2955
    %v3888 = vpack.c.b16 %v2964, %v2960
    %v3889 = vpack.c.b16 %v2965, %v2961
    %v3890 = vpack.c.b16 %v2966, %v2962
    %v3891 = vpack.c.b16 %v2967, %v2963
    %v3892 = vpack.c.b16 %v2972, %v2968
    %v3893 = vpack.c.b16 %v2973, %v2969
    %v3894 = vpack.c.b16 %v2974, %v2970
    %v3895 = vpack.c.b16 %v2975, %v2971
    %v3896 = vpack.c.b16 %v2980, %v2976
    %v3897 = vpack.c.b16 %v2981, %v2977
    %v3898 = vpack.c.b16 %v2982, %v2978
    %v3899 = vpack.c.b16 %v2983, %v2979
    %v3900 = vpack.c.b16 %v2988, %v2984
    %v3901 = vpack.c.b16 %v2989, %v2985
    %v3902 = vpack.c.b16 %v2990, %v2986
    %v3903 = vpack.c.b16 %v2991, %v2987
    %v3904 = vpack.c.b16 %v2996, %v2992
    %v3905 = vpack.c.b16 %v2997, %v2993
    %v3906 = vpack.c.b16 %v2998, %v2994
    %v3907 = vpack.c.b16 %v2999, %v2995
    %v3908 = vpack.c.b16 %v3004, %v3000
    %v3909 = vpack.c.b16 %v3005, %v3001
    %v3910 = vpack.c.b16 %v3006, %v3002
    %v3911 = vpack.c.b16 %v3007, %v3003
    %v3912 = vpack.c.b16 %v3012, %v3008
    %v3913 = vpack.c.b16 %v3013, %v3009
    %v3914 = vpack.c.b16 %v3014, %v3010
    %v3915 = vpack.c.b16 %v3015, %v3011
    %v3916 = vpack.c.b16 %v3020, %v3016
    %v3917 = vpack.c.b16 %v3021, %v3017
    %v3918 = vpack.c.b16 %v3022, %v3018
    %v3919 = vpack.c.b16 %v3023, %v3019
    %v3920 = vpack.c.b16 %v3028, %v3024
    %v3921 = vpack.c.b16 %v3029, %v3025
    %v3922 = vpack.c.b16 %v3030, %v3026
    %v3923 = vpack.c.b16 %v3031, %v3027
    %v3924 = vpack.c.b16 %v3036, %v3032
    %v3925 = vpack.c.b16 %v3037, %v3033
    %v3926 = vpack.c.b16 %v3038, %v3034
    %v3927 = vpack.c.b16 %v3039, %v3035
    %v3928 = vpack.c.b16 %v3044, %v3040
    %v3929 = vpack.c.b16 %v3045, %v3041
    %v3930 = vpack.c.b16 %v3046, %v3042
    %v3931 = vpack.c.b16 %v3047, %v3043
    %v3932 = vpack.c.b16 %v3052, %v3048
    %v3933 = vpack.c.b16 %v3053, %v3049
    %v3934 = vpack.c.b16 %v3054, %v3050
    %v3935 = vpack.c.b16 %v3055, %v3051
    %v3936 = vpack.c.b16 %v3060, %v3056
    %v3937 = vpack.c.b16 %v3061, %v3057
    %v3938 = vpack.c.b16 %v3062, %v3058
    %v3939 = vpack.c.b16 %v3063, %v3059
    %v3940 = vpack.c.b16 %v3068, %v3064
    %v3941 = vpack.c.b16 %v3069, %v3065
    %v3942 = vpack.c.b16 %v3070, %v3066
    %v3943 = vpack.c.b16 %v3071, %v3067
    %v3944 = vpack.c.b16 %v3076, %v3072
    %v3945 = vpack.c.b16 %v3077, %v3073
    %v3946 = vpack.c.b16 %v3078, %v3074
    %v3947 = vpack.c.b16 %v3079, %v3075
    %v3948 = vpack.c.b16 %v3084, %v3080
    %v3949 = vpack.c.b16 %v3085, %v3081
    %v3950 = vpack.c.b16 %v3086, %v3082
    %v3951 = vpack.c.b16 %v3087, %v3083
    %v3952 = vpack.c.b16 %v3092, %v3088
    %v3953 = vpack.c.b16 %v3093, %v3089
    %v3954 = vpack.c.b16 %v3094, %v3090
    %v3955 = vpack.c.b16 %v3095, %v3091
    %v3956 = vpack.c.b16 %v3100, %v3096
    %v3957 = vpack.c.b16 %v3101, %v3097
    %v3958 = vpack.c.b16 %v3102, %v3098
    %v3959 = vpack.c.b16 %v3103, %v3099
    %v3960 = vpack.c.b16 %v3108, %v3104
    %v3961 = vpack.c.b16 %v3109, %v3105
    %v3962 = vpack.c.b16 %v3110, %v3106
    %v3963 = vpack.c.b16 %v3111, %v3107
    %v3964 = vpack.c.b16 %v3116, %v3112
    %v3965 = vpack.c.b16 %v3117, %v3113
    %v3966 = vpack.c.b16 %v3118, %v3114
    %v3967 = vpack.c.b16 %v3119, %v3115
    %v3968 = vpack.c.b16 %v3124, %v3120
    %v3969 = vpack.c.b16 %v3125, %v3121
    %v3970 = vpack.c.b16 %v3126, %v3122
    %v3971 = vpack.c.b16 %v3127, %v3123
    %v3972 = vpack.c.b16 %v3132, %v3128
    %v3973 = vpack.c.b16 %v3133, %v3129
    %v3974 = vpack.c.b16 %v3134, %v3130
    %v3975 = vpack.c.b16 %v3135, %v3131
    %v3976 = vpack.c.b16 %v3140, %v3136
    %v3977 = vpack.c.b16 %v3141, %v3137
    %v3978 = vpack.c.b16 %v3142, %v3138
    %v3979 = vpack.c.b16 %v3143, %v3139
    %v3980 = vpack.c.b16 %v3148, %v3144
    %v3981 = vpack.c.b16 %v3149, %v3145
    %v3982 = vpack.c.b16 %v3150, %v3146
    %v3983 = vpack.c.b16 %v3151, %v3147
    %v3984 = vpack.c.b16 %v3156, %v3152
    %v3985 = vpack.c.b16 %v3157, %v3153
    %v3986 = vpack.c.b16 %v3158, %v3154
    %v3987 = vpack.c.b16 %v3159, %v3155
    %v3988 = vpack.c.b16 %v3164, %v3160
    %v3989 = vpack.c.b16 %v3165, %v3161
    %v3990 = vpack.c.b16 %v3166, %v3162
    %v3991 = vpack.c.b16 %v3167, %v3163
    %v3992 = vpack.c.b16 %v3172, %v3168
    %v3993 = vpack.c.b16 %v3173, %v3169
    %v3994 = vpack.c.b16 %v3174, %v3170
    %v3995 = vpack.c.b16 %v3175, %v3171
    %v3996 = vpack.c.b16 %v3180, %v3176
    %v3997 = vpack.c.b16 %v3181, %v3177
    %v3998 = vpack.c.b16 %v3182, %v3178
    %v3999 = vpack.c.b16 %v3183, %v3179
    %v4000 = vpack.c.b16 %v3188, %v3184
    %v4001 = vpack.c.b16 %v3189, %v3185
    %v4002 = vpack.c.b16 %v3190, %v3186
    %v4003 = vpack.c.b16 %v3191, %v3187
    %v4004 = vpack.c.b16 %v3196, %v3192
    %v4005 = vpack.c.b16 %v3197, %v3193
    %v4006 = vpack.c.b16 %v3198, %v3194
    %v4007 = vpack.c.b16 %v3199, %v3195
    %v4008 = vpack.c.b16 %v3204, %v3200
    %v4009 = vpack.c.b16 %v3205, %v3201
    %v4010 = vpack.c.b16 %v3206, %v3202
    %v4011 = vpack.c.b16 %v3207, %v3203
    %v4012 = vpack.c.b16 %v3212, %v3208
    %v4013 = vpack.c.b16 %v3213, %v3209
    %v4014 = vpack.c.b16 %v3214, %v3210
    %v4015 = vpack.c.b16 %v3215, %v3211
    %v4016 = vpack.c.b16 %v3220, %v3216
    %v4017 = vpack.c.b16 %v3221, %v3217
    %v4018 = vpack.c.b16 %v3222, %v3218
    %v4019 = vpack.c.b16 %v3223, %v3219
    %v4020 = vpack.c.b16 %v3228, %v3224
    %v4021 = vpack.c.b16 %v3229, %v3225
    %v4022 = vpack.c.b16 %v3230, %v3226
    %v4023 = vpack.c.b16 %v3231, %v3227
    %v4024 = vpack.c.b16 %v3236, %v3232
    %v4025 = vpack.c.b16 %v3237, %v3233
    %v4026 = vpack.c.b16 %v3238, %v3234
    %v4027 = vpack.c.b16 %v3239, %v3235
    %v4028 = vpack.c.b16 %v3244, %v3240
    %v4029 = vpack.c.b16 %v3245, %v3241
    %v4030 = vpack.c.b16 %v3246, %v3242
    %v4031 = vpack.c.b16 %v3247, %v3243
    %v4032 = vpack.c.b16 %v3252, %v3248
    %v4033 = vpack.c.b16 %v3253, %v3249
    %v4034 = vpack.c.b16 %v3254, %v3250
    %v4035 = vpack.c.b16 %v3255, %v3251
    %v4036 = vpack.c.b16 %v3260, %v3256
    %v4037 = vpack.c.b16 %v3261, %v3257
    %v4038 = vpack.c.b16 %v3262, %v3258
    %v4039 = vpack.c.b16 %v3263, %v3259
    %v4040 = vpack.c.b16 %v3268, %v3264
    %v4041 = vpack.c.b16 %v3269, %v3265
    %v4042 = vpack.c.b16 %v3270, %v3266
    %v4043 = vpack.c.b16 %v3271, %v3267
    %v4044 = vpack.c.b16 %v3276, %v3272
    %v4045 = vpack.c.b16 %v3277, %v3273
    %v4046 = vpack.c.b16 %v3278, %v3274
    %v4047 = vpack.c.b16 %v3279, %v3275
    %4816 = vmatprep.subr.bf16.mxu0 %v3309
    %4817 = vmatpush1.bf16.msra.mxu0 %v3308
    %4818 = vmatprep.subr.bf16.mxu0 %v3305
    %4819 = vmatpush1.bf16.msra.mxu0 %v3304
    %4820 = vmatprep.subr.bf16.mxu0 %v3301
    %4821 = vmatpush1.bf16.msra.mxu0 %v3300
    %4822 = vmatprep.subr.bf16.mxu0 %v3297
    %4823 = vmatpush1.bf16.msra.mxu0 %v3296
    %4824 = vmatprep.subr.bf16.mxu0 %v3293
    %4825 = vmatpush1.bf16.msra.mxu0 %v3292
    %4826 = vmatprep.subr.bf16.mxu0 %v3289
    %4827 = vmatpush1.bf16.msra.mxu0 %v3288
    %4828 = vmatprep.subr.bf16.mxu0 %v3285
    %4829 = vmatpush1.bf16.msra.mxu0 %v3284
    %4830 = vmatprep.subr.bf16.mxu0 %v3281
    %4831 = vmatpush1.bf16.msra.mxu0 %v3280
    %4832 = vmatprep.subr.bf16.mxu0 %v3341
    %4833 = vmatpush2.bf16.msra.mxu0 %v3340
    %4834 = vmatprep.subr.bf16.mxu0 %v3337
    %4835 = vmatpush2.bf16.msra.mxu0 %v3336
    %4836 = vmatprep.subr.bf16.mxu0 %v3333
    %4837 = vmatpush2.bf16.msra.mxu0 %v3332
    %4838 = vmatprep.subr.bf16.mxu0 %v3329
    %4839 = vmatpush2.bf16.msra.mxu0 %v3328
    %4840 = vmatprep.subr.bf16.mxu0 %v3325
    %4841 = vmatpush2.bf16.msra.mxu0 %v3324
    %4842 = vmatprep.subr.bf16.mxu0 %v3321
    %4843 = vmatpush2.bf16.msra.mxu0 %v3320
    %4844 = vmatprep.subr.bf16.mxu0 %v3317
    %4845 = vmatpush2.bf16.msra.mxu0 %v3316
    %4846 = vmatprep.subr.bf16.mxu0 %v3313
    %4847 = vmatpush2.bf16.msra.mxu0 %v3312
    %4848 = vmatprep.mubr.bf16.mxu0 %v929
    %4849 = vmatmul.mubr.bf16.gmra.mxu0 %v928
    %v4850 = vpop.f32.mrf.mxu0
    %v4851 = vadd.f32 %v875, %v4850
    %v4852 = vpop.f32.mrf.mxu0
    %v4853 = vadd.f32 %v879, %v4852
    %v4854 = vpop.f32.mrf.mxu0
    %v4855 = vpop.f32.mrf.mxu0
    %4856 = vdwg.mxu0
    %4857 = vmatprep.subr.bf16.mxu0 %v3373
    %4858 = vmatpush1.bf16.msra.mxu0 %v3372
    %4859 = vmatprep.subr.bf16.mxu0 %v3369
    %4860 = vmatpush1.bf16.msra.mxu0 %v3368
    %4861 = vmatprep.subr.bf16.mxu0 %v3365
    %4862 = vmatpush1.bf16.msra.mxu0 %v3364
    %4863 = vmatprep.subr.bf16.mxu0 %v3361
    %4864 = vmatpush1.bf16.msra.mxu0 %v3360
    %4865 = vmatprep.subr.bf16.mxu0 %v3357
    %4866 = vmatpush1.bf16.msra.mxu0 %v3356
    %4867 = vmatprep.subr.bf16.mxu0 %v3353
    %4868 = vmatpush1.bf16.msra.mxu0 %v3352
    %4869 = vmatprep.subr.bf16.mxu0 %v3349
    %4870 = vmatpush1.bf16.msra.mxu0 %v3348
    %4871 = vmatprep.subr.bf16.mxu0 %v3345
    %4872 = vmatpush1.bf16.msra.mxu0 %v3344
    %4873 = vmatprep.subr.bf16.mxu0 %v3405
    %4874 = vmatpush2.bf16.msra.mxu0 %v3404
    %4875 = vmatprep.subr.bf16.mxu0 %v3401
    %4876 = vmatpush2.bf16.msra.mxu0 %v3400
    %4877 = vmatprep.subr.bf16.mxu0 %v3397
    %4878 = vmatpush2.bf16.msra.mxu0 %v3396
    %4879 = vmatprep.subr.bf16.mxu0 %v3393
    %4880 = vmatpush2.bf16.msra.mxu0 %v3392
    %4881 = vmatprep.subr.bf16.mxu0 %v3389
    %4882 = vmatpush2.bf16.msra.mxu0 %v3388
    %4883 = vmatprep.subr.bf16.mxu0 %v3385
    %4884 = vmatpush2.bf16.msra.mxu0 %v3384
    %4885 = vmatprep.subr.bf16.mxu0 %v3381
    %4886 = vmatpush2.bf16.msra.mxu0 %v3380
    %4887 = vmatprep.subr.bf16.mxu0 %v3377
    %4888 = vmatpush2.bf16.msra.mxu0 %v3376
    %4889 = vmatprep.mubr.bf16.mxu0 %v931
    %4890 = vmatmul.mubr.bf16.gmra.mxu0 %v930
    %v4891 = vpop.f32.mrf.mxu0
    %v4892 = vadd.f32 %v4851, %v4891
    %v4893 = vpop.f32.mrf.mxu0
    %v4894 = vadd.f32 %v4853, %v4893
    %v4895 = vpop.f32.mrf.mxu0
    %v4896 = vpop.f32.mrf.mxu0
    %4897 = vdwg.mxu0
    %4898 = vmatprep.subr.bf16.mxu0 %v3437
    %4899 = vmatpush1.bf16.msra.mxu0 %v3436
    %4900 = vmatprep.subr.bf16.mxu0 %v3433
    %4901 = vmatpush1.bf16.msra.mxu0 %v3432
    %4902 = vmatprep.subr.bf16.mxu0 %v3429
    %4903 = vmatpush1.bf16.msra.mxu0 %v3428
    %4904 = vmatprep.subr.bf16.mxu0 %v3425
    %4905 = vmatpush1.bf16.msra.mxu0 %v3424
    %4906 = vmatprep.subr.bf16.mxu0 %v3421
    %4907 = vmatpush1.bf16.msra.mxu0 %v3420
    %4908 = vmatprep.subr.bf16.mxu0 %v3417
    %4909 = vmatpush1.bf16.msra.mxu0 %v3416
    %4910 = vmatprep.subr.bf16.mxu0 %v3413
    %4911 = vmatpush1.bf16.msra.mxu0 %v3412
    %4912 = vmatprep.subr.bf16.mxu0 %v3409
    %4913 = vmatpush1.bf16.msra.mxu0 %v3408
    %4914 = vmatprep.subr.bf16.mxu0 %v3469
    %4915 = vmatpush2.bf16.msra.mxu0 %v3468
    %4916 = vmatprep.subr.bf16.mxu0 %v3465
    %4917 = vmatpush2.bf16.msra.mxu0 %v3464
    %4918 = vmatprep.subr.bf16.mxu0 %v3461
    %4919 = vmatpush2.bf16.msra.mxu0 %v3460
    %4920 = vmatprep.subr.bf16.mxu0 %v3457
    %4921 = vmatpush2.bf16.msra.mxu0 %v3456
    %4922 = vmatprep.subr.bf16.mxu0 %v3453
    %4923 = vmatpush2.bf16.msra.mxu0 %v3452
    %4924 = vmatprep.subr.bf16.mxu0 %v3449
    %4925 = vmatpush2.bf16.msra.mxu0 %v3448
    %4926 = vmatprep.subr.bf16.mxu0 %v3445
    %4927 = vmatpush2.bf16.msra.mxu0 %v3444
    %4928 = vmatprep.subr.bf16.mxu0 %v3441
    %4929 = vmatpush2.bf16.msra.mxu0 %v3440
    %4930 = vmatprep.mubr.bf16.mxu0 %v933
    %4931 = vmatmul.mubr.bf16.gmra.mxu0 %v932
    %v4932 = vpop.f32.mrf.mxu0
    %v4933 = vadd.f32 %v4892, %v4932
    %v4934 = vpop.f32.mrf.mxu0
    %v4935 = vadd.f32 %v4894, %v4934
    %v4936 = vpop.f32.mrf.mxu0
    %v4937 = vpop.f32.mrf.mxu0
    %4938 = vdwg.mxu0
    %4939 = vmatprep.subr.bf16.mxu0 %v3501
    %4940 = vmatpush1.bf16.msra.mxu0 %v3500
    %4941 = vmatprep.subr.bf16.mxu0 %v3497
    %4942 = vmatpush1.bf16.msra.mxu0 %v3496
    %4943 = vmatprep.subr.bf16.mxu0 %v3493
    %4944 = vmatpush1.bf16.msra.mxu0 %v3492
    %4945 = vmatprep.subr.bf16.mxu0 %v3489
    %4946 = vmatpush1.bf16.msra.mxu0 %v3488
    %4947 = vmatprep.subr.bf16.mxu0 %v3485
    %4948 = vmatpush1.bf16.msra.mxu0 %v3484
    %4949 = vmatprep.subr.bf16.mxu0 %v3481
    %4950 = vmatpush1.bf16.msra.mxu0 %v3480
    %4951 = vmatprep.subr.bf16.mxu0 %v3477
    %4952 = vmatpush1.bf16.msra.mxu0 %v3476
    %4953 = vmatprep.subr.bf16.mxu0 %v3473
    %4954 = vmatpush1.bf16.msra.mxu0 %v3472
    %4955 = vmatprep.subr.bf16.mxu0 %v3533
    %4956 = vmatpush2.bf16.msra.mxu0 %v3532
    %4957 = vmatprep.subr.bf16.mxu0 %v3529
    %4958 = vmatpush2.bf16.msra.mxu0 %v3528
    %4959 = vmatprep.subr.bf16.mxu0 %v3525
    %4960 = vmatpush2.bf16.msra.mxu0 %v3524
    %4961 = vmatprep.subr.bf16.mxu0 %v3521
    %4962 = vmatpush2.bf16.msra.mxu0 %v3520
    %4963 = vmatprep.subr.bf16.mxu0 %v3517
    %4964 = vmatpush2.bf16.msra.mxu0 %v3516
    %4965 = vmatprep.subr.bf16.mxu0 %v3513
    %4966 = vmatpush2.bf16.msra.mxu0 %v3512
    %4967 = vmatprep.subr.bf16.mxu0 %v3509
    %4968 = vmatpush2.bf16.msra.mxu0 %v3508
    %4969 = vmatprep.subr.bf16.mxu0 %v3505
    %4970 = vmatpush2.bf16.msra.mxu0 %v3504
    %4971 = vmatprep.mubr.bf16.mxu0 %v935
    %4972 = vmatmul.mubr.bf16.gmra.mxu0 %v934
    %v4973 = vpop.f32.mrf.mxu0
    %v4974 = vadd.f32 %v4933, %v4973
    %v4975 = vpop.f32.mrf.mxu0
    %v4976 = vadd.f32 %v4935, %v4975
    %v4977 = vpop.f32.mrf.mxu0
    %v4978 = vpop.f32.mrf.mxu0
    %4979 = vdwg.mxu0
    %4980 = vmatprep.subr.bf16.mxu0 %v3565
    %4981 = vmatpush1.bf16.msra.mxu0 %v3564
    %4982 = vmatprep.subr.bf16.mxu0 %v3561
    %4983 = vmatpush1.bf16.msra.mxu0 %v3560
    %4984 = vmatprep.subr.bf16.mxu0 %v3557
    %4985 = vmatpush1.bf16.msra.mxu0 %v3556
    %4986 = vmatprep.subr.bf16.mxu0 %v3553
    %4987 = vmatpush1.bf16.msra.mxu0 %v3552
    %4988 = vmatprep.subr.bf16.mxu0 %v3549
    %4989 = vmatpush1.bf16.msra.mxu0 %v3548
    %4990 = vmatprep.subr.bf16.mxu0 %v3545
    %4991 = vmatpush1.bf16.msra.mxu0 %v3544
    %4992 = vmatprep.subr.bf16.mxu0 %v3541
    %4993 = vmatpush1.bf16.msra.mxu0 %v3540
    %4994 = vmatprep.subr.bf16.mxu0 %v3537
    %4995 = vmatpush1.bf16.msra.mxu0 %v3536
    %4996 = vmatprep.subr.bf16.mxu0 %v3597
    %4997 = vmatpush2.bf16.msra.mxu0 %v3596
    %4998 = vmatprep.subr.bf16.mxu0 %v3593
    %4999 = vmatpush2.bf16.msra.mxu0 %v3592
    %5000 = vmatprep.subr.bf16.mxu0 %v3589
    %5001 = vmatpush2.bf16.msra.mxu0 %v3588
    %5002 = vmatprep.subr.bf16.mxu0 %v3585
    %5003 = vmatpush2.bf16.msra.mxu0 %v3584
    %5004 = vmatprep.subr.bf16.mxu0 %v3581
    %5005 = vmatpush2.bf16.msra.mxu0 %v3580
    %5006 = vmatprep.subr.bf16.mxu0 %v3577
    %5007 = vmatpush2.bf16.msra.mxu0 %v3576
    %5008 = vmatprep.subr.bf16.mxu0 %v3573
    %5009 = vmatpush2.bf16.msra.mxu0 %v3572
    %5010 = vmatprep.subr.bf16.mxu0 %v3569
    %5011 = vmatpush2.bf16.msra.mxu0 %v3568
    %5012 = vmatprep.mubr.bf16.mxu0 %v937
    %5013 = vmatmul.mubr.bf16.gmra.mxu0 %v936
    %v5014 = vpop.f32.mrf.mxu0
    %v5015 = vadd.f32 %v4974, %v5014
    %v5016 = vpop.f32.mrf.mxu0
    %v5017 = vadd.f32 %v4976, %v5016
    %v5018 = vpop.f32.mrf.mxu0
    %v5019 = vpop.f32.mrf.mxu0
    %5020 = vdwg.mxu0
    %5021 = vmatprep.subr.bf16.mxu0 %v3629
    %5022 = vmatpush1.bf16.msra.mxu0 %v3628
    %5023 = vmatprep.subr.bf16.mxu0 %v3625
    %5024 = vmatpush1.bf16.msra.mxu0 %v3624
    %5025 = vmatprep.subr.bf16.mxu0 %v3621
    %5026 = vmatpush1.bf16.msra.mxu0 %v3620
    %5027 = vmatprep.subr.bf16.mxu0 %v3617
    %5028 = vmatpush1.bf16.msra.mxu0 %v3616
    %5029 = vmatprep.subr.bf16.mxu0 %v3613
    %5030 = vmatpush1.bf16.msra.mxu0 %v3612
    %5031 = vmatprep.subr.bf16.mxu0 %v3609
    %5032 = vmatpush1.bf16.msra.mxu0 %v3608
    %5033 = vmatprep.subr.bf16.mxu0 %v3605
    %5034 = vmatpush1.bf16.msra.mxu0 %v3604
    %5035 = vmatprep.subr.bf16.mxu0 %v3601
    %5036 = vmatpush1.bf16.msra.mxu0 %v3600
    %5037 = vmatprep.subr.bf16.mxu0 %v3661
    %5038 = vmatpush2.bf16.msra.mxu0 %v3660
    %5039 = vmatprep.subr.bf16.mxu0 %v3657
    %5040 = vmatpush2.bf16.msra.mxu0 %v3656
    %5041 = vmatprep.subr.bf16.mxu0 %v3653
    %5042 = vmatpush2.bf16.msra.mxu0 %v3652
    %5043 = vmatprep.subr.bf16.mxu0 %v3649
    %5044 = vmatpush2.bf16.msra.mxu0 %v3648
    %5045 = vmatprep.subr.bf16.mxu0 %v3645
    %5046 = vmatpush2.bf16.msra.mxu0 %v3644
    %5047 = vmatprep.subr.bf16.mxu0 %v3641
    %5048 = vmatpush2.bf16.msra.mxu0 %v3640
    %5049 = vmatprep.subr.bf16.mxu0 %v3637
    %5050 = vmatpush2.bf16.msra.mxu0 %v3636
    %5051 = vmatprep.subr.bf16.mxu0 %v3633
    %5052 = vmatpush2.bf16.msra.mxu0 %v3632
    %5053 = vmatprep.mubr.bf16.mxu0 %v939
    %5054 = vmatmul.mubr.bf16.gmra.mxu0 %v938
    %v5055 = vpop.f32.mrf.mxu0
    %v5056 = vadd.f32 %v5015, %v5055
    %v5057 = vpop.f32.mrf.mxu0
    %v5058 = vadd.f32 %v5017, %v5057
    %v5059 = vpop.f32.mrf.mxu0
    %v5060 = vpop.f32.mrf.mxu0
    %5061 = vdwg.mxu0
    %5062 = vmatprep.subr.bf16.mxu0 %v3693
    %5063 = vmatpush1.bf16.msra.mxu0 %v3692
    %5064 = vmatprep.subr.bf16.mxu0 %v3689
    %5065 = vmatpush1.bf16.msra.mxu0 %v3688
    %5066 = vmatprep.subr.bf16.mxu0 %v3685
    %5067 = vmatpush1.bf16.msra.mxu0 %v3684
    %5068 = vmatprep.subr.bf16.mxu0 %v3681
    %5069 = vmatpush1.bf16.msra.mxu0 %v3680
    %5070 = vmatprep.subr.bf16.mxu0 %v3677
    %5071 = vmatpush1.bf16.msra.mxu0 %v3676
    %5072 = vmatprep.subr.bf16.mxu0 %v3673
    %5073 = vmatpush1.bf16.msra.mxu0 %v3672
    %5074 = vmatprep.subr.bf16.mxu0 %v3669
    %5075 = vmatpush1.bf16.msra.mxu0 %v3668
    %5076 = vmatprep.subr.bf16.mxu0 %v3665
    %5077 = vmatpush1.bf16.msra.mxu0 %v3664
    %5078 = vmatprep.subr.bf16.mxu0 %v3725
    %5079 = vmatpush2.bf16.msra.mxu0 %v3724
    %5080 = vmatprep.subr.bf16.mxu0 %v3721
    %5081 = vmatpush2.bf16.msra.mxu0 %v3720
    %5082 = vmatprep.subr.bf16.mxu0 %v3717
    %5083 = vmatpush2.bf16.msra.mxu0 %v3716
    %5084 = vmatprep.subr.bf16.mxu0 %v3713
    %5085 = vmatpush2.bf16.msra.mxu0 %v3712
    %5086 = vmatprep.subr.bf16.mxu0 %v3709
    %5087 = vmatpush2.bf16.msra.mxu0 %v3708
    %5088 = vmatprep.subr.bf16.mxu0 %v3705
    %5089 = vmatpush2.bf16.msra.mxu0 %v3704
    %5090 = vmatprep.subr.bf16.mxu0 %v3701
    %5091 = vmatpush2.bf16.msra.mxu0 %v3700
    %5092 = vmatprep.subr.bf16.mxu0 %v3697
    %5093 = vmatpush2.bf16.msra.mxu0 %v3696
    %5094 = vmatprep.mubr.bf16.mxu0 %v941
    %5095 = vmatmul.mubr.bf16.gmra.mxu0 %v940
    %v5096 = vpop.f32.mrf.mxu0
    %v5097 = vadd.f32 %v5056, %v5096
    %v5098 = vpop.f32.mrf.mxu0
    %v5099 = vadd.f32 %v5058, %v5098
    %v5100 = vpop.f32.mrf.mxu0
    %v5101 = vpop.f32.mrf.mxu0
    %5102 = vdwg.mxu0
    %5103 = vmatprep.subr.bf16.mxu0 %v3757
    %5104 = vmatpush1.bf16.msra.mxu0 %v3756
    %5105 = vmatprep.subr.bf16.mxu0 %v3753
    %5106 = vmatpush1.bf16.msra.mxu0 %v3752
    %5107 = vmatprep.subr.bf16.mxu0 %v3749
    %5108 = vmatpush1.bf16.msra.mxu0 %v3748
    %5109 = vmatprep.subr.bf16.mxu0 %v3745
    %5110 = vmatpush1.bf16.msra.mxu0 %v3744
    %5111 = vmatprep.subr.bf16.mxu0 %v3741
    %5112 = vmatpush1.bf16.msra.mxu0 %v3740
    %5113 = vmatprep.subr.bf16.mxu0 %v3737
    %5114 = vmatpush1.bf16.msra.mxu0 %v3736
    %5115 = vmatprep.subr.bf16.mxu0 %v3733
    %5116 = vmatpush1.bf16.msra.mxu0 %v3732
    %5117 = vmatprep.subr.bf16.mxu0 %v3729
    %5118 = vmatpush1.bf16.msra.mxu0 %v3728
    %5119 = vmatprep.subr.bf16.mxu0 %v3789
    %5120 = vmatpush2.bf16.msra.mxu0 %v3788
    %5121 = vmatprep.subr.bf16.mxu0 %v3785
    %5122 = vmatpush2.bf16.msra.mxu0 %v3784
    %5123 = vmatprep.subr.bf16.mxu0 %v3781
    %5124 = vmatpush2.bf16.msra.mxu0 %v3780
    %5125 = vmatprep.subr.bf16.mxu0 %v3777
    %5126 = vmatpush2.bf16.msra.mxu0 %v3776
    %5127 = vmatprep.subr.bf16.mxu0 %v3773
    %5128 = vmatpush2.bf16.msra.mxu0 %v3772
    %5129 = vmatprep.subr.bf16.mxu0 %v3769
    %5130 = vmatpush2.bf16.msra.mxu0 %v3768
    %5131 = vmatprep.subr.bf16.mxu0 %v3765
    %5132 = vmatpush2.bf16.msra.mxu0 %v3764
    %5133 = vmatprep.subr.bf16.mxu0 %v3761
    %5134 = vmatpush2.bf16.msra.mxu0 %v3760
    %5135 = vmatprep.mubr.bf16.mxu0 %v943
    %5136 = vmatmul.mubr.bf16.gmra.mxu0 %v942
    %v5137 = vpop.f32.mrf.mxu0
    %v5138 = vadd.f32 %v5097, %v5137
    %v5139 = vpop.f32.mrf.mxu0
    %v5140 = vadd.f32 %v5099, %v5139
    %v5141 = vpop.f32.mrf.mxu0
    %v5142 = vpop.f32.mrf.mxu0
    %5143 = vdwg.mxu0
    %5144 = vmatprep.subr.bf16.mxu0 %v3821
    %5145 = vmatpush1.bf16.msra.mxu0 %v3820
    %5146 = vmatprep.subr.bf16.mxu0 %v3817
    %5147 = vmatpush1.bf16.msra.mxu0 %v3816
    %5148 = vmatprep.subr.bf16.mxu0 %v3813
    %5149 = vmatpush1.bf16.msra.mxu0 %v3812
    %5150 = vmatprep.subr.bf16.mxu0 %v3809
    %5151 = vmatpush1.bf16.msra.mxu0 %v3808
    %5152 = vmatprep.subr.bf16.mxu0 %v3805
    %5153 = vmatpush1.bf16.msra.mxu0 %v3804
    %5154 = vmatprep.subr.bf16.mxu0 %v3801
    %5155 = vmatpush1.bf16.msra.mxu0 %v3800
    %5156 = vmatprep.subr.bf16.mxu0 %v3797
    %5157 = vmatpush1.bf16.msra.mxu0 %v3796
    %5158 = vmatprep.subr.bf16.mxu0 %v3793
    %5159 = vmatpush1.bf16.msra.mxu0 %v3792
    %5160 = vmatprep.subr.bf16.mxu0 %v3853
    %5161 = vmatpush2.bf16.msra.mxu0 %v3852
    %5162 = vmatprep.subr.bf16.mxu0 %v3849
    %5163 = vmatpush2.bf16.msra.mxu0 %v3848
    %5164 = vmatprep.subr.bf16.mxu0 %v3845
    %5165 = vmatpush2.bf16.msra.mxu0 %v3844
    %5166 = vmatprep.subr.bf16.mxu0 %v3841
    %5167 = vmatpush2.bf16.msra.mxu0 %v3840
    %5168 = vmatprep.subr.bf16.mxu0 %v3837
    %5169 = vmatpush2.bf16.msra.mxu0 %v3836
    %5170 = vmatprep.subr.bf16.mxu0 %v3833
    %5171 = vmatpush2.bf16.msra.mxu0 %v3832
    %5172 = vmatprep.subr.bf16.mxu0 %v3829
    %5173 = vmatpush2.bf16.msra.mxu0 %v3828
    %5174 = vmatprep.subr.bf16.mxu0 %v3825
    %5175 = vmatpush2.bf16.msra.mxu0 %v3824
    %5176 = vmatprep.mubr.bf16.mxu0 %v945
    %5177 = vmatmul.mubr.bf16.gmra.mxu0 %v944
    %v5178 = vpop.f32.mrf.mxu0
    %v5179 = vadd.f32 %v5138, %v5178
    %v5180 = vpop.f32.mrf.mxu0
    %v5181 = vadd.f32 %v5140, %v5180
    %v5182 = vpop.f32.mrf.mxu0
    %v5183 = vpop.f32.mrf.mxu0
    %5184 = vdwg.mxu0
    %5185 = vmatprep.subr.bf16.mxu0 %v3885
    %5186 = vmatpush1.bf16.msra.mxu0 %v3884
    %5187 = vmatprep.subr.bf16.mxu0 %v3881
    %5188 = vmatpush1.bf16.msra.mxu0 %v3880
    %5189 = vmatprep.subr.bf16.mxu0 %v3877
    %5190 = vmatpush1.bf16.msra.mxu0 %v3876
    %5191 = vmatprep.subr.bf16.mxu0 %v3873
    %5192 = vmatpush1.bf16.msra.mxu0 %v3872
    %5193 = vmatprep.subr.bf16.mxu0 %v3869
    %5194 = vmatpush1.bf16.msra.mxu0 %v3868
    %5195 = vmatprep.subr.bf16.mxu0 %v3865
    %5196 = vmatpush1.bf16.msra.mxu0 %v3864
    %5197 = vmatprep.subr.bf16.mxu0 %v3861
    %5198 = vmatpush1.bf16.msra.mxu0 %v3860
    %5199 = vmatprep.subr.bf16.mxu0 %v3857
    %5200 = vmatpush1.bf16.msra.mxu0 %v3856
    %5201 = vmatprep.subr.bf16.mxu0 %v3917
    %5202 = vmatpush2.bf16.msra.mxu0 %v3916
    %5203 = vmatprep.subr.bf16.mxu0 %v3913
    %5204 = vmatpush2.bf16.msra.mxu0 %v3912
    %5205 = vmatprep.subr.bf16.mxu0 %v3909
    %5206 = vmatpush2.bf16.msra.mxu0 %v3908
    %5207 = vmatprep.subr.bf16.mxu0 %v3905
    %5208 = vmatpush2.bf16.msra.mxu0 %v3904
    %5209 = vmatprep.subr.bf16.mxu0 %v3901
    %5210 = vmatpush2.bf16.msra.mxu0 %v3900
    %5211 = vmatprep.subr.bf16.mxu0 %v3897
    %5212 = vmatpush2.bf16.msra.mxu0 %v3896
    %5213 = vmatprep.subr.bf16.mxu0 %v3893
    %5214 = vmatpush2.bf16.msra.mxu0 %v3892
    %5215 = vmatprep.subr.bf16.mxu0 %v3889
    %5216 = vmatpush2.bf16.msra.mxu0 %v3888
    %5217 = vmatprep.mubr.bf16.mxu0 %v947
    %5218 = vmatmul.mubr.bf16.gmra.mxu0 %v946
    %v5219 = vpop.f32.mrf.mxu0
    %v5220 = vadd.f32 %v5179, %v5219
    %v5221 = vpop.f32.mrf.mxu0
    %v5222 = vadd.f32 %v5181, %v5221
    %v5223 = vpop.f32.mrf.mxu0
    %v5224 = vpop.f32.mrf.mxu0
    %5225 = vdwg.mxu0
    %5226 = vmatprep.subr.bf16.mxu0 %v3949
    %5227 = vmatpush1.bf16.msra.mxu0 %v3948
    %5228 = vmatprep.subr.bf16.mxu0 %v3945
    %5229 = vmatpush1.bf16.msra.mxu0 %v3944
    %5230 = vmatprep.subr.bf16.mxu0 %v3941
    %5231 = vmatpush1.bf16.msra.mxu0 %v3940
    %5232 = vmatprep.subr.bf16.mxu0 %v3937
    %5233 = vmatpush1.bf16.msra.mxu0 %v3936
    %5234 = vmatprep.subr.bf16.mxu0 %v3933
    %5235 = vmatpush1.bf16.msra.mxu0 %v3932
    %5236 = vmatprep.subr.bf16.mxu0 %v3929
    %5237 = vmatpush1.bf16.msra.mxu0 %v3928
    %5238 = vmatprep.subr.bf16.mxu0 %v3925
    %5239 = vmatpush1.bf16.msra.mxu0 %v3924
    %5240 = vmatprep.subr.bf16.mxu0 %v3921
    %5241 = vmatpush1.bf16.msra.mxu0 %v3920
    %5242 = vmatprep.subr.bf16.mxu0 %v3981
    %5243 = vmatpush2.bf16.msra.mxu0 %v3980
    %5244 = vmatprep.subr.bf16.mxu0 %v3977
    %5245 = vmatpush2.bf16.msra.mxu0 %v3976
    %5246 = vmatprep.subr.bf16.mxu0 %v3973
    %5247 = vmatpush2.bf16.msra.mxu0 %v3972
    %5248 = vmatprep.subr.bf16.mxu0 %v3969
    %5249 = vmatpush2.bf16.msra.mxu0 %v3968
    %5250 = vmatprep.subr.bf16.mxu0 %v3965
    %5251 = vmatpush2.bf16.msra.mxu0 %v3964
    %5252 = vmatprep.subr.bf16.mxu0 %v3961
    %5253 = vmatpush2.bf16.msra.mxu0 %v3960
    %5254 = vmatprep.subr.bf16.mxu0 %v3957
    %5255 = vmatpush2.bf16.msra.mxu0 %v3956
    %5256 = vmatprep.subr.bf16.mxu0 %v3953
    %5257 = vmatpush2.bf16.msra.mxu0 %v3952
    %5258 = vmatprep.mubr.bf16.mxu0 %v949
    %5259 = vmatmul.mubr.bf16.gmra.mxu0 %v948
    %v5260 = vpop.f32.mrf.mxu0
    %v5261 = vadd.f32 %v5220, %v5260
    %v5262 = vpop.f32.mrf.mxu0
    %v5263 = vadd.f32 %v5222, %v5262
    %v5264 = vpop.f32.mrf.mxu0
    %v5265 = vpop.f32.mrf.mxu0
    %5266 = vdwg.mxu0
    %5267 = vmatprep.subr.bf16.mxu0 %v4013
    %5268 = vmatpush1.bf16.msra.mxu0 %v4012
    %5269 = vmatprep.subr.bf16.mxu0 %v4009
    %5270 = vmatpush1.bf16.msra.mxu0 %v4008
    %5271 = vmatprep.subr.bf16.mxu0 %v4005
    %5272 = vmatpush1.bf16.msra.mxu0 %v4004
    %5273 = vmatprep.subr.bf16.mxu0 %v4001
    %5274 = vmatpush1.bf16.msra.mxu0 %v4000
    %5275 = vmatprep.subr.bf16.mxu0 %v3997
    %5276 = vmatpush1.bf16.msra.mxu0 %v3996
    %5277 = vmatprep.subr.bf16.mxu0 %v3993
    %5278 = vmatpush1.bf16.msra.mxu0 %v3992
    %5279 = vmatprep.subr.bf16.mxu0 %v3989
    %5280 = vmatpush1.bf16.msra.mxu0 %v3988
    %5281 = vmatprep.subr.bf16.mxu0 %v3985
    %5282 = vmatpush1.bf16.msra.mxu0 %v3984
    %5283 = vmatprep.subr.bf16.mxu0 %v4045
    %5284 = vmatpush2.bf16.msra.mxu0 %v4044
    %5285 = vmatprep.subr.bf16.mxu0 %v4041
    %5286 = vmatpush2.bf16.msra.mxu0 %v4040
    %5287 = vmatprep.subr.bf16.mxu0 %v4037
    %5288 = vmatpush2.bf16.msra.mxu0 %v4036
    %5289 = vmatprep.subr.bf16.mxu0 %v4033
    %5290 = vmatpush2.bf16.msra.mxu0 %v4032
    %5291 = vmatprep.subr.bf16.mxu0 %v4029
    %5292 = vmatpush2.bf16.msra.mxu0 %v4028
    %5293 = vmatprep.subr.bf16.mxu0 %v4025
    %5294 = vmatpush2.bf16.msra.mxu0 %v4024
    %5295 = vmatprep.subr.bf16.mxu0 %v4021
    %5296 = vmatpush2.bf16.msra.mxu0 %v4020
    %5297 = vmatprep.subr.bf16.mxu0 %v4017
    %5298 = vmatpush2.bf16.msra.mxu0 %v4016
    %5299 = vmatprep.mubr.bf16.mxu0 %v951
    %5300 = vmatmul.mubr.bf16.gmra.mxu0 %v950
    %v5301 = vpop.f32.mrf.mxu0
    %v5302 = vadd.f32 %v5261, %v5301
    %v5303 = vpop.f32.mrf.mxu0
    %v5304 = vadd.f32 %v5263, %v5303
    %v5305 = vpop.f32.mrf.mxu0
    %v5306 = vpop.f32.mrf.mxu0
    %5307 = vdwg.mxu0
    %5308 = vmatprep.subr.bf16.mxu0 %v3311
    %5309 = vmatpush1.bf16.msra.mxu0 %v3310
    %5310 = vmatprep.subr.bf16.mxu0 %v3307
    %5311 = vmatpush1.bf16.msra.mxu0 %v3306
    %5312 = vmatprep.subr.bf16.mxu0 %v3303
    %5313 = vmatpush1.bf16.msra.mxu0 %v3302
    %5314 = vmatprep.subr.bf16.mxu0 %v3299
    %5315 = vmatpush1.bf16.msra.mxu0 %v3298
    %5316 = vmatprep.subr.bf16.mxu0 %v3295
    %5317 = vmatpush1.bf16.msra.mxu0 %v3294
    %5318 = vmatprep.subr.bf16.mxu0 %v3291
    %5319 = vmatpush1.bf16.msra.mxu0 %v3290
    %5320 = vmatprep.subr.bf16.mxu0 %v3287
    %5321 = vmatpush1.bf16.msra.mxu0 %v3286
    %5322 = vmatprep.subr.bf16.mxu0 %v3283
    %5323 = vmatpush1.bf16.msra.mxu0 %v3282
    %5324 = vmatprep.subr.bf16.mxu0 %v3343
    %5325 = vmatpush2.bf16.msra.mxu0 %v3342
    %5326 = vmatprep.subr.bf16.mxu0 %v3339
    %5327 = vmatpush2.bf16.msra.mxu0 %v3338
    %5328 = vmatprep.subr.bf16.mxu0 %v3335
    %5329 = vmatpush2.bf16.msra.mxu0 %v3334
    %5330 = vmatprep.subr.bf16.mxu0 %v3331
    %5331 = vmatpush2.bf16.msra.mxu0 %v3330
    %5332 = vmatprep.subr.bf16.mxu0 %v3327
    %5333 = vmatpush2.bf16.msra.mxu0 %v3326
    %5334 = vmatprep.subr.bf16.mxu0 %v3323
    %5335 = vmatpush2.bf16.msra.mxu0 %v3322
    %5336 = vmatprep.subr.bf16.mxu0 %v3319
    %5337 = vmatpush2.bf16.msra.mxu0 %v3318
    %5338 = vmatprep.subr.bf16.mxu0 %v3315
    %5339 = vmatpush2.bf16.msra.mxu0 %v3314
    %5340 = vmatprep.mubr.bf16.mxu0 %v929
    %5341 = vmatmul.mubr.bf16.gmra.mxu0 %v928
    %v5342 = vpop.f32.mrf.mxu0
    %v5343 = vadd.f32 %v883, %v5342
    %v5344 = vpop.f32.mrf.mxu0
    %v5345 = vadd.f32 %v887, %v5344
    %v5346 = vpop.f32.mrf.mxu0
    %v5347 = vpop.f32.mrf.mxu0
    %5348 = vdwg.mxu0
    %5349 = vmatprep.subr.bf16.mxu0 %v3375
    %5350 = vmatpush1.bf16.msra.mxu0 %v3374
    %5351 = vmatprep.subr.bf16.mxu0 %v3371
    %5352 = vmatpush1.bf16.msra.mxu0 %v3370
    %5353 = vmatprep.subr.bf16.mxu0 %v3367
    %5354 = vmatpush1.bf16.msra.mxu0 %v3366
    %5355 = vmatprep.subr.bf16.mxu0 %v3363
    %5356 = vmatpush1.bf16.msra.mxu0 %v3362
    %5357 = vmatprep.subr.bf16.mxu0 %v3359
    %5358 = vmatpush1.bf16.msra.mxu0 %v3358
    %5359 = vmatprep.subr.bf16.mxu0 %v3355
    %5360 = vmatpush1.bf16.msra.mxu0 %v3354
    %5361 = vmatprep.subr.bf16.mxu0 %v3351
    %5362 = vmatpush1.bf16.msra.mxu0 %v3350
    %5363 = vmatprep.subr.bf16.mxu0 %v3347
    %5364 = vmatpush1.bf16.msra.mxu0 %v3346
    %5365 = vmatprep.subr.bf16.mxu0 %v3407
    %5366 = vmatpush2.bf16.msra.mxu0 %v3406
    %5367 = vmatprep.subr.bf16.mxu0 %v3403
    %5368 = vmatpush2.bf16.msra.mxu0 %v3402
    %5369 = vmatprep.subr.bf16.mxu0 %v3399
    %5370 = vmatpush2.bf16.msra.mxu0 %v3398
    %5371 = vmatprep.subr.bf16.mxu0 %v3395
    %5372 = vmatpush2.bf16.msra.mxu0 %v3394
    %5373 = vmatprep.subr.bf16.mxu0 %v3391
    %5374 = vmatpush2.bf16.msra.mxu0 %v3390
    %5375 = vmatprep.subr.bf16.mxu0 %v3387
    %5376 = vmatpush2.bf16.msra.mxu0 %v3386
    %5377 = vmatprep.subr.bf16.mxu0 %v3383
    %5378 = vmatpush2.bf16.msra.mxu0 %v3382
    %5379 = vmatprep.subr.bf16.mxu0 %v3379
    %5380 = vmatpush2.bf16.msra.mxu0 %v3378
    %5381 = vmatprep.mubr.bf16.mxu0 %v931
    %5382 = vmatmul.mubr.bf16.gmra.mxu0 %v930
    %v5383 = vpop.f32.mrf.mxu0
    %v5384 = vadd.f32 %v5343, %v5383
    %v5385 = vpop.f32.mrf.mxu0
    %v5386 = vadd.f32 %v5345, %v5385
    %v5387 = vpop.f32.mrf.mxu0
    %v5388 = vpop.f32.mrf.mxu0
    %5389 = vdwg.mxu0
    %5390 = vmatprep.subr.bf16.mxu0 %v3439
    %5391 = vmatpush1.bf16.msra.mxu0 %v3438
    %5392 = vmatprep.subr.bf16.mxu0 %v3435
    %5393 = vmatpush1.bf16.msra.mxu0 %v3434
    %5394 = vmatprep.subr.bf16.mxu0 %v3431
    %5395 = vmatpush1.bf16.msra.mxu0 %v3430
    %5396 = vmatprep.subr.bf16.mxu0 %v3427
    %5397 = vmatpush1.bf16.msra.mxu0 %v3426
    %5398 = vmatprep.subr.bf16.mxu0 %v3423
    %5399 = vmatpush1.bf16.msra.mxu0 %v3422
    %5400 = vmatprep.subr.bf16.mxu0 %v3419
    %5401 = vmatpush1.bf16.msra.mxu0 %v3418
    %5402 = vmatprep.subr.bf16.mxu0 %v3415
    %5403 = vmatpush1.bf16.msra.mxu0 %v3414
    %5404 = vmatprep.subr.bf16.mxu0 %v3411
    %5405 = vmatpush1.bf16.msra.mxu0 %v3410
    %5406 = vmatprep.subr.bf16.mxu0 %v3471
    %5407 = vmatpush2.bf16.msra.mxu0 %v3470
    %5408 = vmatprep.subr.bf16.mxu0 %v3467
    %5409 = vmatpush2.bf16.msra.mxu0 %v3466
    %5410 = vmatprep.subr.bf16.mxu0 %v3463
    %5411 = vmatpush2.bf16.msra.mxu0 %v3462
    %5412 = vmatprep.subr.bf16.mxu0 %v3459
    %5413 = vmatpush2.bf16.msra.mxu0 %v3458
    %5414 = vmatprep.subr.bf16.mxu0 %v3455
    %5415 = vmatpush2.bf16.msra.mxu0 %v3454
    %5416 = vmatprep.subr.bf16.mxu0 %v3451
    %5417 = vmatpush2.bf16.msra.mxu0 %v3450
    %5418 = vmatprep.subr.bf16.mxu0 %v3447
    %5419 = vmatpush2.bf16.msra.mxu0 %v3446
    %5420 = vmatprep.subr.bf16.mxu0 %v3443
    %5421 = vmatpush2.bf16.msra.mxu0 %v3442
    %5422 = vmatprep.mubr.bf16.mxu0 %v933
    %5423 = vmatmul.mubr.bf16.gmra.mxu0 %v932
    %v5424 = vpop.f32.mrf.mxu0
    %v5425 = vadd.f32 %v5384, %v5424
    %v5426 = vpop.f32.mrf.mxu0
    %v5427 = vadd.f32 %v5386, %v5426
    %v5428 = vpop.f32.mrf.mxu0
    %v5429 = vpop.f32.mrf.mxu0
    %5430 = vdwg.mxu0
    %5431 = vmatprep.subr.bf16.mxu0 %v3503
    %5432 = vmatpush1.bf16.msra.mxu0 %v3502
    %5433 = vmatprep.subr.bf16.mxu0 %v3499
    %5434 = vmatpush1.bf16.msra.mxu0 %v3498
    %5435 = vmatprep.subr.bf16.mxu0 %v3495
    %5436 = vmatpush1.bf16.msra.mxu0 %v3494
    %5437 = vmatprep.subr.bf16.mxu0 %v3491
    %5438 = vmatpush1.bf16.msra.mxu0 %v3490
    %5439 = vmatprep.subr.bf16.mxu0 %v3487
    %5440 = vmatpush1.bf16.msra.mxu0 %v3486
    %5441 = vmatprep.subr.bf16.mxu0 %v3483
    %5442 = vmatpush1.bf16.msra.mxu0 %v3482
    %5443 = vmatprep.subr.bf16.mxu0 %v3479
    %5444 = vmatpush1.bf16.msra.mxu0 %v3478
    %5445 = vmatprep.subr.bf16.mxu0 %v3475
    %5446 = vmatpush1.bf16.msra.mxu0 %v3474
    %5447 = vmatprep.subr.bf16.mxu0 %v3535
    %5448 = vmatpush2.bf16.msra.mxu0 %v3534
    %5449 = vmatprep.subr.bf16.mxu0 %v3531
    %5450 = vmatpush2.bf16.msra.mxu0 %v3530
    %5451 = vmatprep.subr.bf16.mxu0 %v3527
    %5452 = vmatpush2.bf16.msra.mxu0 %v3526
    %5453 = vmatprep.subr.bf16.mxu0 %v3523
    %5454 = vmatpush2.bf16.msra.mxu0 %v3522
    %5455 = vmatprep.subr.bf16.mxu0 %v3519
    %5456 = vmatpush2.bf16.msra.mxu0 %v3518
    %5457 = vmatprep.subr.bf16.mxu0 %v3515
    %5458 = vmatpush2.bf16.msra.mxu0 %v3514
    %5459 = vmatprep.subr.bf16.mxu0 %v3511
    %5460 = vmatpush2.bf16.msra.mxu0 %v3510
    %5461 = vmatprep.subr.bf16.mxu0 %v3507
    %5462 = vmatpush2.bf16.msra.mxu0 %v3506
    %5463 = vmatprep.mubr.bf16.mxu0 %v935
    %5464 = vmatmul.mubr.bf16.gmra.mxu0 %v934
    %v5465 = vpop.f32.mrf.mxu0
    %v5466 = vadd.f32 %v5425, %v5465
    %v5467 = vpop.f32.mrf.mxu0
    %v5468 = vadd.f32 %v5427, %v5467
    %v5469 = vpop.f32.mrf.mxu0
    %v5470 = vpop.f32.mrf.mxu0
    %5471 = vdwg.mxu0
    %5472 = vmatprep.subr.bf16.mxu0 %v3567
    %5473 = vmatpush1.bf16.msra.mxu0 %v3566
    %5474 = vmatprep.subr.bf16.mxu0 %v3563
    %5475 = vmatpush1.bf16.msra.mxu0 %v3562
    %5476 = vmatprep.subr.bf16.mxu0 %v3559
    %5477 = vmatpush1.bf16.msra.mxu0 %v3558
    %5478 = vmatprep.subr.bf16.mxu0 %v3555
    %5479 = vmatpush1.bf16.msra.mxu0 %v3554
    %5480 = vmatprep.subr.bf16.mxu0 %v3551
    %5481 = vmatpush1.bf16.msra.mxu0 %v3550
    %5482 = vmatprep.subr.bf16.mxu0 %v3547
    %5483 = vmatpush1.bf16.msra.mxu0 %v3546
    %5484 = vmatprep.subr.bf16.mxu0 %v3543
    %5485 = vmatpush1.bf16.msra.mxu0 %v3542
    %5486 = vmatprep.subr.bf16.mxu0 %v3539
    %5487 = vmatpush1.bf16.msra.mxu0 %v3538
    %5488 = vmatprep.subr.bf16.mxu0 %v3599
    %5489 = vmatpush2.bf16.msra.mxu0 %v3598
    %5490 = vmatprep.subr.bf16.mxu0 %v3595
    %5491 = vmatpush2.bf16.msra.mxu0 %v3594
    %5492 = vmatprep.subr.bf16.mxu0 %v3591
    %5493 = vmatpush2.bf16.msra.mxu0 %v3590
    %5494 = vmatprep.subr.bf16.mxu0 %v3587
    %5495 = vmatpush2.bf16.msra.mxu0 %v3586
    %5496 = vmatprep.subr.bf16.mxu0 %v3583
    %5497 = vmatpush2.bf16.msra.mxu0 %v3582
    %5498 = vmatprep.subr.bf16.mxu0 %v3579
    %5499 = vmatpush2.bf16.msra.mxu0 %v3578
    %5500 = vmatprep.subr.bf16.mxu0 %v3575
    %5501 = vmatpush2.bf16.msra.mxu0 %v3574
    %5502 = vmatprep.subr.bf16.mxu0 %v3571
    %5503 = vmatpush2.bf16.msra.mxu0 %v3570
    %5504 = vmatprep.mubr.bf16.mxu0 %v937
    %5505 = vmatmul.mubr.bf16.gmra.mxu0 %v936
    %v5506 = vpop.f32.mrf.mxu0
    %v5507 = vadd.f32 %v5466, %v5506
    %v5508 = vpop.f32.mrf.mxu0
    %v5509 = vadd.f32 %v5468, %v5508
    %v5510 = vpop.f32.mrf.mxu0
    %v5511 = vpop.f32.mrf.mxu0
    %5512 = vdwg.mxu0
    %5513 = vmatprep.subr.bf16.mxu0 %v3631
    %5514 = vmatpush1.bf16.msra.mxu0 %v3630
    %5515 = vmatprep.subr.bf16.mxu0 %v3627
    %5516 = vmatpush1.bf16.msra.mxu0 %v3626
    %5517 = vmatprep.subr.bf16.mxu0 %v3623
    %5518 = vmatpush1.bf16.msra.mxu0 %v3622
    %5519 = vmatprep.subr.bf16.mxu0 %v3619
    %5520 = vmatpush1.bf16.msra.mxu0 %v3618
    %5521 = vmatprep.subr.bf16.mxu0 %v3615
    %5522 = vmatpush1.bf16.msra.mxu0 %v3614
    %5523 = vmatprep.subr.bf16.mxu0 %v3611
    %5524 = vmatpush1.bf16.msra.mxu0 %v3610
    %5525 = vmatprep.subr.bf16.mxu0 %v3607
    %5526 = vmatpush1.bf16.msra.mxu0 %v3606
    %5527 = vmatprep.subr.bf16.mxu0 %v3603
    %5528 = vmatpush1.bf16.msra.mxu0 %v3602
    %5529 = vmatprep.subr.bf16.mxu0 %v3663
    %5530 = vmatpush2.bf16.msra.mxu0 %v3662
    %5531 = vmatprep.subr.bf16.mxu0 %v3659
    %5532 = vmatpush2.bf16.msra.mxu0 %v3658
    %5533 = vmatprep.subr.bf16.mxu0 %v3655
    %5534 = vmatpush2.bf16.msra.mxu0 %v3654
    %5535 = vmatprep.subr.bf16.mxu0 %v3651
    %5536 = vmatpush2.bf16.msra.mxu0 %v3650
    %5537 = vmatprep.subr.bf16.mxu0 %v3647
    %5538 = vmatpush2.bf16.msra.mxu0 %v3646
    %5539 = vmatprep.subr.bf16.mxu0 %v3643
    %5540 = vmatpush2.bf16.msra.mxu0 %v3642
    %5541 = vmatprep.subr.bf16.mxu0 %v3639
    %5542 = vmatpush2.bf16.msra.mxu0 %v3638
    %5543 = vmatprep.subr.bf16.mxu0 %v3635
    %5544 = vmatpush2.bf16.msra.mxu0 %v3634
    %5545 = vmatprep.mubr.bf16.mxu0 %v939
    %5546 = vmatmul.mubr.bf16.gmra.mxu0 %v938
    %v5547 = vpop.f32.mrf.mxu0
    %v5548 = vadd.f32 %v5507, %v5547
    %v5549 = vpop.f32.mrf.mxu0
    %v5550 = vadd.f32 %v5509, %v5549
    %v5551 = vpop.f32.mrf.mxu0
    %v5552 = vpop.f32.mrf.mxu0
    %5553 = vdwg.mxu0
    %5554 = vmatprep.subr.bf16.mxu0 %v3695
    %5555 = vmatpush1.bf16.msra.mxu0 %v3694
    %5556 = vmatprep.subr.bf16.mxu0 %v3691
    %5557 = vmatpush1.bf16.msra.mxu0 %v3690
    %5558 = vmatprep.subr.bf16.mxu0 %v3687
    %5559 = vmatpush1.bf16.msra.mxu0 %v3686
    %5560 = vmatprep.subr.bf16.mxu0 %v3683
    %5561 = vmatpush1.bf16.msra.mxu0 %v3682
    %5562 = vmatprep.subr.bf16.mxu0 %v3679
    %5563 = vmatpush1.bf16.msra.mxu0 %v3678
    %5564 = vmatprep.subr.bf16.mxu0 %v3675
    %5565 = vmatpush1.bf16.msra.mxu0 %v3674
    %5566 = vmatprep.subr.bf16.mxu0 %v3671
    %5567 = vmatpush1.bf16.msra.mxu0 %v3670
    %5568 = vmatprep.subr.bf16.mxu0 %v3667
    %5569 = vmatpush1.bf16.msra.mxu0 %v3666
    %5570 = vmatprep.subr.bf16.mxu0 %v3727
    %5571 = vmatpush2.bf16.msra.mxu0 %v3726
    %5572 = vmatprep.subr.bf16.mxu0 %v3723
    %5573 = vmatpush2.bf16.msra.mxu0 %v3722
    %5574 = vmatprep.subr.bf16.mxu0 %v3719
    %5575 = vmatpush2.bf16.msra.mxu0 %v3718
    %5576 = vmatprep.subr.bf16.mxu0 %v3715
    %5577 = vmatpush2.bf16.msra.mxu0 %v3714
    %5578 = vmatprep.subr.bf16.mxu0 %v3711
    %5579 = vmatpush2.bf16.msra.mxu0 %v3710
    %5580 = vmatprep.subr.bf16.mxu0 %v3707
    %5581 = vmatpush2.bf16.msra.mxu0 %v3706
    %5582 = vmatprep.subr.bf16.mxu0 %v3703
    %5583 = vmatpush2.bf16.msra.mxu0 %v3702
    %5584 = vmatprep.subr.bf16.mxu0 %v3699
    %5585 = vmatpush2.bf16.msra.mxu0 %v3698
    %5586 = vmatprep.mubr.bf16.mxu0 %v941
    %5587 = vmatmul.mubr.bf16.gmra.mxu0 %v940
    %v5588 = vpop.f32.mrf.mxu0
    %v5589 = vadd.f32 %v5548, %v5588
    %v5590 = vpop.f32.mrf.mxu0
    %v5591 = vadd.f32 %v5550, %v5590
    %v5592 = vpop.f32.mrf.mxu0
    %v5593 = vpop.f32.mrf.mxu0
    %5594 = vdwg.mxu0
    %5595 = vmatprep.subr.bf16.mxu0 %v3759
    %5596 = vmatpush1.bf16.msra.mxu0 %v3758
    %5597 = vmatprep.subr.bf16.mxu0 %v3755
    %5598 = vmatpush1.bf16.msra.mxu0 %v3754
    %5599 = vmatprep.subr.bf16.mxu0 %v3751
    %5600 = vmatpush1.bf16.msra.mxu0 %v3750
    %5601 = vmatprep.subr.bf16.mxu0 %v3747
    %5602 = vmatpush1.bf16.msra.mxu0 %v3746
    %5603 = vmatprep.subr.bf16.mxu0 %v3743
    %5604 = vmatpush1.bf16.msra.mxu0 %v3742
    %5605 = vmatprep.subr.bf16.mxu0 %v3739
    %5606 = vmatpush1.bf16.msra.mxu0 %v3738
    %5607 = vmatprep.subr.bf16.mxu0 %v3735
    %5608 = vmatpush1.bf16.msra.mxu0 %v3734
    %5609 = vmatprep.subr.bf16.mxu0 %v3731
    %5610 = vmatpush1.bf16.msra.mxu0 %v3730
    %5611 = vmatprep.subr.bf16.mxu0 %v3791
    %5612 = vmatpush2.bf16.msra.mxu0 %v3790
    %5613 = vmatprep.subr.bf16.mxu0 %v3787
    %5614 = vmatpush2.bf16.msra.mxu0 %v3786
    %5615 = vmatprep.subr.bf16.mxu0 %v3783
    %5616 = vmatpush2.bf16.msra.mxu0 %v3782
    %5617 = vmatprep.subr.bf16.mxu0 %v3779
    %5618 = vmatpush2.bf16.msra.mxu0 %v3778
    %5619 = vmatprep.subr.bf16.mxu0 %v3775
    %5620 = vmatpush2.bf16.msra.mxu0 %v3774
    %5621 = vmatprep.subr.bf16.mxu0 %v3771
    %5622 = vmatpush2.bf16.msra.mxu0 %v3770
    %5623 = vmatprep.subr.bf16.mxu0 %v3767
    %5624 = vmatpush2.bf16.msra.mxu0 %v3766
    %5625 = vmatprep.subr.bf16.mxu0 %v3763
    %5626 = vmatpush2.bf16.msra.mxu0 %v3762
    %5627 = vmatprep.mubr.bf16.mxu0 %v943
    %5628 = vmatmul.mubr.bf16.gmra.mxu0 %v942
    %v5629 = vpop.f32.mrf.mxu0
    %v5630 = vadd.f32 %v5589, %v5629
    %v5631 = vpop.f32.mrf.mxu0
    %v5632 = vadd.f32 %v5591, %v5631
    %v5633 = vpop.f32.mrf.mxu0
    %v5634 = vpop.f32.mrf.mxu0
    %5635 = vdwg.mxu0
    %5636 = vmatprep.subr.bf16.mxu0 %v3823
    %5637 = vmatpush1.bf16.msra.mxu0 %v3822
    %5638 = vmatprep.subr.bf16.mxu0 %v3819
    %5639 = vmatpush1.bf16.msra.mxu0 %v3818
    %5640 = vmatprep.subr.bf16.mxu0 %v3815
    %5641 = vmatpush1.bf16.msra.mxu0 %v3814
    %5642 = vmatprep.subr.bf16.mxu0 %v3811
    %5643 = vmatpush1.bf16.msra.mxu0 %v3810
    %5644 = vmatprep.subr.bf16.mxu0 %v3807
    %5645 = vmatpush1.bf16.msra.mxu0 %v3806
    %5646 = vmatprep.subr.bf16.mxu0 %v3803
    %5647 = vmatpush1.bf16.msra.mxu0 %v3802
    %5648 = vmatprep.subr.bf16.mxu0 %v3799
    %5649 = vmatpush1.bf16.msra.mxu0 %v3798
    %5650 = vmatprep.subr.bf16.mxu0 %v3795
    %5651 = vmatpush1.bf16.msra.mxu0 %v3794
    %5652 = vmatprep.subr.bf16.mxu0 %v3855
    %5653 = vmatpush2.bf16.msra.mxu0 %v3854
    %5654 = vmatprep.subr.bf16.mxu0 %v3851
    %5655 = vmatpush2.bf16.msra.mxu0 %v3850
    %5656 = vmatprep.subr.bf16.mxu0 %v3847
    %5657 = vmatpush2.bf16.msra.mxu0 %v3846
    %5658 = vmatprep.subr.bf16.mxu0 %v3843
    %5659 = vmatpush2.bf16.msra.mxu0 %v3842
    %5660 = vmatprep.subr.bf16.mxu0 %v3839
    %5661 = vmatpush2.bf16.msra.mxu0 %v3838
    %5662 = vmatprep.subr.bf16.mxu0 %v3835
    %5663 = vmatpush2.bf16.msra.mxu0 %v3834
    %5664 = vmatprep.subr.bf16.mxu0 %v3831
    %5665 = vmatpush2.bf16.msra.mxu0 %v3830
    %5666 = vmatprep.subr.bf16.mxu0 %v3827
    %5667 = vmatpush2.bf16.msra.mxu0 %v3826
    %5668 = vmatprep.mubr.bf16.mxu0 %v945
    %5669 = vmatmul.mubr.bf16.gmra.mxu0 %v944
    %v5670 = vpop.f32.mrf.mxu0
    %v5671 = vadd.f32 %v5630, %v5670
    %v5672 = vpop.f32.mrf.mxu0
    %v5673 = vadd.f32 %v5632, %v5672
    %v5674 = vpop.f32.mrf.mxu0
    %v5675 = vpop.f32.mrf.mxu0
    %5676 = vdwg.mxu0
    %5677 = vmatprep.subr.bf16.mxu0 %v3887
    %5678 = vmatpush1.bf16.msra.mxu0 %v3886
    %5679 = vmatprep.subr.bf16.mxu0 %v3883
    %5680 = vmatpush1.bf16.msra.mxu0 %v3882
    %5681 = vmatprep.subr.bf16.mxu0 %v3879
    %5682 = vmatpush1.bf16.msra.mxu0 %v3878
    %5683 = vmatprep.subr.bf16.mxu0 %v3875
    %5684 = vmatpush1.bf16.msra.mxu0 %v3874
    %5685 = vmatprep.subr.bf16.mxu0 %v3871
    %5686 = vmatpush1.bf16.msra.mxu0 %v3870
    %5687 = vmatprep.subr.bf16.mxu0 %v3867
    %5688 = vmatpush1.bf16.msra.mxu0 %v3866
    %5689 = vmatprep.subr.bf16.mxu0 %v3863
    %5690 = vmatpush1.bf16.msra.mxu0 %v3862
    %5691 = vmatprep.subr.bf16.mxu0 %v3859
    %5692 = vmatpush1.bf16.msra.mxu0 %v3858
    %5693 = vmatprep.subr.bf16.mxu0 %v3919
    %5694 = vmatpush2.bf16.msra.mxu0 %v3918
    %5695 = vmatprep.subr.bf16.mxu0 %v3915
    %5696 = vmatpush2.bf16.msra.mxu0 %v3914
    %5697 = vmatprep.subr.bf16.mxu0 %v3911
    %5698 = vmatpush2.bf16.msra.mxu0 %v3910
    %5699 = vmatprep.subr.bf16.mxu0 %v3907
    %5700 = vmatpush2.bf16.msra.mxu0 %v3906
    %5701 = vmatprep.subr.bf16.mxu0 %v3903
    %5702 = vmatpush2.bf16.msra.mxu0 %v3902
    %5703 = vmatprep.subr.bf16.mxu0 %v3899
    %5704 = vmatpush2.bf16.msra.mxu0 %v3898
    %5705 = vmatprep.subr.bf16.mxu0 %v3895
    %5706 = vmatpush2.bf16.msra.mxu0 %v3894
    %5707 = vmatprep.subr.bf16.mxu0 %v3891
    %5708 = vmatpush2.bf16.msra.mxu0 %v3890
    %5709 = vmatprep.mubr.bf16.mxu0 %v947
    %5710 = vmatmul.mubr.bf16.gmra.mxu0 %v946
    %v5711 = vpop.f32.mrf.mxu0
    %v5712 = vadd.f32 %v5671, %v5711
    %v5713 = vpop.f32.mrf.mxu0
    %v5714 = vadd.f32 %v5673, %v5713
    %v5715 = vpop.f32.mrf.mxu0
    %v5716 = vpop.f32.mrf.mxu0
    %5717 = vdwg.mxu0
    %5718 = vmatprep.subr.bf16.mxu0 %v3951
    %5719 = vmatpush1.bf16.msra.mxu0 %v3950
    %5720 = vmatprep.subr.bf16.mxu0 %v3947
    %5721 = vmatpush1.bf16.msra.mxu0 %v3946
    %5722 = vmatprep.subr.bf16.mxu0 %v3943
    %5723 = vmatpush1.bf16.msra.mxu0 %v3942
    %5724 = vmatprep.subr.bf16.mxu0 %v3939
    %5725 = vmatpush1.bf16.msra.mxu0 %v3938
    %5726 = vmatprep.subr.bf16.mxu0 %v3935
    %5727 = vmatpush1.bf16.msra.mxu0 %v3934
    %5728 = vmatprep.subr.bf16.mxu0 %v3931
    %5729 = vmatpush1.bf16.msra.mxu0 %v3930
    %5730 = vmatprep.subr.bf16.mxu0 %v3927
    %5731 = vmatpush1.bf16.msra.mxu0 %v3926
    %5732 = vmatprep.subr.bf16.mxu0 %v3923
    %5733 = vmatpush1.bf16.msra.mxu0 %v3922
    %5734 = vmatprep.subr.bf16.mxu0 %v3983
    %5735 = vmatpush2.bf16.msra.mxu0 %v3982
    %5736 = vmatprep.subr.bf16.mxu0 %v3979
    %5737 = vmatpush2.bf16.msra.mxu0 %v3978
    %5738 = vmatprep.subr.bf16.mxu0 %v3975
    %5739 = vmatpush2.bf16.msra.mxu0 %v3974
    %5740 = vmatprep.subr.bf16.mxu0 %v3971
    %5741 = vmatpush2.bf16.msra.mxu0 %v3970
    %5742 = vmatprep.subr.bf16.mxu0 %v3967
    %5743 = vmatpush2.bf16.msra.mxu0 %v3966
    %5744 = vmatprep.subr.bf16.mxu0 %v3963
    %5745 = vmatpush2.bf16.msra.mxu0 %v3962
    %5746 = vmatprep.subr.bf16.mxu0 %v3959
    %5747 = vmatpush2.bf16.msra.mxu0 %v3958
    %5748 = vmatprep.subr.bf16.mxu0 %v3955
    %5749 = vmatpush2.bf16.msra.mxu0 %v3954
    %5750 = vmatprep.mubr.bf16.mxu0 %v949
    %5751 = vmatmul.mubr.bf16.gmra.mxu0 %v948
    %v5752 = vpop.f32.mrf.mxu0
    %v5753 = vadd.f32 %v5712, %v5752
    %v5754 = vpop.f32.mrf.mxu0
    %v5755 = vadd.f32 %v5714, %v5754
    %v5756 = vpop.f32.mrf.mxu0
    %v5757 = vpop.f32.mrf.mxu0
    %5758 = vdwg.mxu0
    %5759 = vmatprep.subr.bf16.mxu0 %v4015
    %5760 = vmatpush1.bf16.msra.mxu0 %v4014
    %5761 = vmatprep.subr.bf16.mxu0 %v4011
    %5762 = vmatpush1.bf16.msra.mxu0 %v4010
    %5763 = vmatprep.subr.bf16.mxu0 %v4007
    %5764 = vmatpush1.bf16.msra.mxu0 %v4006
    %5765 = vmatprep.subr.bf16.mxu0 %v4003
    %5766 = vmatpush1.bf16.msra.mxu0 %v4002
    %5767 = vmatprep.subr.bf16.mxu0 %v3999
    %5768 = vmatpush1.bf16.msra.mxu0 %v3998
    %5769 = vmatprep.subr.bf16.mxu0 %v3995
    %5770 = vmatpush1.bf16.msra.mxu0 %v3994
    %5771 = vmatprep.subr.bf16.mxu0 %v3991
    %5772 = vmatpush1.bf16.msra.mxu0 %v3990
    %5773 = vmatprep.subr.bf16.mxu0 %v3987
    %5774 = vmatpush1.bf16.msra.mxu0 %v3986
    %5775 = vmatprep.subr.bf16.mxu0 %v4047
    %5776 = vmatpush2.bf16.msra.mxu0 %v4046
    %5777 = vmatprep.subr.bf16.mxu0 %v4043
    %5778 = vmatpush2.bf16.msra.mxu0 %v4042
    %5779 = vmatprep.subr.bf16.mxu0 %v4039
    %5780 = vmatpush2.bf16.msra.mxu0 %v4038
    %5781 = vmatprep.subr.bf16.mxu0 %v4035
    %5782 = vmatpush2.bf16.msra.mxu0 %v4034
    %5783 = vmatprep.subr.bf16.mxu0 %v4031
    %5784 = vmatpush2.bf16.msra.mxu0 %v4030
    %5785 = vmatprep.subr.bf16.mxu0 %v4027
    %5786 = vmatpush2.bf16.msra.mxu0 %v4026
    %5787 = vmatprep.subr.bf16.mxu0 %v4023
    %5788 = vmatpush2.bf16.msra.mxu0 %v4022
    %5789 = vmatprep.subr.bf16.mxu0 %v4019
    %5790 = vmatpush2.bf16.msra.mxu0 %v4018
    %5791 = vmatprep.mubr.bf16.mxu0 %v951
    %5792 = vmatmul.mubr.bf16.gmra.mxu0 %v950
    %v5793 = vpop.f32.mrf.mxu0
    %v5794 = vadd.f32 %v5753, %v5793
    %v5795 = vpop.f32.mrf.mxu0
    %v5796 = vadd.f32 %v5755, %v5795
    %v5797 = vpop.f32.mrf.mxu0
    %v5798 = vpop.f32.mrf.mxu0
    %5799 = vdwg.mxu0
    %v5800 = vmul.f32 %v5302, 0.2
    %v5801 = vmul.f32 %v5304, 0.2
    %v5802 = vmul.f32 %v5794, 0.2
    %v5803 = vmul.f32 %v5796, 0.2
    %v5804 = vmax.f32 %v5302, %v5800
    %v5805 = vmax.f32 %v5304, %v5801
    %v5806 = vmax.f32 %v5794, %v5802
    %v5807 = vmax.f32 %v5796, %v5803
    %v5808 = vpack.c.bf16 %v5804, %v5804
    %v5809 = vpack.c.bf16 %v5805, %v5805
    %v5810 = vpack.c.bf16 %v5806, %v5806
    %v5811 = vpack.c.bf16 %v5807, %v5807
    %v5812 = vld [vmem:[#allocation7] sm:$0xff]
    %v5813 = vld [vmem:[#allocation7 + $0x8] sm:$0xff]
    %v5814 = vld [vmem:[#allocation7 + $0x10] sm:$0xff]
    %v5815 = vld [vmem:[#allocation7 + $0x18] sm:$0xff]
    %v5816 = vld [vmem:[#allocation7 + $0x20] sm:$0xff]
    %v5817 = vld [vmem:[#allocation7 + $0x28] sm:$0xff]
    %v5818 = vld [vmem:[#allocation7 + $0x30] sm:$0xff]
    %v5819 = vld [vmem:[#allocation7 + $0x38] sm:$0xff]
    %v5820 = vld [vmem:[#allocation7 + $0x40] sm:$0xff]
    %v5821 = vld [vmem:[#allocation7 + $0x48] sm:$0xff]
    %v5822 = vld [vmem:[#allocation7 + $0x50] sm:$0xff]
    %v5823 = vld [vmem:[#allocation7 + $0x58] sm:$0xff]
    %v5824 = vld [vmem:[#allocation7 + $0x60] sm:$0xff]
    %v5825 = vld [vmem:[#allocation7 + $0x68] sm:$0xff]
    %v5826 = vld [vmem:[#allocation7 + $0x70] sm:$0xff]
    %v5827 = vld [vmem:[#allocation7 + $0x78] sm:$0xff]
    %v5828 = vld [vmem:[#allocation7 + $0x80] sm:$0xff]
    %v5829 = vld [vmem:[#allocation7 + $0x88] sm:$0xff]
    %v5830 = vld [vmem:[#allocation7 + $0x90] sm:$0xff]
    %v5831 = vld [vmem:[#allocation7 + $0x98] sm:$0xff]
    %v5832 = vld [vmem:[#allocation7 + $0xa0] sm:$0xff]
    %v5833 = vld [vmem:[#allocation7 + $0xa8] sm:$0xff]
    %v5834 = vld [vmem:[#allocation7 + $0xb0] sm:$0xff]
    %v5835 = vld [vmem:[#allocation7 + $0xb8] sm:$0xff]
    %v5836 = vld [vmem:[#allocation7 + $0xc0] sm:$0xff]
    %v5837 = vld [vmem:[#allocation7 + $0xc8] sm:$0xff]
    %v5838 = vld [vmem:[#allocation7 + $0xd0] sm:$0xff]
    %v5839 = vld [vmem:[#allocation7 + $0xd8] sm:$0xff]
    %v5840 = vld [vmem:[#allocation7 + $0xe0] sm:$0xff]
    %v5841 = vld [vmem:[#allocation7 + $0xe8] sm:$0xff]
    %v5842 = vld [vmem:[#allocation7 + $0xf0] sm:$0xff]
    %v5843 = vld [vmem:[#allocation7 + $0xf8] sm:$0xff]
    %v5844 = vld [vmem:[#allocation7 + $0x100] sm:$0xff]
    %v5845 = vld [vmem:[#allocation7 + $0x108] sm:$0xff]
    %v5846 = vld [vmem:[#allocation7 + $0x110] sm:$0xff]
    %v5847 = vld [vmem:[#allocation7 + $0x118] sm:$0xff]
    %v5848 = vld [vmem:[#allocation7 + $0x120] sm:$0xff]
    %v5849 = vld [vmem:[#allocation7 + $0x128] sm:$0xff]
    %v5850 = vld [vmem:[#allocation7 + $0x130] sm:$0xff]
    %v5851 = vld [vmem:[#allocation7 + $0x138] sm:$0xff]
    %v5852 = vld [vmem:[#allocation7 + $0x140] sm:$0xff]
    %v5853 = vld [vmem:[#allocation7 + $0x148] sm:$0xff]
    %v5854 = vld [vmem:[#allocation7 + $0x150] sm:$0xff]
    %v5855 = vld [vmem:[#allocation7 + $0x158] sm:$0xff]
    %v5856 = vld [vmem:[#allocation7 + $0x160] sm:$0xff]
    %v5857 = vld [vmem:[#allocation7 + $0x168] sm:$0xff]
    %v5858 = vld [vmem:[#allocation7 + $0x170] sm:$0xff]
    %v5859 = vld [vmem:[#allocation7 + $0x178] sm:$0xff]
    %v5860 = vld [vmem:[#allocation7 + $0x180] sm:$0xff]
    %v5861 = vld [vmem:[#allocation7 + $0x188] sm:$0xff]
    %v5862 = vld [vmem:[#allocation7 + $0x190] sm:$0xff]
    %v5863 = vld [vmem:[#allocation7 + $0x198] sm:$0xff]
    %v5864 = vld [vmem:[#allocation7 + $0x1a0] sm:$0xff]
    %v5865 = vld [vmem:[#allocation7 + $0x1a8] sm:$0xff]
    %v5866 = vld [vmem:[#allocation7 + $0x1b0] sm:$0xff]
    %v5867 = vld [vmem:[#allocation7 + $0x1b8] sm:$0xff]
    %v5868 = vld [vmem:[#allocation7 + $0x1c0] sm:$0xff]
    %v5869 = vld [vmem:[#allocation7 + $0x1c8] sm:$0xff]
    %v5870 = vld [vmem:[#allocation7 + $0x1d0] sm:$0xff]
    %v5871 = vld [vmem:[#allocation7 + $0x1d8] sm:$0xff]
    %v5872 = vld [vmem:[#allocation7 + $0x1e0] sm:$0xff]
    %v5873 = vld [vmem:[#allocation7 + $0x1e8] sm:$0xff]
    %v5874 = vld [vmem:[#allocation7 + $0x1f0] sm:$0xff]
    %v5875 = vld [vmem:[#allocation7 + $0x1f8] sm:$0xff]
    %v5876 = vld [vmem:[#allocation8] sm:$0x3]
    %v5878 = vlaneseq
    %v5879 = vshrl.u32 %v5878, 7
    %v5880 = vsub.s32 0, %v5879
    %v5881 = vrot.slane %v5876, %v5880
    %v5882 = vlaneseq
    %v5883 = vshrl.u32 %v5882, 7
    %v5884 = vsub.s32 1, %v5883
    %v5885 = vrot.slane %v5876, %v5884
    %v5952 = vunpack.c.l.b16 %v5812
    %v5953 = vunpack.c.h.b16 %v5812
    %v5954 = vunpack.c.l.b16 %v5813
    %v5955 = vunpack.c.h.b16 %v5813
    %v5956 = vunpack.c.l.b16 %v5814
    %v5957 = vunpack.c.h.b16 %v5814
    %v5958 = vunpack.c.l.b16 %v5815
    %v5959 = vunpack.c.h.b16 %v5815
    %v5960 = vunpack.c.l.b16 %v5816
    %v5961 = vunpack.c.h.b16 %v5816
    %v5962 = vunpack.c.l.b16 %v5817
    %v5963 = vunpack.c.h.b16 %v5817
    %v5964 = vunpack.c.l.b16 %v5818
    %v5965 = vunpack.c.h.b16 %v5818
    %v5966 = vunpack.c.l.b16 %v5819
    %v5967 = vunpack.c.h.b16 %v5819
    %v5968 = vunpack.c.l.b16 %v5820
    %v5969 = vunpack.c.h.b16 %v5820
    %v5970 = vunpack.c.l.b16 %v5821
    %v5971 = vunpack.c.h.b16 %v5821
    %v5972 = vunpack.c.l.b16 %v5822
    %v5973 = vunpack.c.h.b16 %v5822
    %v5974 = vunpack.c.l.b16 %v5823
    %v5975 = vunpack.c.h.b16 %v5823
    %v5976 = vunpack.c.l.b16 %v5824
    %v5977 = vunpack.c.h.b16 %v5824
    %v5978 = vunpack.c.l.b16 %v5825
    %v5979 = vunpack.c.h.b16 %v5825
    %v5980 = vunpack.c.l.b16 %v5826
    %v5981 = vunpack.c.h.b16 %v5826
    %v5982 = vunpack.c.l.b16 %v5827
    %v5983 = vunpack.c.h.b16 %v5827
    %v5984 = vunpack.c.l.b16 %v5828
    %v5985 = vunpack.c.h.b16 %v5828
    %v5986 = vunpack.c.l.b16 %v5829
    %v5987 = vunpack.c.h.b16 %v5829
    %v5988 = vunpack.c.l.b16 %v5830
    %v5989 = vunpack.c.h.b16 %v5830
    %v5990 = vunpack.c.l.b16 %v5831
    %v5991 = vunpack.c.h.b16 %v5831
    %v5992 = vunpack.c.l.b16 %v5832
    %v5993 = vunpack.c.h.b16 %v5832
    %v5994 = vunpack.c.l.b16 %v5833
    %v5995 = vunpack.c.h.b16 %v5833
    %v5996 = vunpack.c.l.b16 %v5834
    %v5997 = vunpack.c.h.b16 %v5834
    %v5998 = vunpack.c.l.b16 %v5835
    %v5999 = vunpack.c.h.b16 %v5835
    %v6000 = vunpack.c.l.b16 %v5836
    %v6001 = vunpack.c.h.b16 %v5836
    %v6002 = vunpack.c.l.b16 %v5837
    %v6003 = vunpack.c.h.b16 %v5837
    %v6004 = vunpack.c.l.b16 %v5838
    %v6005 = vunpack.c.h.b16 %v5838
    %v6006 = vunpack.c.l.b16 %v5839
    %v6007 = vunpack.c.h.b16 %v5839
    %v6008 = vunpack.c.l.b16 %v5840
    %v6009 = vunpack.c.h.b16 %v5840
    %v6010 = vunpack.c.l.b16 %v5841
    %v6011 = vunpack.c.h.b16 %v5841
    %v6012 = vunpack.c.l.b16 %v5842
    %v6013 = vunpack.c.h.b16 %v5842
    %v6014 = vunpack.c.l.b16 %v5843
    %v6015 = vunpack.c.h.b16 %v5843
    %v6016 = vunpack.c.l.b16 %v5844
    %v6017 = vunpack.c.h.b16 %v5844
    %v6018 = vunpack.c.l.b16 %v5845
    %v6019 = vunpack.c.h.b16 %v5845
    %v6020 = vunpack.c.l.b16 %v5846
    %v6021 = vunpack.c.h.b16 %v5846
    %v6022 = vunpack.c.l.b16 %v5847
    %v6023 = vunpack.c.h.b16 %v5847
    %v6024 = vunpack.c.l.b16 %v5848
    %v6025 = vunpack.c.h.b16 %v5848
    %v6026 = vunpack.c.l.b16 %v5849
    %v6027 = vunpack.c.h.b16 %v5849
    %v6028 = vunpack.c.l.b16 %v5850
    %v6029 = vunpack.c.h.b16 %v5850
    %v6030 = vunpack.c.l.b16 %v5851
    %v6031 = vunpack.c.h.b16 %v5851
    %v6032 = vunpack.c.l.b16 %v5852
    %v6033 = vunpack.c.h.b16 %v5852
    %v6034 = vunpack.c.l.b16 %v5853
    %v6035 = vunpack.c.h.b16 %v5853
    %v6036 = vunpack.c.l.b16 %v5854
    %v6037 = vunpack.c.h.b16 %v5854
    %v6038 = vunpack.c.l.b16 %v5855
    %v6039 = vunpack.c.h.b16 %v5855
    %v6040 = vunpack.c.l.b16 %v5856
    %v6041 = vunpack.c.h.b16 %v5856
    %v6042 = vunpack.c.l.b16 %v5857
    %v6043 = vunpack.c.h.b16 %v5857
    %v6044 = vunpack.c.l.b16 %v5858
    %v6045 = vunpack.c.h.b16 %v5858
    %v6046 = vunpack.c.l.b16 %v5859
    %v6047 = vunpack.c.h.b16 %v5859
    %v6048 = vunpack.c.l.b16 %v5860
    %v6049 = vunpack.c.h.b16 %v5860
    %v6050 = vunpack.c.l.b16 %v5861
    %v6051 = vunpack.c.h.b16 %v5861
    %v6052 = vunpack.c.l.b16 %v5862
    %v6053 = vunpack.c.h.b16 %v5862
    %v6054 = vunpack.c.l.b16 %v5863
    %v6055 = vunpack.c.h.b16 %v5863
    %v6056 = vunpack.c.l.b16 %v5864
    %v6057 = vunpack.c.h.b16 %v5864
    %v6058 = vunpack.c.l.b16 %v5865
    %v6059 = vunpack.c.h.b16 %v5865
    %v6060 = vunpack.c.l.b16 %v5866
    %v6061 = vunpack.c.h.b16 %v5866
    %v6062 = vunpack.c.l.b16 %v5867
    %v6063 = vunpack.c.h.b16 %v5867
    %v6064 = vunpack.c.l.b16 %v5868
    %v6065 = vunpack.c.h.b16 %v5868
    %v6066 = vunpack.c.l.b16 %v5869
    %v6067 = vunpack.c.h.b16 %v5869
    %v6068 = vunpack.c.l.b16 %v5870
    %v6069 = vunpack.c.h.b16 %v5870
    %v6070 = vunpack.c.l.b16 %v5871
    %v6071 = vunpack.c.h.b16 %v5871
    %v6072 = vunpack.c.l.b16 %v5872
    %v6073 = vunpack.c.h.b16 %v5872
    %v6074 = vunpack.c.l.b16 %v5873
    %v6075 = vunpack.c.h.b16 %v5873
    %v6076 = vunpack.c.l.b16 %v5874
    %v6077 = vunpack.c.h.b16 %v5874
    %v6078 = vunpack.c.l.b16 %v5875
    %v6079 = vunpack.c.h.b16 %v5875
    %v6080 = vpack.c.b16 %v5954, %v5952
    %v6081 = vpack.c.b16 %v5955, %v5953
    %v6082 = vpack.c.b16 %v5958, %v5956
    %v6083 = vpack.c.b16 %v5959, %v5957
    %v6084 = vpack.c.b16 %v5962, %v5960
    %v6085 = vpack.c.b16 %v5963, %v5961
    %v6086 = vpack.c.b16 %v5966, %v5964
    %v6087 = vpack.c.b16 %v5967, %v5965
    %v6088 = vpack.c.b16 %v5970, %v5968
    %v6089 = vpack.c.b16 %v5971, %v5969
    %v6090 = vpack.c.b16 %v5974, %v5972
    %v6091 = vpack.c.b16 %v5975, %v5973
    %v6092 = vpack.c.b16 %v5978, %v5976
    %v6093 = vpack.c.b16 %v5979, %v5977
    %v6094 = vpack.c.b16 %v5982, %v5980
    %v6095 = vpack.c.b16 %v5983, %v5981
    %v6096 = vpack.c.b16 %v5986, %v5984
    %v6097 = vpack.c.b16 %v5987, %v5985
    %v6098 = vpack.c.b16 %v5990, %v5988
    %v6099 = vpack.c.b16 %v5991, %v5989
    %v6100 = vpack.c.b16 %v5994, %v5992
    %v6101 = vpack.c.b16 %v5995, %v5993
    %v6102 = vpack.c.b16 %v5998, %v5996
    %v6103 = vpack.c.b16 %v5999, %v5997
    %v6104 = vpack.c.b16 %v6002, %v6000
    %v6105 = vpack.c.b16 %v6003, %v6001
    %v6106 = vpack.c.b16 %v6006, %v6004
    %v6107 = vpack.c.b16 %v6007, %v6005
    %v6108 = vpack.c.b16 %v6010, %v6008
    %v6109 = vpack.c.b16 %v6011, %v6009
    %v6110 = vpack.c.b16 %v6014, %v6012
    %v6111 = vpack.c.b16 %v6015, %v6013
    %v6112 = vpack.c.b16 %v6018, %v6016
    %v6113 = vpack.c.b16 %v6019, %v6017
    %v6114 = vpack.c.b16 %v6022, %v6020
    %v6115 = vpack.c.b16 %v6023, %v6021
    %v6116 = vpack.c.b16 %v6026, %v6024
    %v6117 = vpack.c.b16 %v6027, %v6025
    %v6118 = vpack.c.b16 %v6030, %v6028
    %v6119 = vpack.c.b16 %v6031, %v6029
    %v6120 = vpack.c.b16 %v6034, %v6032
    %v6121 = vpack.c.b16 %v6035, %v6033
    %v6122 = vpack.c.b16 %v6038, %v6036
    %v6123 = vpack.c.b16 %v6039, %v6037
    %v6124 = vpack.c.b16 %v6042, %v6040
    %v6125 = vpack.c.b16 %v6043, %v6041
    %v6126 = vpack.c.b16 %v6046, %v6044
    %v6127 = vpack.c.b16 %v6047, %v6045
    %v6128 = vpack.c.b16 %v6050, %v6048
    %v6129 = vpack.c.b16 %v6051, %v6049
    %v6130 = vpack.c.b16 %v6054, %v6052
    %v6131 = vpack.c.b16 %v6055, %v6053
    %v6132 = vpack.c.b16 %v6058, %v6056
    %v6133 = vpack.c.b16 %v6059, %v6057
    %v6134 = vpack.c.b16 %v6062, %v6060
    %v6135 = vpack.c.b16 %v6063, %v6061
    %v6136 = vpack.c.b16 %v6066, %v6064
    %v6137 = vpack.c.b16 %v6067, %v6065
    %v6138 = vpack.c.b16 %v6070, %v6068
    %v6139 = vpack.c.b16 %v6071, %v6069
    %v6140 = vpack.c.b16 %v6074, %v6072
    %v6141 = vpack.c.b16 %v6075, %v6073
    %v6142 = vpack.c.b16 %v6078, %v6076
    %v6143 = vpack.c.b16 %v6079, %v6077
    %6208 = vmatprep.subr.bf16.mxu0 %v6095
    %6209 = vmatpush1.bf16.msra.mxu0 %v6094
    %6210 = vmatprep.subr.bf16.mxu0 %v6093
    %6211 = vmatpush1.bf16.msra.mxu0 %v6092
    %6212 = vmatprep.subr.bf16.mxu0 %v6091
    %6213 = vmatpush1.bf16.msra.mxu0 %v6090
    %6214 = vmatprep.subr.bf16.mxu0 %v6089
    %6215 = vmatpush1.bf16.msra.mxu0 %v6088
    %6216 = vmatprep.subr.bf16.mxu0 %v6087
    %6217 = vmatpush1.bf16.msra.mxu0 %v6086
    %6218 = vmatprep.subr.bf16.mxu0 %v6085
    %6219 = vmatpush1.bf16.msra.mxu0 %v6084
    %6220 = vmatprep.subr.bf16.mxu0 %v6083
    %6221 = vmatpush1.bf16.msra.mxu0 %v6082
    %6222 = vmatprep.subr.bf16.mxu0 %v6081
    %6223 = vmatpush1.bf16.msra.mxu0 %v6080
    %6224 = vmatprep.subr.bf16.mxu0 %v6111
    %6225 = vmatpush2.bf16.msra.mxu0 %v6110
    %6226 = vmatprep.subr.bf16.mxu0 %v6109
    %6227 = vmatpush2.bf16.msra.mxu0 %v6108
    %6228 = vmatprep.subr.bf16.mxu0 %v6107
    %6229 = vmatpush2.bf16.msra.mxu0 %v6106
    %6230 = vmatprep.subr.bf16.mxu0 %v6105
    %6231 = vmatpush2.bf16.msra.mxu0 %v6104
    %6232 = vmatprep.subr.bf16.mxu0 %v6103
    %6233 = vmatpush2.bf16.msra.mxu0 %v6102
    %6234 = vmatprep.subr.bf16.mxu0 %v6101
    %6235 = vmatpush2.bf16.msra.mxu0 %v6100
    %6236 = vmatprep.subr.bf16.mxu0 %v6099
    %6237 = vmatpush2.bf16.msra.mxu0 %v6098
    %6238 = vmatprep.subr.bf16.mxu0 %v6097
    %6239 = vmatpush2.bf16.msra.mxu0 %v6096
    %6240 = vmatprep.mubr.bf16.mxu0 %v5809
    %6241 = vmatmul.mubr.bf16.gmra.mxu0 %v5808
    %v6242 = vpop.f32.mrf.mxu0
    %v6243 = vadd.f32 %v5881, %v6242
    %v6244 = vpop.f32.mrf.mxu0
    %v6245 = vadd.f32 %v5885, %v6244
    %v6246 = vpop.f32.mrf.mxu0
    %v6247 = vpop.f32.mrf.mxu0
    %6248 = vdwg.mxu0
    %6249 = vmatprep.subr.bf16.mxu0 %v6127
    %6250 = vmatpush1.bf16.msra.mxu0 %v6126
    %6251 = vmatprep.subr.bf16.mxu0 %v6125
    %6252 = vmatpush1.bf16.msra.mxu0 %v6124
    %6253 = vmatprep.subr.bf16.mxu0 %v6123
    %6254 = vmatpush1.bf16.msra.mxu0 %v6122
    %6255 = vmatprep.subr.bf16.mxu0 %v6121
    %6256 = vmatpush1.bf16.msra.mxu0 %v6120
    %6257 = vmatprep.subr.bf16.mxu0 %v6119
    %6258 = vmatpush1.bf16.msra.mxu0 %v6118
    %6259 = vmatprep.subr.bf16.mxu0 %v6117
    %6260 = vmatpush1.bf16.msra.mxu0 %v6116
    %6261 = vmatprep.subr.bf16.mxu0 %v6115
    %6262 = vmatpush1.bf16.msra.mxu0 %v6114
    %6263 = vmatprep.subr.bf16.mxu0 %v6113
    %6264 = vmatpush1.bf16.msra.mxu0 %v6112
    %6265 = vmatprep.subr.bf16.mxu0 %v6143
    %6266 = vmatpush2.bf16.msra.mxu0 %v6142
    %6267 = vmatprep.subr.bf16.mxu0 %v6141
    %6268 = vmatpush2.bf16.msra.mxu0 %v6140
    %6269 = vmatprep.subr.bf16.mxu0 %v6139
    %6270 = vmatpush2.bf16.msra.mxu0 %v6138
    %6271 = vmatprep.subr.bf16.mxu0 %v6137
    %6272 = vmatpush2.bf16.msra.mxu0 %v6136
    %6273 = vmatprep.subr.bf16.mxu0 %v6135
    %6274 = vmatpush2.bf16.msra.mxu0 %v6134
    %6275 = vmatprep.subr.bf16.mxu0 %v6133
    %6276 = vmatpush2.bf16.msra.mxu0 %v6132
    %6277 = vmatprep.subr.bf16.mxu0 %v6131
    %6278 = vmatpush2.bf16.msra.mxu0 %v6130
    %6279 = vmatprep.subr.bf16.mxu0 %v6129
    %6280 = vmatpush2.bf16.msra.mxu0 %v6128
    %6281 = vmatprep.mubr.bf16.mxu0 %v5811
    %6282 = vmatmul.mubr.bf16.gmra.mxu0 %v5810
    %v6283 = vpop.f32.mrf.mxu0
    %v6284 = vadd.f32 %v6243, %v6283
    %v6285 = vpop.f32.mrf.mxu0
    %v6286 = vadd.f32 %v6245, %v6285
    %v6287 = vpop.f32.mrf.mxu0
    %v6288 = vpop.f32.mrf.mxu0
    %6289 = vdwg.mxu0
    %v6290 = vmul.f32 %v6284, 0.2
    %v6291 = vmul.f32 %v6286, 0.2
    %v6292 = vmax.f32 %v6284, %v6290
    %v6293 = vmax.f32 %v6286, %v6291
    %v6294 = vld [vmem:[#allocation10] sm:$0x3]
    %v6296 = vlaneseq
    %v6297 = vshrl.u32 %v6296, 7
    %v6298 = vsub.s32 0, %v6297
    %v6299 = vrot.slane %v6294, %v6298
    %v6300 = vlaneseq
    %v6301 = vshrl.u32 %v6300, 7
    %v6302 = vsub.s32 1, %v6301
    %v6303 = vrot.slane %v6294, %v6302
    %v6306 = vmul.f32 %v6292, %v6299
    %v6307 = vmul.f32 %v6293, %v6303
    %v6308 = vadd.f32 %v6306, %v6307
    %6309 = vadd.xlane.f32.xlu0 %v6308
    %v6310 = vpop.xlane.xlu0 %6309
    %v6311 = vld [vmem:[#allocation2] sm:$0x1]
    %v6313 = vlaneseq
    %v6314 = vshrl.u32 %v6313, 7
    %v6315 = vsub.s32 0, %v6314
    %v6316 = vrot.slane %v6311, %v6315
    %v6318 = vadd.f32 %v6310, %v6316
    %v6319 = vand.u32 2147483647, %v6318
    %v6320 = vsub.f32 0.0, %v6319
    %v6321 = vmul.f32 %v6320, 1.442695
    %v6322 = vpow.pop %v6321
    %v6323 = vadd.f32 %v6322, 1.0
    %v6324 = vrcp.pop %v6323
    %vm6325 = vcmp.ge.f32.partialorder %v6318, 0.0
    %v6326 = vmul.f32 %v6322, %v6324
    %v6327 = vsel %vm6325, %v6324, %v6326
    %vm6328 = vcmask 7168
    %6329 = vst.msk [vmem:[%s7] sm:$0xff] %vm6328, %v6327
    // Predicated region
    $region50: #{basic_discriminator_forward.1} parent=1 // pred_check
      _
    $region51: #{basic_discriminator_forward.1} parent=1 // pred_check_branch
      %6331 = sbr.rel (0) target = $region53
    $region52: #{basic_discriminator_forward.1} parent=1 // pred_region
      _
    $region53: #{basic_discriminator_forward.1} parent=1 // pred_fallthru
      _
    // Predicated region
    $region54: #{basic_discriminator_forward.1} parent=1 // pred_check
      _
    $region55: #{basic_discriminator_forward.1} parent=1 // pred_check_branch
      %6333 = sbr.rel (0) target = $region57
    $region56: #{basic_discriminator_forward.1} parent=1 // pred_region
      _
    $region57: #{basic_discriminator_forward.1} parent=1 // pred_fallthru
      _
    %6334 = vsyncpa [#allocation4], 1
    %6335 = vsyncpa [#allocation6], 1
    %6336 = vsyncpa [#allocation9], 1

</llo_original>
